<compile_context>
chip_gen: v7x
topology: tpu7x:2x2x1
jax: 0.10.0
libtpu: 0.0.40
codegen_flags: <defaults>
</compile_context>

<pallas_src>
import functools

import jax
import jax.numpy as jnp
from jax.experimental import pallas as pl
from jax.experimental.pallas import tpu as pltpu

LANE = 128       # TPU lane width
MAX_TILE = 1024  # max rows per node/edge tile (safe for default VMEM on v5e/v6e/v7x)


# ----------------------------------------------------------------------------
# Small helpers
# ----------------------------------------------------------------------------
def _round_up(x, m):
    return (x + m - 1) // m * m


def _choose_tile(n):
    return min(MAX_TILE, _round_up(max(n, 1), LANE))


def _pad2d(a, rows, cols):
    r, c = a.shape
    return jnp.pad(a, ((0, rows - r), (0, cols - c)))


# ----------------------------------------------------------------------------
# Kernel 1: backbone linear  h = x @ Wm + bm   (tiled over nodes, lane-dense)
# ----------------------------------------------------------------------------
def _linear_kernel(x_ref, w_ref, b_ref, o_ref):
    acc = jnp.dot(x_ref[...], w_ref[...], preferred_element_type=jnp.float32)
    o_ref[...] = (acc + b_ref[...]).astype(o_ref.dtype)


def pallas_linear(x_pad, w_pad, b_pad, tn):
    n_pad, f_pad = x_pad.shape
    _, cp = w_pad.shape
    return pl.pallas_call(
        _linear_kernel,
        out_shape=jax.ShapeDtypeStruct((n_pad, cp), jnp.float32),
        grid=(n_pad // tn,),
        in_specs=[
            pl.BlockSpec((tn, f_pad), lambda i: (i, 0)),
            pl.BlockSpec((f_pad, cp), lambda i: (0, 0)),   # VMEM-resident weights
            pl.BlockSpec((1, cp), lambda i: (0, 0)),
        ],
        out_specs=pl.BlockSpec((tn, cp), lambda i: (i, 0)),
        compiler_params=pltpu.CompilerParams(dimension_semantics=("parallel",)),
    )(x_pad, w_pad, b_pad)


# ----------------------------------------------------------------------------
# Kernel 2: weighted propagation  out = h + scatter_add(ew * h[src] -> dst)
#   One-hot gather (src) and one-hot^T scatter-add (dst) on the MXU; the output
#   block is VMEM-resident across the edge-tile reduction axis.
# ----------------------------------------------------------------------------
def _propagate_kernel(h_ref, src_ref, dst_ref, ew_ref, o_ref):
    @pl.when(pl.program_id(0) == 0)
    def _():
        o_ref[...] = h_ref[...]                       # out starts from h

    te = src_ref.shape[0]
    n_pad = h_ref.shape[0]
    node_iota = jax.lax.broadcasted_iota(jnp.int32, (te, n_pad), 1)
    src_oh = jnp.where(src_ref[...] == node_iota, 1.0, 0.0).astype(jnp.float32)
    dst_oh = jnp.where(dst_ref[...] == node_iota, 1.0, 0.0).astype(jnp.float32)

    gathered = jnp.dot(src_oh, h_ref[...], preferred_element_type=jnp.float32)  # h[src]
    ew = ew_ref[...][:, 0:1]                          # per-edge scalar weight
    msg = ew * gathered                               # [TE, CP]
    # scatter-add to dst == dst_onehot^T @ msg   (duplicate dst handled by the sum)
    o_ref[...] += jnp.dot(dst_oh.T, msg, preferred_element_type=jnp.float32)


def pallas_propagate(h_pad, src2d, dst2d, ew2d, te):
    n_pad, cp = h_pad.shape
    e_pad = src2d.shape[0]
    ew_lanes = ew2d.shape[1]
    return pl.pallas_call(
        _propagate_kernel,
        out_shape=jax.ShapeDtypeStruct((n_pad, cp), jnp.float32),
        grid=(e_pad // te,),
        in_specs=[
            pl.BlockSpec((n_pad, cp), lambda e: (0, 0)),      # h VMEM-resident
            pl.BlockSpec((te, 1), lambda e: (e, 0)),          # src indices
            pl.BlockSpec((te, 1), lambda e: (e, 0)),          # dst indices
            pl.BlockSpec((te, ew_lanes), lambda e: (e, 0)),   # edge weights
        ],
        out_specs=pl.BlockSpec((n_pad, cp), lambda e: (0, 0)),  # accumulator
        compiler_params=pltpu.CompilerParams(dimension_semantics=("arbitrary",)),
    )(h_pad, src2d, dst2d, ew2d)


# ----------------------------------------------------------------------------
# Kernel 3: fused get_weight  (gather f1/f2 + split-W1 MLP + relu), tiled over E
#   Output is [E_pad, 128] with the edge weight replicated across all 128 lanes
#   (lane-dense stores; column 0 is the canonical value).
# ----------------------------------------------------------------------------
def _edge_mlp_kernel(emb_ref, col_ref, row_ref, mask_ref,
                     w1a_ref, w1b_ref, b1_ref, w2_ref, b2_ref, o_ref):
    te = col_ref.shape[0]
    n_pad = emb_ref.shape[0]
    node_iota = jax.lax.broadcasted_iota(jnp.int32, (te, n_pad), 1)
    col_oh = jnp.where(col_ref[...] == node_iota, 1.0, 0.0).astype(jnp.float32)
    row_oh = jnp.where(row_ref[...] == node_iota, 1.0, 0.0).astype(jnp.float32)

    f1 = jnp.dot(col_oh, emb_ref[...], preferred_element_type=jnp.float32)  # emb[col]
    f2 = jnp.dot(row_oh, emb_ref[...], preferred_element_type=jnp.float32)  # emb[row]

    # cat([f1, f2]) @ W1  ==  f1 @ W1a + f2 @ W1b
    h = jnp.dot(f1, w1a_ref[...], preferred_element_type=jnp.float32)
    h = h + jnp.dot(f2, w1b_ref[...], preferred_element_type=jnp.float32)
    h = jnp.maximum(h + b1_ref[...], 0.0)            # ReLU (dropout = identity in eval)

    ew = jnp.dot(h, w2_ref[...], preferred_element_type=jnp.float32)
    ew = jnp.maximum(ew + b2_ref[...], 0.0)          # final edge_weight.relu()
    o_ref[...] = (ew * mask_ref[...]).astype(o_ref.dtype)   # zero out padded edges


def pallas_edge_mlp(emb_pad, col2d, row2d, mask2d, w1a, w1b, b1, w2, b2, te):
    n_pad, cp = emb_pad.shape
    e_pad = col2d.shape[0]
    hp = w1a.shape[1]
    return pl.pallas_call(
        _edge_mlp_kernel,
        out_shape=jax.ShapeDtypeStruct((e_pad, LANE), jnp.float32),
        grid=(e_pad // te,),
        in_specs=[
            pl.BlockSpec((n_pad, cp), lambda e: (0, 0)),   # emb VMEM-resident
            pl.BlockSpec((te, 1), lambda e: (e, 0)),
            pl.BlockSpec((te, 1), lambda e: (e, 0)),
            pl.BlockSpec((te, 1), lambda e: (e, 0)),
            pl.BlockSpec((cp, hp), lambda e: (0, 0)),
            pl.BlockSpec((cp, hp), lambda e: (0, 0)),
            pl.BlockSpec((1, hp), lambda e: (0, 0)),
            pl.BlockSpec((hp, LANE), lambda e: (0, 0)),
            pl.BlockSpec((1, LANE), lambda e: (0, 0)),
        ],
        out_specs=pl.BlockSpec((te, LANE), lambda e: (e, 0)),
        compiler_params=pltpu.CompilerParams(dimension_semantics=("parallel",)),
    )(emb_pad, col2d, row2d, mask2d, w1a, w1b, b1, w2, b2)


# ----------------------------------------------------------------------------
# Padding of params / inputs to 128-lane layouts
# ----------------------------------------------------------------------------
def _prepare_padded_params(params, c):
    Wm, bm = params["model"]["Wm"], params["model"]["bm"]
    W1, b1 = params["extractor"]["W1"], params["extractor"]["b1"]
    W2, b2 = params["extractor"]["W2"], params["extractor"]["b2"]
    f_in = Wm.shape[0]
    hid = W1.shape[1]                      # 4*C
    f_pad = _round_up(f_in, LANE)
    cp = _round_up(c, LANE)
    hp = _round_up(hid, LANE)
    return {
        "f_pad": f_pad, "cp": cp, "hp": hp,
        "Wm": _pad2d(Wm, f_pad, cp),
        "bm": _pad2d(bm, 1, cp),
        "W1a": _pad2d(W1[:c], cp, hp),
        "W1b": _pad2d(W1[c:], cp, hp),
        "b1": _pad2d(b1, 1, hp),
        # Replicate the single output column of W2/b2 across 128 lanes so the
        # edge-weight store is fully lane-dense (column 0 = canonical value).
        "W2": _pad2d(jnp.broadcast_to(W2, (hid, LANE)), hp, LANE),
        "b2": jnp.broadcast_to(b2, (1, LANE)),
    }


def _padded_inputs(x, edge_index, f_pad):
    n = x.shape[0]
    e = edge_index.shape[1]
    tn = _choose_tile(n)
    te = _choose_tile(e)
    n_pad = _round_up(n, tn)
    e_pad = _round_up(e, te)
    x_pad = _pad2d(x.astype(jnp.float32), n_pad, f_pad)
    col2d = _pad2d(edge_index[0].astype(jnp.int32)[:, None], e_pad, 1)
    row2d = _pad2d(edge_index[1].astype(jnp.int32)[:, None], e_pad, 1)
    mask2d = _pad2d(jnp.ones((e, 1), jnp.float32), e_pad, 1)  # 1 = real edge, 0 = pad
    return x_pad, col2d, row2d, mask2d, tn, te


# ----------------------------------------------------------------------------
# Edge_Weight forward (and get_weight), matching the PyTorch module semantics
# ----------------------------------------------------------------------------
def edge_weight_get_weight(params, x, edge_index):
    c = params["model"]["Wm"].shape[1]
    e = edge_index.shape[1]
    pp = _prepare_padded_params(params, c)
    x_pad, col2d, row2d, mask2d, tn, te = _padded_inputs(x, edge_index, pp["f_pad"])
    h_pad = pallas_linear(x_pad, pp["Wm"], pp["bm"], tn)
    emb_pad = pallas_propagate(h_pad, col2d, row2d, mask2d, te)   # emb = model(x, edge_index)
    ew_pad = pallas_edge_mlp(emb_pad, col2d, row2d, mask2d,
                             pp["W1a"], pp["W1b"], pp["b1"], pp["W2"], pp["b2"], te)
    return ew_pad[:e, 0:1]


def edge_weight_forward(params, x, edge_index, edge_weight=None):
    n = x.shape[0]
    c = params["model"]["Wm"].shape[1]
    e = edge_index.shape[1]
    pp = _prepare_padded_params(params, c)
    x_pad, col2d, row2d, mask2d, tn, te = _padded_inputs(x, edge_index, pp["f_pad"])

    # Backbone linear computed ONCE, reused by both propagate passes.
    h_pad = pallas_linear(x_pad, pp["Wm"], pp["bm"], tn)

    if edge_weight is None:
        # emb = self.model(x, edge_index)   (unit weights on real edges)
        emb_pad = pallas_propagate(h_pad, col2d, row2d, mask2d, te)
        # edge_weight = self.extractor(cat(emb[col], emb[row])).relu()  (fused)
        ew_pad = pallas_edge_mlp(emb_pad, col2d, row2d, mask2d,
                                 pp["W1a"], pp["W1b"], pp["b1"], pp["W2"], pp["b2"], te)
    else:
        ew = edge_weight.astype(jnp.float32).reshape(e, 1)
        ew_pad = _pad2d(jnp.broadcast_to(ew, (e, LANE)), col2d.shape[0], LANE)

    # logist = self.model(x, edge_index, edge_weight)
    out_pad = pallas_propagate(h_pad, col2d, row2d, ew_pad, te)
    return out_pad[:n, :c]


# ----------------------------------------------------------------------------
# Pure-JAX reference (same synthesized backbone) for a correctness check
# ----------------------------------------------------------------------------
def reference_forward(params, x, edge_index):
    hi = jax.lax.Precision.HIGHEST
    Wm, bm = params["model"]["Wm"], params["model"]["bm"]
    W1, b1 = params["extractor"]["W1"], params["extractor"]["b1"]
    W2, b2 = params["extractor"]["W2"], params["extractor"]["b2"]
    src, dst = edge_index[0], edge_index[1]
    h = jnp.dot(x, Wm, precision=hi) + bm
    emb = h + jnp.zeros_like(h).at[dst].add(h[src])
    f12 = jnp.concatenate([emb[src], emb[dst]], axis=-1)
    hid = jnp.maximum(jnp.dot(f12, W1, precision=hi) + b1, 0.0)
    ew = jnp.maximum(jnp.dot(hid, W2, precision=hi) + b2, 0.0)
    return h + jnp.zeros_like(h).at[dst].add(h[src] * ew)


# ----------------------------------------------------------------------------
# Main
# ----------------------------------------------------------------------------
if __name__ == "__main__":
    key = jax.random.PRNGKey(0)
    N, F_IN, C, E = 16, 32, 4, 24   # nodes, in-features, out_channels, edges

    k_x, k_wm, k_bm, k_w1, k_b1, k_w2, k_b2 = jax.random.split(key, 7)
    x = jax.random.normal(k_x, (N, F_IN), dtype=jnp.float32)

    # deterministic directed graph: ring edges + a few chords
    src = jnp.concatenate([jnp.arange(N), jnp.arange(8)]).astype(jnp.int32)
    dst = jnp.concatenate([(jnp.arange(N) + 1) % N, (jnp.arange(8) + 5) % N]).astype(jnp.int32)
    edge_index = jnp.stack([src, dst], axis=0)   # [2, E]

    params = {
        "model": {   # frozen backbone
            "Wm": jax.random.normal(k_wm, (F_IN, C), jnp.float32) * 0.1,
            "bm": jax.random.normal(k_bm, (1, C), jnp.float32) * 0.1,
        },
        "extractor": {   # MLP([2C, 4C, 1])
            "W1": jax.random.normal(k_w1, (2 * C, 4 * C), jnp.float32) * 0.2,
            "b1": jax.random.normal(k_b1, (1, 4 * C), jnp.float32) * 0.1,
            "W2": jax.random.normal(k_w2, (4 * C, 1), jnp.float32) * 0.2,
            "b2": jax.random.normal(k_b2, (1, 1), jnp.float32) * 0.1,
        },
    }

    logits = jax.jit(functools.partial(edge_weight_forward, params))(x, edge_index)
    jax.block_until_ready(logits)
    assert logits.shape == (N, C)

    ref = reference_forward(params, x, edge_index)
    max_err = float(jnp.max(jnp.abs(logits - ref)))
    assert jnp.allclose(logits, ref, atol=2e-2, rtol=2e-2), f"max abs err = {max_err}"

    print("KERNEL_OK")
</pallas_src>

<mosaic_0001>
module attributes {stable_mosaic.version = 11 : i64} {
  func.func @_propagate_kernel(%arg0: i32, %arg1: memref<128x128xf32, #tpu.memory_space<vmem>>, %arg2: memref<128x1xi32, #tpu.memory_space<vmem>>, %arg3: memref<128x1xi32, #tpu.memory_space<vmem>>, %arg4: memref<128x1xf32, #tpu.memory_space<vmem>>, %arg5: memref<128x128xf32, #tpu.memory_space<vmem>>) attributes {dimension_semantics = [#tpu.dimension_semantics<arbitrary>], iteration_bounds = array<i64: 1>, scalar_prefetch = 0 : i64, scratch_operands = 0 : i64, tpu.core_type = #tpu.core_type<tc>, window_params = [{pipeline_mode = #tpu.pipeline_mode<synchronous>, transform_indices = @transform_0, window_bounds = array<i64: 128, 128>}, {transform_indices = @transform_1, window_bounds = array<i64: 128, 1>}, {transform_indices = @transform_2, window_bounds = array<i64: 128, 1>}, {transform_indices = @transform_3, window_bounds = array<i64: 128, 1>}, {pipeline_mode = #tpu.pipeline_mode<synchronous>, transform_indices = @transform_4, window_bounds = array<i64: 128, 128>}]} {
    %c0_i32 = arith.constant 0 : i32
    %0 = arith.cmpi eq, %arg0, %c0_i32 : i32
    %1 = arith.extui %0 : i1 to i32
    %c0_i32_0 = arith.constant 0 : i32
    %2 = arith.cmpi ne, %1, %c0_i32_0 : i32
    scf.if %2 {
      %c0_17 = arith.constant 0 : index
      %c0_18 = arith.constant 0 : index
      %26 = vector.load %arg1[%c0_17, %c0_18] : memref<128x128xf32, #tpu.memory_space<vmem>>, vector<128x128xf32>
      %c0_19 = arith.constant 0 : index
      %c0_20 = arith.constant 0 : index
      %27 = vector.load %arg5[%c0_19, %c0_20] : memref<128x128xf32, #tpu.memory_space<vmem>>, vector<128x128xf32>
      tpu.vector_store %arg5[%c0_19, %c0_20], %26 {strides = array<i32>} : memref<128x128xf32, #tpu.memory_space<vmem>>, vector<128x128xf32>,
    } else {
    }
    %3 = tpu.iota {dimensions = array<i32: 1>} : vector<128x128xi32>
    %c0 = arith.constant 0 : index
    %c0_1 = arith.constant 0 : index
    %4 = vector.load %arg2[%c0, %c0_1] : memref<128x1xi32, #tpu.memory_space<vmem>>, vector<128x1xi32>
    %5 = vector.broadcast %4 : vector<128x1xi32> to vector<128x128xi32>
    %6 = arith.cmpi eq, %5, %3 : vector<128x128xi32>
    %cst = arith.constant 1.000000e+00 : f32
    %cst_2 = arith.constant 0.000000e+00 : f32
    %7 = vector.broadcast %cst : f32 to vector<128x128xf32>
    %8 = vector.broadcast %cst_2 : f32 to vector<128x128xf32>
    %9 = arith.select %6, %7, %8 : vector<128x128xi1>, vector<128x128xf32>
    %c0_3 = arith.constant 0 : index
    %c0_4 = arith.constant 0 : index
    %10 = vector.load %arg3[%c0_3, %c0_4] : memref<128x1xi32, #tpu.memory_space<vmem>>, vector<128x1xi32>
    %11 = vector.broadcast %10 : vector<128x1xi32> to vector<128x128xi32>
    %12 = arith.cmpi eq, %11, %3 : vector<128x128xi32>
    %cst_5 = arith.constant 1.000000e+00 : f32
    %cst_6 = arith.constant 0.000000e+00 : f32
    %13 = vector.broadcast %cst_5 : f32 to vector<128x128xf32>
    %14 = vector.broadcast %cst_6 : f32 to vector<128x128xf32>
    %15 = arith.select %12, %13, %14 : vector<128x128xi1>, vector<128x128xf32>
    %c0_7 = arith.constant 0 : index
    %c0_8 = arith.constant 0 : index
    %16 = vector.load %arg1[%c0_7, %c0_8] : memref<128x128xf32, #tpu.memory_space<vmem>>, vector<128x128xf32>
    %cst_9 = arith.constant dense<0.000000e+00> : vector<128x128xf32>
    %17 = tpu.matmul %9, %16, %cst_9 {dimension_numbers = #tpu.dot_dimension_numbers<[1], [0], [0], [1], [0, 0, 1, 1], [], []>} : vector<128x128xf32>, vector<128x128xf32>, vector<128x128xf32> -> vector<128x128xf32>
    %c0_10 = arith.constant 0 : index
    %c0_11 = arith.constant 0 : index
    %18 = vector.load %arg4[%c0_10, %c0_11] : memref<128x1xf32, #tpu.memory_space<vmem>>, vector<128x1xf32>
    %19 = vector.broadcast %18 : vector<128x1xf32> to vector<128x128xf32>
    %20 = arith.mulf %19, %17 : vector<128x128xf32>
    %c0_12 = arith.constant 0 : index
    %c0_13 = arith.constant 0 : index
    %21 = vector.load %arg5[%c0_12, %c0_13] : memref<128x128xf32, #tpu.memory_space<vmem>>, vector<128x128xf32>
    %22 = tpu.transpose %15, [1, 0] : vector<128x128xf32> -> vector<128x128xf32>
    %cst_14 = arith.constant dense<0.000000e+00> : vector<128x128xf32>
    %23 = tpu.matmul %22, %20, %cst_14 {dimension_numbers = #tpu.dot_dimension_numbers<[1], [0], [0], [1], [0, 0, 1, 1], [], []>} : vector<128x128xf32>, vector<128x128xf32>, vector<128x128xf32> -> vector<128x128xf32>
    %24 = arith.addf %21, %23 : vector<128x128xf32>
    %c0_15 = arith.constant 0 : index
    %c0_16 = arith.constant 0 : index
    %25 = vector.load %arg5[%c0_15, %c0_16] : memref<128x128xf32, #tpu.memory_space<vmem>>, vector<128x128xf32>
    tpu.vector_store %arg5[%c0_15, %c0_16], %24 {strides = array<i32>} : memref<128x128xf32, #tpu.memory_space<vmem>>, vector<128x128xf32>,
    return
  }
  func.func @transform_0(%arg0: i32) -> (i32, i32) {
    %c0_i32 = arith.constant 0 : i32
    %c0_i32_0 = arith.constant 0 : i32
    %c0_i32_1 = arith.constant 0 : i32
    return %c0_i32, %c0_i32_0 : i32, i32
  }
  func.func @transform_1(%arg0: i32) -> (i32, i32) {
    %c0_i32 = arith.constant 0 : i32
    %c0_i32_0 = arith.constant 0 : i32
    return %arg0, %c0_i32 : i32, i32
  }
  func.func @transform_2(%arg0: i32) -> (i32, i32) {
    %c0_i32 = arith.constant 0 : i32
    %c0_i32_0 = arith.constant 0 : i32
    return %arg0, %c0_i32 : i32, i32
  }
  func.func @transform_3(%arg0: i32) -> (i32, i32) {
    %c0_i32 = arith.constant 0 : i32
    %c0_i32_0 = arith.constant 0 : i32
    return %arg0, %c0_i32 : i32, i32
  }
  func.func @transform_4(%arg0: i32) -> (i32, i32) {
    %c0_i32 = arith.constant 0 : i32
    %c0_i32_0 = arith.constant 0 : i32
    %c0_i32_1 = arith.constant 0 : i32
    return %c0_i32, %c0_i32_0 : i32, i32
  }
}

module attributes {stable_mosaic.version = 11 : i64} {
  func.func @_edge_mlp_kernel(%arg0: i32, %arg1: memref<128x128xf32, #tpu.memory_space<vmem>>, %arg2: memref<128x1xi32, #tpu.memory_space<vmem>>, %arg3: memref<128x1xi32, #tpu.memory_space<vmem>>, %arg4: memref<128x1xf32, #tpu.memory_space<vmem>>, %arg5: memref<128x128xf32, #tpu.memory_space<vmem>>, %arg6: memref<128x128xf32, #tpu.memory_space<vmem>>, %arg7: memref<1x128xf32, #tpu.memory_space<vmem>>, %arg8: memref<128x128xf32, #tpu.memory_space<vmem>>, %arg9: memref<1x128xf32, #tpu.memory_space<vmem>>, %arg10: memref<128x128xf32, #tpu.memory_space<vmem>>) attributes {dimension_semantics = [#tpu.dimension_semantics<parallel>], iteration_bounds = array<i64: 1>, scalar_prefetch = 0 : i64, scratch_operands = 0 : i64, tpu.core_type = #tpu.core_type<tc>, window_params = [{pipeline_mode = #tpu.pipeline_mode<synchronous>, transform_indices = @transform_0, window_bounds = array<i64: 128, 128>}, {transform_indices = @transform_1, window_bounds = array<i64: 128, 1>}, {transform_indices = @transform_2, window_bounds = array<i64: 128, 1>}, {transform_indices = @transform_3, window_bounds = array<i64: 128, 1>}, {pipeline_mode = #tpu.pipeline_mode<synchronous>, transform_indices = @transform_4, window_bounds = array<i64: 128, 128>}, {pipeline_mode = #tpu.pipeline_mode<synchronous>, transform_indices = @transform_5, window_bounds = array<i64: 128, 128>}, {pipeline_mode = #tpu.pipeline_mode<synchronous>, transform_indices = @transform_6, window_bounds = array<i64: 1, 128>}, {pipeline_mode = #tpu.pipeline_mode<synchronous>, transform_indices = @transform_7, window_bounds = array<i64: 128, 128>}, {pipeline_mode = #tpu.pipeline_mode<synchronous>, transform_indices = @transform_8, window_bounds = array<i64: 1, 128>}, {transform_indices = @transform_9, window_bounds = array<i64: 128, 128>}]} {
    %0 = tpu.iota {dimensions = array<i32: 1>} : vector<128x128xi32>
    %c0 = arith.constant 0 : index
    %c0_0 = arith.constant 0 : index
    %1 = vector.load %arg2[%c0, %c0_0] : memref<128x1xi32, #tpu.memory_space<vmem>>, vector<128x1xi32>
    %2 = vector.broadcast %1 : vector<128x1xi32> to vector<128x128xi32>
    %3 = arith.cmpi eq, %2, %0 : vector<128x128xi32>
    %cst = arith.constant 1.000000e+00 : f32
    %cst_1 = arith.constant 0.000000e+00 : f32
    %4 = vector.broadcast %cst : f32 to vector<128x128xf32>
    %5 = vector.broadcast %cst_1 : f32 to vector<128x128xf32>
    %6 = arith.select %3, %4, %5 : vector<128x128xi1>, vector<128x128xf32>
    %c0_2 = arith.constant 0 : index
    %c0_3 = arith.constant 0 : index
    %7 = vector.load %arg3[%c0_2, %c0_3] : memref<128x1xi32, #tpu.memory_space<vmem>>, vector<128x1xi32>
    %8 = vector.broadcast %7 : vector<128x1xi32> to vector<128x128xi32>
    %9 = arith.cmpi eq, %8, %0 : vector<128x128xi32>
    %cst_4 = arith.constant 1.000000e+00 : f32
    %cst_5 = arith.constant 0.000000e+00 : f32
    %10 = vector.broadcast %cst_4 : f32 to vector<128x128xf32>
    %11 = vector.broadcast %cst_5 : f32 to vector<128x128xf32>
    %12 = arith.select %9, %10, %11 : vector<128x128xi1>, vector<128x128xf32>
    %c0_6 = arith.constant 0 : index
    %c0_7 = arith.constant 0 : index
    %13 = vector.load %arg1[%c0_6, %c0_7] : memref<128x128xf32, #tpu.memory_space<vmem>>, vector<128x128xf32>
    %cst_8 = arith.constant dense<0.000000e+00> : vector<128x128xf32>
    %14 = tpu.matmul %6, %13, %cst_8 {dimension_numbers = #tpu.dot_dimension_numbers<[1], [0], [0], [1], [0, 0, 1, 1], [], []>} : vector<128x128xf32>, vector<128x128xf32>, vector<128x128xf32> -> vector<128x128xf32>
    %c0_9 = arith.constant 0 : index
    %c0_10 = arith.constant 0 : index
    %15 = vector.load %arg1[%c0_9, %c0_10] : memref<128x128xf32, #tpu.memory_space<vmem>>, vector<128x128xf32>
    %cst_11 = arith.constant dense<0.000000e+00> : vector<128x128xf32>
    %16 = tpu.matmul %12, %15, %cst_11 {dimension_numbers = #tpu.dot_dimension_numbers<[1], [0], [0], [1], [0, 0, 1, 1], [], []>} : vector<128x128xf32>, vector<128x128xf32>, vector<128x128xf32> -> vector<128x128xf32>
    %c0_12 = arith.constant 0 : index
    %c0_13 = arith.constant 0 : index
    %17 = vector.load %arg5[%c0_12, %c0_13] : memref<128x128xf32, #tpu.memory_space<vmem>>, vector<128x128xf32>
    %cst_14 = arith.constant dense<0.000000e+00> : vector<128x128xf32>
    %18 = tpu.matmul %14, %17, %cst_14 {dimension_numbers = #tpu.dot_dimension_numbers<[1], [0], [0], [1], [0, 0, 1, 1], [], []>} : vector<128x128xf32>, vector<128x128xf32>, vector<128x128xf32> -> vector<128x128xf32>
    %c0_15 = arith.constant 0 : index
    %c0_16 = arith.constant 0 : index
    %19 = vector.load %arg6[%c0_15, %c0_16] : memref<128x128xf32, #tpu.memory_space<vmem>>, vector<128x128xf32>
    %cst_17 = arith.constant dense<0.000000e+00> : vector<128x128xf32>
    %20 = tpu.matmul %16, %19, %cst_17 {dimension_numbers = #tpu.dot_dimension_numbers<[1], [0], [0], [1], [0, 0, 1, 1], [], []>} : vector<128x128xf32>, vector<128x128xf32>, vector<128x128xf32> -> vector<128x128xf32>
    %21 = arith.addf %18, %20 : vector<128x128xf32>
    %c0_18 = arith.constant 0 : index
    %c0_19 = arith.constant 0 : index
    %22 = vector.load %arg7[%c0_18, %c0_19] : memref<1x128xf32, #tpu.memory_space<vmem>>, vector<1x128xf32>
    %23 = vector.broadcast %22 : vector<1x128xf32> to vector<128x128xf32>
    %24 = arith.addf %21, %23 : vector<128x128xf32>
    %cst_20 = arith.constant 0.000000e+00 : f32
    %25 = vector.broadcast %cst_20 : f32 to vector<128x128xf32>
    %26 = arith.maximumf %24, %25 : vector<128x128xf32>
    %c0_21 = arith.constant 0 : index
    %c0_22 = arith.constant 0 : index
    %27 = vector.load %arg8[%c0_21, %c0_22] : memref<128x128xf32, #tpu.memory_space<vmem>>, vector<128x128xf32>
    %cst_23 = arith.constant dense<0.000000e+00> : vector<128x128xf32>
    %28 = tpu.matmul %26, %27, %cst_23 {dimension_numbers = #tpu.dot_dimension_numbers<[1], [0], [0], [1], [0, 0, 1, 1], [], []>} : vector<128x128xf32>, vector<128x128xf32>, vector<128x128xf32> -> vector<128x128xf32>
    %c0_24 = arith.constant 0 : index
    %c0_25 = arith.constant 0 : index
    %29 = vector.load %arg9[%c0_24, %c0_25] : memref<1x128xf32, #tpu.memory_space<vmem>>, vector<1x128xf32>
    %30 = vector.broadcast %29 : vector<1x128xf32> to vector<128x128xf32>
    %31 = arith.addf %28, %30 : vector<128x128xf32>
    %cst_26 = arith.constant 0.000000e+00 : f32
    %32 = vector.broadcast %cst_26 : f32 to vector<128x128xf32>
    %33 = arith.maximumf %31, %32 : vector<128x128xf32>
    %c0_27 = arith.constant 0 : index
    %c0_28 = arith.constant 0 : index
    %34 = vector.load %arg4[%c0_27, %c0_28] : memref<128x1xf32, #tpu.memory_space<vmem>>, vector<128x1xf32>
    %35 = vector.broadcast %34 : vector<128x1xf32> to vector<128x128xf32>
    %36 = arith.mulf %33, %35 : vector<128x128xf32>
    %c0_29 = arith.constant 0 : index
    %c0_30 = arith.constant 0 : index
    %37 = vector.load %arg10[%c0_29, %c0_30] : memref<128x128xf32, #tpu.memory_space<vmem>>, vector<128x128xf32>
    tpu.vector_store %arg10[%c0_29, %c0_30], %36 {strides = array<i32>} : memref<128x128xf32, #tpu.memory_space<vmem>>, vector<128x128xf32>,
    return
  }
  func.func @transform_0(%arg0: i32) -> (i32, i32) {
    %c0_i32 = arith.constant 0 : i32
    %c0_i32_0 = arith.constant 0 : i32
    %c0_i32_1 = arith.constant 0 : i32
    return %c0_i32, %c0_i32_0 : i32, i32
  }
  func.func @transform_1(%arg0: i32) -> (i32, i32) {
    %c0_i32 = arith.constant 0 : i32
    %c0_i32_0 = arith.constant 0 : i32
    return %arg0, %c0_i32 : i32, i32
  }
  func.func @transform_2(%arg0: i32) -> (i32, i32) {
    %c0_i32 = arith.constant 0 : i32
    %c0_i32_0 = arith.constant 0 : i32
    return %arg0, %c0_i32 : i32, i32
  }
  func.func @transform_3(%arg0: i32) -> (i32, i32) {
    %c0_i32 = arith.constant 0 : i32
    %c0_i32_0 = arith.constant 0 : i32
    return %arg0, %c0_i32 : i32, i32
  }
  func.func @transform_4(%arg0: i32) -> (i32, i32) {
    %c0_i32 = arith.constant 0 : i32
    %c0_i32_0 = arith.constant 0 : i32
    %c0_i32_1 = arith.constant 0 : i32
    return %c0_i32, %c0_i32_0 : i32, i32
  }
  func.func @transform_5(%arg0: i32) -> (i32, i32) {
    %c0_i32 = arith.constant 0 : i32
    %c0_i32_0 = arith.constant 0 : i32
    %c0_i32_1 = arith.constant 0 : i32
    return %c0_i32, %c0_i32_0 : i32, i32
  }
  func.func @transform_6(%arg0: i32) -> (i32, i32) {
    %c0_i32 = arith.constant 0 : i32
    %c0_i32_0 = arith.constant 0 : i32
    %c0_i32_1 = arith.constant 0 : i32
    return %c0_i32, %c0_i32_0 : i32, i32
  }
  func.func @transform_7(%arg0: i32) -> (i32, i32) {
    %c0_i32 = arith.constant 0 : i32
    %c0_i32_0 = arith.constant 0 : i32
    %c0_i32_1 = arith.constant 0 : i32
    return %c0_i32, %c0_i32_0 : i32, i32
  }
  func.func @transform_8(%arg0: i32) -> (i32, i32) {
    %c0_i32 = arith.constant 0 : i32
    %c0_i32_0 = arith.constant 0 : i32
    %c0_i32_1 = arith.constant 0 : i32
    return %c0_i32, %c0_i32_0 : i32, i32
  }
  func.func @transform_9(%arg0: i32) -> (i32, i32) {
    %c0_i32 = arith.constant 0 : i32
    %c0_i32_0 = arith.constant 0 : i32
    return %arg0, %c0_i32 : i32, i32
  }
}

module attributes {stable_mosaic.version = 11 : i64} {
  func.func @_propagate_kernel(%arg0: i32, %arg1: memref<128x128xf32, #tpu.memory_space<vmem>>, %arg2: memref<128x1xi32, #tpu.memory_space<vmem>>, %arg3: memref<128x1xi32, #tpu.memory_space<vmem>>, %arg4: memref<128x128xf32, #tpu.memory_space<vmem>>, %arg5: memref<128x128xf32, #tpu.memory_space<vmem>>) attributes {dimension_semantics = [#tpu.dimension_semantics<arbitrary>], iteration_bounds = array<i64: 1>, scalar_prefetch = 0 : i64, scratch_operands = 0 : i64, tpu.core_type = #tpu.core_type<tc>, window_params = [{pipeline_mode = #tpu.pipeline_mode<synchronous>, transform_indices = @transform_0, window_bounds = array<i64: 128, 128>}, {transform_indices = @transform_1, window_bounds = array<i64: 128, 1>}, {transform_indices = @transform_2, window_bounds = array<i64: 128, 1>}, {transform_indices = @transform_3, window_bounds = array<i64: 128, 128>}, {pipeline_mode = #tpu.pipeline_mode<synchronous>, transform_indices = @transform_4, window_bounds = array<i64: 128, 128>}]} {
    %c0_i32 = arith.constant 0 : i32
    %0 = arith.cmpi eq, %arg0, %c0_i32 : i32
    %1 = arith.extui %0 : i1 to i32
    %c0_i32_0 = arith.constant 0 : i32
    %2 = arith.cmpi ne, %1, %c0_i32_0 : i32
    scf.if %2 {
      %c0_17 = arith.constant 0 : index
      %c0_18 = arith.constant 0 : index
      %27 = vector.load %arg1[%c0_17, %c0_18] : memref<128x128xf32, #tpu.memory_space<vmem>>, vector<128x128xf32>
      %c0_19 = arith.constant 0 : index
      %c0_20 = arith.constant 0 : index
      %28 = vector.load %arg5[%c0_19, %c0_20] : memref<128x128xf32, #tpu.memory_space<vmem>>, vector<128x128xf32>
      tpu.vector_store %arg5[%c0_19, %c0_20], %27 {strides = array<i32>} : memref<128x128xf32, #tpu.memory_space<vmem>>, vector<128x128xf32>,
    } else {
    }
    %3 = tpu.iota {dimensions = array<i32: 1>} : vector<128x128xi32>
    %c0 = arith.constant 0 : index
    %c0_1 = arith.constant 0 : index
    %4 = vector.load %arg2[%c0, %c0_1] : memref<128x1xi32, #tpu.memory_space<vmem>>, vector<128x1xi32>
    %5 = vector.broadcast %4 : vector<128x1xi32> to vector<128x128xi32>
    %6 = arith.cmpi eq, %5, %3 : vector<128x128xi32>
    %cst = arith.constant 1.000000e+00 : f32
    %cst_2 = arith.constant 0.000000e+00 : f32
    %7 = vector.broadcast %cst : f32 to vector<128x128xf32>
    %8 = vector.broadcast %cst_2 : f32 to vector<128x128xf32>
    %9 = arith.select %6, %7, %8 : vector<128x128xi1>, vector<128x128xf32>
    %c0_3 = arith.constant 0 : index
    %c0_4 = arith.constant 0 : index
    %10 = vector.load %arg3[%c0_3, %c0_4] : memref<128x1xi32, #tpu.memory_space<vmem>>, vector<128x1xi32>
    %11 = vector.broadcast %10 : vector<128x1xi32> to vector<128x128xi32>
    %12 = arith.cmpi eq, %11, %3 : vector<128x128xi32>
    %cst_5 = arith.constant 1.000000e+00 : f32
    %cst_6 = arith.constant 0.000000e+00 : f32
    %13 = vector.broadcast %cst_5 : f32 to vector<128x128xf32>
    %14 = vector.broadcast %cst_6 : f32 to vector<128x128xf32>
    %15 = arith.select %12, %13, %14 : vector<128x128xi1>, vector<128x128xf32>
    %c0_7 = arith.constant 0 : index
    %c0_8 = arith.constant 0 : index
    %16 = vector.load %arg1[%c0_7, %c0_8] : memref<128x128xf32, #tpu.memory_space<vmem>>, vector<128x128xf32>
    %cst_9 = arith.constant dense<0.000000e+00> : vector<128x128xf32>
    %17 = tpu.matmul %9, %16, %cst_9 {dimension_numbers = #tpu.dot_dimension_numbers<[1], [0], [0], [1], [0, 0, 1, 1], [], []>} : vector<128x128xf32>, vector<128x128xf32>, vector<128x128xf32> -> vector<128x128xf32>
    %c0_10 = arith.constant 0 : index
    %c0_11 = arith.constant 0 : index
    %18 = vector.load %arg4[%c0_10, %c0_11] : memref<128x128xf32, #tpu.memory_space<vmem>>, vector<128x128xf32>
    %19 = vector.extract_strided_slice %18 {offsets = [0, 0], sizes = [128, 1], strides = [1, 1]} : vector<128x128xf32> to vector<128x1xf32>
    %20 = vector.broadcast %19 : vector<128x1xf32> to vector<128x128xf32>
    %21 = arith.mulf %20, %17 : vector<128x128xf32>
    %c0_12 = arith.constant 0 : index
    %c0_13 = arith.constant 0 : index
    %22 = vector.load %arg5[%c0_12, %c0_13] : memref<128x128xf32, #tpu.memory_space<vmem>>, vector<128x128xf32>
    %23 = tpu.transpose %15, [1, 0] : vector<128x128xf32> -> vector<128x128xf32>
    %cst_14 = arith.constant dense<0.000000e+00> : vector<128x128xf32>
    %24 = tpu.matmul %23, %21, %cst_14 {dimension_numbers = #tpu.dot_dimension_numbers<[1], [0], [0], [1], [0, 0, 1, 1], [], []>} : vector<128x128xf32>, vector<128x128xf32>, vector<128x128xf32> -> vector<128x128xf32>
    %25 = arith.addf %22, %24 : vector<128x128xf32>
    %c0_15 = arith.constant 0 : index
    %c0_16 = arith.constant 0 : index
    %26 = vector.load %arg5[%c0_15, %c0_16] : memref<128x128xf32, #tpu.memory_space<vmem>>, vector<128x128xf32>
    tpu.vector_store %arg5[%c0_15, %c0_16], %25 {strides = array<i32>} : memref<128x128xf32, #tpu.memory_space<vmem>>, vector<128x128xf32>,
    return
  }
  func.func @transform_0(%arg0: i32) -> (i32, i32) {
    %c0_i32 = arith.constant 0 : i32
    %c0_i32_0 = arith.constant 0 : i32
    %c0_i32_1 = arith.constant 0 : i32
    return %c0_i32, %c0_i32_0 : i32, i32
  }
  func.func @transform_1(%arg0: i32) -> (i32, i32) {
    %c0_i32 = arith.constant 0 : i32
    %c0_i32_0 = arith.constant 0 : i32
    return %arg0, %c0_i32 : i32, i32
  }
  func.func @transform_2(%arg0: i32) -> (i32, i32) {
    %c0_i32 = arith.constant 0 : i32
    %c0_i32_0 = arith.constant 0 : i32
    return %arg0, %c0_i32 : i32, i32
  }
  func.func @transform_3(%arg0: i32) -> (i32, i32) {
    %c0_i32 = arith.constant 0 : i32
    %c0_i32_0 = arith.constant 0 : i32
    return %arg0, %c0_i32 : i32, i32
  }
  func.func @transform_4(%arg0: i32) -> (i32, i32) {
    %c0_i32 = arith.constant 0 : i32
    %c0_i32_0 = arith.constant 0 : i32
    %c0_i32_1 = arith.constant 0 : i32
    return %c0_i32, %c0_i32_0 : i32, i32
  }
}

module attributes {stable_mosaic.version = 11 : i64} {
  func.func @_linear_kernel(%arg0: i32, %arg1: memref<128x128xf32, #tpu.memory_space<vmem>>, %arg2: memref<128x128xf32, #tpu.memory_space<vmem>>, %arg3: memref<1x128xf32, #tpu.memory_space<vmem>>, %arg4: memref<128x128xf32, #tpu.memory_space<vmem>>) attributes {dimension_semantics = [#tpu.dimension_semantics<parallel>], iteration_bounds = array<i64: 1>, scalar_prefetch = 0 : i64, scratch_operands = 0 : i64, tpu.core_type = #tpu.core_type<tc>, window_params = [{transform_indices = @transform_0, window_bounds = array<i64: 128, 128>}, {pipeline_mode = #tpu.pipeline_mode<synchronous>, transform_indices = @transform_1, window_bounds = array<i64: 128, 128>}, {pipeline_mode = #tpu.pipeline_mode<synchronous>, transform_indices = @transform_2, window_bounds = array<i64: 1, 128>}, {transform_indices = @transform_3, window_bounds = array<i64: 128, 128>}]} {
    %c0 = arith.constant 0 : index
    %c0_0 = arith.constant 0 : index
    %0 = vector.load %arg1[%c0, %c0_0] : memref<128x128xf32, #tpu.memory_space<vmem>>, vector<128x128xf32>
    %c0_1 = arith.constant 0 : index
    %c0_2 = arith.constant 0 : index
    %1 = vector.load %arg2[%c0_1, %c0_2] : memref<128x128xf32, #tpu.memory_space<vmem>>, vector<128x128xf32>
    %cst = arith.constant dense<0.000000e+00> : vector<128x128xf32>
    %2 = tpu.matmul %0, %1, %cst {dimension_numbers = #tpu.dot_dimension_numbers<[1], [0], [0], [1], [0, 0, 1, 1], [], []>} : vector<128x128xf32>, vector<128x128xf32>, vector<128x128xf32> -> vector<128x128xf32>
    %c0_3 = arith.constant 0 : index
    %c0_4 = arith.constant 0 : index
    %3 = vector.load %arg3[%c0_3, %c0_4] : memref<1x128xf32, #tpu.memory_space<vmem>>, vector<1x128xf32>
    %4 = vector.broadcast %3 : vector<1x128xf32> to vector<128x128xf32>
    %5 = arith.addf %2, %4 : vector<128x128xf32>
    %c0_5 = arith.constant 0 : index
    %c0_6 = arith.constant 0 : index
    %6 = vector.load %arg4[%c0_5, %c0_6] : memref<128x128xf32, #tpu.memory_space<vmem>>, vector<128x128xf32>
    tpu.vector_store %arg4[%c0_5, %c0_6], %5 {strides = array<i32>} : memref<128x128xf32, #tpu.memory_space<vmem>>, vector<128x128xf32>,
    return
  }
  func.func @transform_0(%arg0: i32) -> (i32, i32) {
    %c0_i32 = arith.constant 0 : i32
    %c0_i32_0 = arith.constant 0 : i32
    return %arg0, %c0_i32 : i32, i32
  }
  func.func @transform_1(%arg0: i32) -> (i32, i32) {
    %c0_i32 = arith.constant 0 : i32
    %c0_i32_0 = arith.constant 0 : i32
    %c0_i32_1 = arith.constant 0 : i32
    return %c0_i32, %c0_i32_0 : i32, i32
  }
  func.func @transform_2(%arg0: i32) -> (i32, i32) {
    %c0_i32 = arith.constant 0 : i32
    %c0_i32_0 = arith.constant 0 : i32
    %c0_i32_1 = arith.constant 0 : i32
    return %c0_i32, %c0_i32_0 : i32, i32
  }
  func.func @transform_3(%arg0: i32) -> (i32, i32) {
    %c0_i32 = arith.constant 0 : i32
    %c0_i32_0 = arith.constant 0 : i32
    return %arg0, %c0_i32 : i32, i32
  }
}

</mosaic_0001>

<llo_original>
// kernel: edge_weight_forward.5
$region0: #{edge_weight_forward.5}
  #allocation0 [shape = 'u32[]', space=smem, size = 0x4, offset = 0x4, fixed_abs, tag = 'smem constant byte address 0x4 - core index']
  #allocation1 [shape = 'u32[144,128]{1,0:T(1,128)}', space=vmem, size = 0x12000, scoped, tag = 'internal scratch']
  %s0 = inlined_call_operand.vmem [shape: f32[128,128], index: 0, kind: input, shape index: {}]
  %s1 = inlined_call_operand.vmem [shape: s32[128,1], index: 1, kind: input, shape index: {}]
  %s2 = inlined_call_operand.vmem [shape: s32[128,1], index: 2, kind: input, shape index: {}]
  %s3 = inlined_call_operand.vmem [shape: f32[128,1], index: 3, kind: input, shape index: {}]
  %s4 = inlined_call_operand.vmem [shape: f32[128,128], index: 4, kind: output, shape index: {}]
  %s5 = sld [smem:[#allocation0]]
  $region30: #{edge_weight_forward.5} parent=0
    _
  %s7 = ssub.s32 1, %s5
  %s8 = scalar_select 0, %s7, %s5
  // Predicated region
  $region2: #{edge_weight_forward.5} parent=0 // pred_check
    _
  $region3: #{edge_weight_forward.5} parent=0 // pred_check_branch
    %10 = sbr.rel (0) target = $region5
  $region4: #{edge_weight_forward.5} parent=0 // pred_region
    _
  $region5: #{edge_weight_forward.5} parent=0 // pred_fallthru
    _
  // Predicated region
  $region6: #{edge_weight_forward.5} parent=0 // pred_check
    _
  $region7: #{edge_weight_forward.5} parent=0 // pred_check_branch
    %12 = sbr.rel (0) target = $region9
  $region8: #{edge_weight_forward.5} parent=0 // pred_region
    _
  $region9: #{edge_weight_forward.5} parent=0 // pred_fallthru
    _
  // Predicated region
  $region10: #{edge_weight_forward.5} parent=0 // pred_check
    _
  $region11: #{edge_weight_forward.5} parent=0 // pred_check_branch
    %14 = sbr.rel (0) target = $region13
  $region12: #{edge_weight_forward.5} parent=0 // pred_region
    _
  $region13: #{edge_weight_forward.5} parent=0 // pred_fallthru
    _
  // Predicated region
  $region14: #{edge_weight_forward.5} parent=0 // pred_check
    _
  $region15: #{edge_weight_forward.5} parent=0 // pred_check_branch
    %16 = sbr.rel (0) target = $region17
  $region16: #{edge_weight_forward.5} parent=0 // pred_region
    _
  $region17: #{edge_weight_forward.5} parent=0 // pred_fallthru
    _
  %p17 = scmp.eq.s32.totalorder 0, 0
  // Predicated region
  $region18: #{edge_weight_forward.5} parent=0 // pred_check
    %p18 = pneg %p17
  $region19: #{edge_weight_forward.5} parent=0 // pred_check_branch
    %20 = sbr.rel (%p18) target = $region21
  $region20: #{edge_weight_forward.5} parent=0 // pred_region
    %v21 = vld [vmem:[%s0] sm:$0xff]
    %v22 = vld [vmem:[%s0 + $0x8] sm:$0xff]
    %v23 = vld [vmem:[%s0 + $0x10] sm:$0xff]
    %v24 = vld [vmem:[%s0 + $0x18] sm:$0xff]
    %v25 = vld [vmem:[%s0 + $0x20] sm:$0xff]
    %v26 = vld [vmem:[%s0 + $0x28] sm:$0xff]
    %v27 = vld [vmem:[%s0 + $0x30] sm:$0xff]
    %v28 = vld [vmem:[%s0 + $0x38] sm:$0xff]
    %v29 = vld [vmem:[%s0 + $0x40] sm:$0xff]
    %v30 = vld [vmem:[%s0 + $0x48] sm:$0xff]
    %v31 = vld [vmem:[%s0 + $0x50] sm:$0xff]
    %v32 = vld [vmem:[%s0 + $0x58] sm:$0xff]
    %v33 = vld [vmem:[%s0 + $0x60] sm:$0xff]
    %v34 = vld [vmem:[%s0 + $0x68] sm:$0xff]
    %v35 = vld [vmem:[%s0 + $0x70] sm:$0xff]
    %v36 = vld [vmem:[%s0 + $0x78] sm:$0xff]
    %37 = vst [vmem:[%s4] sm:$0xff] %v21
    %38 = vst [vmem:[%s4 + $0x8] sm:$0xff] %v22
    %39 = vst [vmem:[%s4 + $0x10] sm:$0xff] %v23
    %40 = vst [vmem:[%s4 + $0x18] sm:$0xff] %v24
    %41 = vst [vmem:[%s4 + $0x20] sm:$0xff] %v25
    %42 = vst [vmem:[%s4 + $0x28] sm:$0xff] %v26
    %43 = vst [vmem:[%s4 + $0x30] sm:$0xff] %v27
    %44 = vst [vmem:[%s4 + $0x38] sm:$0xff] %v28
    %45 = vst [vmem:[%s4 + $0x40] sm:$0xff] %v29
    %46 = vst [vmem:[%s4 + $0x48] sm:$0xff] %v30
    %47 = vst [vmem:[%s4 + $0x50] sm:$0xff] %v31
    %48 = vst [vmem:[%s4 + $0x58] sm:$0xff] %v32
    %49 = vst [vmem:[%s4 + $0x60] sm:$0xff] %v33
    %50 = vst [vmem:[%s4 + $0x68] sm:$0xff] %v34
    %51 = vst [vmem:[%s4 + $0x70] sm:$0xff] %v35
    %52 = vst [vmem:[%s4 + $0x78] sm:$0xff] %v36
  $region21: #{edge_weight_forward.5} parent=0 // pred_fallthru
    _
  %v53 = vlaneseq
  %v54 = vand.u32 %v53, 127
  %v55 = vld [vmem:[%s1] sm:$0xff]
  %v56 = vld [vmem:[%s1 + $0x8] sm:$0xff]
  %v57 = vld [vmem:[%s1 + $0x10] sm:$0xff]
  %v58 = vld [vmem:[%s1 + $0x18] sm:$0xff]
  %v59 = vld [vmem:[%s1 + $0x20] sm:$0xff]
  %v60 = vld [vmem:[%s1 + $0x28] sm:$0xff]
  %v61 = vld [vmem:[%s1 + $0x30] sm:$0xff]
  %v62 = vld [vmem:[%s1 + $0x38] sm:$0xff]
  %v63 = vld [vmem:[%s1 + $0x40] sm:$0xff]
  %v64 = vld [vmem:[%s1 + $0x48] sm:$0xff]
  %v65 = vld [vmem:[%s1 + $0x50] sm:$0xff]
  %v66 = vld [vmem:[%s1 + $0x58] sm:$0xff]
  %v67 = vld [vmem:[%s1 + $0x60] sm:$0xff]
  %v68 = vld [vmem:[%s1 + $0x68] sm:$0xff]
  %v69 = vld [vmem:[%s1 + $0x70] sm:$0xff]
  %v70 = vld [vmem:[%s1 + $0x78] sm:$0xff]
  %71 = vset.pattern.permute.xlu0 0
  %72 = vperm.xlu0 %71, %v55
  %v73 = vpop.permute.xlu0 %72
  %74 = vset.pattern.permute.xlu0 0
  %75 = vperm.xlu0 %74, %v56
  %v76 = vpop.permute.xlu0 %75
  %77 = vset.pattern.permute.xlu0 0
  %78 = vperm.xlu0 %77, %v57
  %v79 = vpop.permute.xlu0 %78
  %80 = vset.pattern.permute.xlu0 0
  %81 = vperm.xlu0 %80, %v58
  %v82 = vpop.permute.xlu0 %81
  %83 = vset.pattern.permute.xlu0 0
  %84 = vperm.xlu0 %83, %v59
  %v85 = vpop.permute.xlu0 %84
  %86 = vset.pattern.permute.xlu0 0
  %87 = vperm.xlu0 %86, %v60
  %v88 = vpop.permute.xlu0 %87
  %89 = vset.pattern.permute.xlu0 0
  %90 = vperm.xlu0 %89, %v61
  %v91 = vpop.permute.xlu0 %90
  %92 = vset.pattern.permute.xlu0 0
  %93 = vperm.xlu0 %92, %v62
  %v94 = vpop.permute.xlu0 %93
  %95 = vset.pattern.permute.xlu0 0
  %96 = vperm.xlu0 %95, %v63
  %v97 = vpop.permute.xlu0 %96
  %98 = vset.pattern.permute.xlu0 0
  %99 = vperm.xlu0 %98, %v64
  %v100 = vpop.permute.xlu0 %99
  %101 = vset.pattern.permute.xlu0 0
  %102 = vperm.xlu0 %101, %v65
  %v103 = vpop.permute.xlu0 %102
  %104 = vset.pattern.permute.xlu0 0
  %105 = vperm.xlu0 %104, %v66
  %v106 = vpop.permute.xlu0 %105
  %107 = vset.pattern.permute.xlu0 0
  %108 = vperm.xlu0 %107, %v67
  %v109 = vpop.permute.xlu0 %108
  %110 = vset.pattern.permute.xlu0 0
  %111 = vperm.xlu0 %110, %v68
  %v112 = vpop.permute.xlu0 %111
  %113 = vset.pattern.permute.xlu0 0
  %114 = vperm.xlu0 %113, %v69
  %v115 = vpop.permute.xlu0 %114
  %116 = vset.pattern.permute.xlu0 0
  %117 = vperm.xlu0 %116, %v70
  %v118 = vpop.permute.xlu0 %117
  %vm119 = vcmp.eq.s32.totalorder %v73, %v54
  %vm120 = vcmp.eq.s32.totalorder %v76, %v54
  %vm121 = vcmp.eq.s32.totalorder %v79, %v54
  %vm122 = vcmp.eq.s32.totalorder %v82, %v54
  %vm123 = vcmp.eq.s32.totalorder %v85, %v54
  %vm124 = vcmp.eq.s32.totalorder %v88, %v54
  %vm125 = vcmp.eq.s32.totalorder %v91, %v54
  %vm126 = vcmp.eq.s32.totalorder %v94, %v54
  %vm127 = vcmp.eq.s32.totalorder %v97, %v54
  %vm128 = vcmp.eq.s32.totalorder %v100, %v54
  %vm129 = vcmp.eq.s32.totalorder %v103, %v54
  %vm130 = vcmp.eq.s32.totalorder %v106, %v54
  %vm131 = vcmp.eq.s32.totalorder %v109, %v54
  %vm132 = vcmp.eq.s32.totalorder %v112, %v54
  %vm133 = vcmp.eq.s32.totalorder %v115, %v54
  %vm134 = vcmp.eq.s32.totalorder %v118, %v54
  %v135 = vsel %vm119, 1.0, 0.0
  %v136 = vsel %vm120, 1.0, 0.0
  %v137 = vsel %vm121, 1.0, 0.0
  %v138 = vsel %vm122, 1.0, 0.0
  %v139 = vsel %vm123, 1.0, 0.0
  %v140 = vsel %vm124, 1.0, 0.0
  %v141 = vsel %vm125, 1.0, 0.0
  %v142 = vsel %vm126, 1.0, 0.0
  %v143 = vsel %vm127, 1.0, 0.0
  %v144 = vsel %vm128, 1.0, 0.0
  %v145 = vsel %vm129, 1.0, 0.0
  %v146 = vsel %vm130, 1.0, 0.0
  %v147 = vsel %vm131, 1.0, 0.0
  %v148 = vsel %vm132, 1.0, 0.0
  %v149 = vsel %vm133, 1.0, 0.0
  %v150 = vsel %vm134, 1.0, 0.0
  %v151 = vld [vmem:[%s2] sm:$0xff]
  %v152 = vld [vmem:[%s2 + $0x8] sm:$0xff]
  %v153 = vld [vmem:[%s2 + $0x10] sm:$0xff]
  %v154 = vld [vmem:[%s2 + $0x18] sm:$0xff]
  %v155 = vld [vmem:[%s2 + $0x20] sm:$0xff]
  %v156 = vld [vmem:[%s2 + $0x28] sm:$0xff]
  %v157 = vld [vmem:[%s2 + $0x30] sm:$0xff]
  %v158 = vld [vmem:[%s2 + $0x38] sm:$0xff]
  %v159 = vld [vmem:[%s2 + $0x40] sm:$0xff]
  %v160 = vld [vmem:[%s2 + $0x48] sm:$0xff]
  %v161 = vld [vmem:[%s2 + $0x50] sm:$0xff]
  %v162 = vld [vmem:[%s2 + $0x58] sm:$0xff]
  %v163 = vld [vmem:[%s2 + $0x60] sm:$0xff]
  %v164 = vld [vmem:[%s2 + $0x68] sm:$0xff]
  %v165 = vld [vmem:[%s2 + $0x70] sm:$0xff]
  %v166 = vld [vmem:[%s2 + $0x78] sm:$0xff]
  %167 = vset.pattern.permute.xlu0 0
  %168 = vperm.xlu0 %167, %v151
  %v169 = vpop.permute.xlu0 %168
  %170 = vset.pattern.permute.xlu0 0
  %171 = vperm.xlu0 %170, %v152
  %v172 = vpop.permute.xlu0 %171
  %173 = vset.pattern.permute.xlu0 0
  %174 = vperm.xlu0 %173, %v153
  %v175 = vpop.permute.xlu0 %174
  %176 = vset.pattern.permute.xlu0 0
  %177 = vperm.xlu0 %176, %v154
  %v178 = vpop.permute.xlu0 %177
  %179 = vset.pattern.permute.xlu0 0
  %180 = vperm.xlu0 %179, %v155
  %v181 = vpop.permute.xlu0 %180
  %182 = vset.pattern.permute.xlu0 0
  %183 = vperm.xlu0 %182, %v156
  %v184 = vpop.permute.xlu0 %183
  %185 = vset.pattern.permute.xlu0 0
  %186 = vperm.xlu0 %185, %v157
  %v187 = vpop.permute.xlu0 %186
  %188 = vset.pattern.permute.xlu0 0
  %189 = vperm.xlu0 %188, %v158
  %v190 = vpop.permute.xlu0 %189
  %191 = vset.pattern.permute.xlu0 0
  %192 = vperm.xlu0 %191, %v159
  %v193 = vpop.permute.xlu0 %192
  %194 = vset.pattern.permute.xlu0 0
  %195 = vperm.xlu0 %194, %v160
  %v196 = vpop.permute.xlu0 %195
  %197 = vset.pattern.permute.xlu0 0
  %198 = vperm.xlu0 %197, %v161
  %v199 = vpop.permute.xlu0 %198
  %200 = vset.pattern.permute.xlu0 0
  %201 = vperm.xlu0 %200, %v162
  %v202 = vpop.permute.xlu0 %201
  %203 = vset.pattern.permute.xlu0 0
  %204 = vperm.xlu0 %203, %v163
  %v205 = vpop.permute.xlu0 %204
  %206 = vset.pattern.permute.xlu0 0
  %207 = vperm.xlu0 %206, %v164
  %v208 = vpop.permute.xlu0 %207
  %209 = vset.pattern.permute.xlu0 0
  %210 = vperm.xlu0 %209, %v165
  %v211 = vpop.permute.xlu0 %210
  %212 = vset.pattern.permute.xlu0 0
  %213 = vperm.xlu0 %212, %v166
  %v214 = vpop.permute.xlu0 %213
  %vm215 = vcmp.eq.s32.totalorder %v169, %v54
  %vm216 = vcmp.eq.s32.totalorder %v172, %v54
  %vm217 = vcmp.eq.s32.totalorder %v175, %v54
  %vm218 = vcmp.eq.s32.totalorder %v178, %v54
  %vm219 = vcmp.eq.s32.totalorder %v181, %v54
  %vm220 = vcmp.eq.s32.totalorder %v184, %v54
  %vm221 = vcmp.eq.s32.totalorder %v187, %v54
  %vm222 = vcmp.eq.s32.totalorder %v190, %v54
  %vm223 = vcmp.eq.s32.totalorder %v193, %v54
  %vm224 = vcmp.eq.s32.totalorder %v196, %v54
  %vm225 = vcmp.eq.s32.totalorder %v199, %v54
  %vm226 = vcmp.eq.s32.totalorder %v202, %v54
  %vm227 = vcmp.eq.s32.totalorder %v205, %v54
  %vm228 = vcmp.eq.s32.totalorder %v208, %v54
  %vm229 = vcmp.eq.s32.totalorder %v211, %v54
  %vm230 = vcmp.eq.s32.totalorder %v214, %v54
  %v231 = vsel %vm215, 1.0, 0.0
  %v232 = vsel %vm216, 1.0, 0.0
  %v233 = vsel %vm217, 1.0, 0.0
  %v234 = vsel %vm218, 1.0, 0.0
  %v235 = vsel %vm219, 1.0, 0.0
  %v236 = vsel %vm220, 1.0, 0.0
  %v237 = vsel %vm221, 1.0, 0.0
  %v238 = vsel %vm222, 1.0, 0.0
  %v239 = vsel %vm223, 1.0, 0.0
  %v240 = vsel %vm224, 1.0, 0.0
  %v241 = vsel %vm225, 1.0, 0.0
  %v242 = vsel %vm226, 1.0, 0.0
  %v243 = vsel %vm227, 1.0, 0.0
  %v244 = vsel %vm228, 1.0, 0.0
  %v245 = vsel %vm229, 1.0, 0.0
  %v246 = vsel %vm230, 1.0, 0.0
  %v247 = vld [vmem:[%s0] sm:$0xff]
  %v248 = vld [vmem:[%s0 + $0x8] sm:$0xff]
  %v249 = vld [vmem:[%s0 + $0x10] sm:$0xff]
  %v250 = vld [vmem:[%s0 + $0x18] sm:$0xff]
  %v251 = vld [vmem:[%s0 + $0x20] sm:$0xff]
  %v252 = vld [vmem:[%s0 + $0x28] sm:$0xff]
  %v253 = vld [vmem:[%s0 + $0x30] sm:$0xff]
  %v254 = vld [vmem:[%s0 + $0x38] sm:$0xff]
  %v255 = vld [vmem:[%s0 + $0x40] sm:$0xff]
  %v256 = vld [vmem:[%s0 + $0x48] sm:$0xff]
  %v257 = vld [vmem:[%s0 + $0x50] sm:$0xff]
  %v258 = vld [vmem:[%s0 + $0x58] sm:$0xff]
  %v259 = vld [vmem:[%s0 + $0x60] sm:$0xff]
  %v260 = vld [vmem:[%s0 + $0x68] sm:$0xff]
  %v261 = vld [vmem:[%s0 + $0x70] sm:$0xff]
  %v262 = vld [vmem:[%s0 + $0x78] sm:$0xff]
  %263 = vmatprep.subr.mxu0 0.0
  %264 = vmatpush1.msra.mxu0 %v247
  %265 = vmatprep.subr.mxu0 0.0
  %266 = vmatpush1.msra.mxu0 %v248
  %267 = vmatprep.subr.mxu0 0.0
  %268 = vmatpush1.msra.mxu0 %v249
  %269 = vmatprep.subr.mxu0 0.0
  %270 = vmatpush1.msra.mxu0 %v250
  %271 = vmatprep.subr.mxu0 0.0
  %272 = vmatpush1.msra.mxu0 %v251
  %273 = vmatprep.subr.mxu0 0.0
  %274 = vmatpush1.msra.mxu0 %v252
  %275 = vmatprep.subr.mxu0 0.0
  %276 = vmatpush1.msra.mxu0 %v253
  %277 = vmatprep.subr.mxu0 0.0
  %278 = vmatpush1.msra.mxu0 %v254
  %279 = vmatprep.subr.mxu0 0.0
  %280 = vmatpush1.msra.mxu0 %v255
  %281 = vmatprep.subr.mxu0 0.0
  %282 = vmatpush1.msra.mxu0 %v256
  %283 = vmatprep.subr.mxu0 0.0
  %284 = vmatpush1.msra.mxu0 %v257
  %285 = vmatprep.subr.mxu0 0.0
  %286 = vmatpush1.msra.mxu0 %v258
  %287 = vmatprep.subr.mxu0 0.0
  %288 = vmatpush1.msra.mxu0 %v259
  %289 = vmatprep.subr.mxu0 0.0
  %290 = vmatpush1.msra.mxu0 %v260
  %291 = vmatprep.subr.mxu0 0.0
  %292 = vmatpush1.msra.mxu0 %v261
  %293 = vmatprep.subr.mxu0 0.0
  %294 = vmatpush1.msra.mxu0 %v262
  %295 = vmatprep.subr.mxu0 0.0
  %296 = vmatpush1.msra.mxu0 0.0
  %297 = vmatprep.subr.mxu0 0.0
  %298 = vmatpush1.msra.mxu0 0.0
  %299 = vmatprep.subr.mxu0 0.0
  %300 = vmatpush1.msra.mxu0 0.0
  %301 = vmatprep.subr.mxu0 0.0
  %302 = vmatpush1.msra.mxu0 0.0
  %303 = vmatprep.subr.mxu0 0.0
  %304 = vmatpush1.msra.mxu0 0.0
  %305 = vmatprep.subr.mxu0 0.0
  %306 = vmatpush1.msra.mxu0 0.0
  %307 = vmatprep.subr.mxu0 0.0
  %308 = vmatpush1.msra.mxu0 0.0
  %309 = vmatprep.subr.mxu0 0.0
  %310 = vmatpush1.msra.mxu0 0.0
  %311 = vmatprep.subr.mxu0 0.0
  %312 = vmatpush1.msra.mxu0 0.0
  %313 = vmatprep.subr.mxu0 0.0
  %314 = vmatpush1.msra.mxu0 0.0
  %315 = vmatprep.subr.mxu0 0.0
  %316 = vmatpush1.msra.mxu0 0.0
  %317 = vmatprep.subr.mxu0 0.0
  %318 = vmatpush1.msra.mxu0 0.0
  %319 = vmatprep.subr.mxu0 0.0
  %320 = vmatpush1.msra.mxu0 0.0
  %321 = vmatprep.subr.mxu0 0.0
  %322 = vmatpush1.msra.mxu0 0.0
  %323 = vmatprep.subr.mxu0 0.0
  %324 = vmatpush1.msra.mxu0 0.0
  %325 = vmatprep.subr.mxu0 0.0
  %326 = vmatpush1.msra.mxu0 0.0
  %327 = vmatprep.mubr.f32.mxu0 0.0
  %328 = vmatmul.mubr.f32.gmra.mrb[0].mxu0 %v135
  %v329 = vpop.f32.mrb[0].mxu0
  %v330 = vadd.f32 0.0, %v329
  %v331 = vpop.f32.mrb[0].mxu0
  %332 = vmatprep.mubr.f32.mxu0 0.0
  %333 = vmatmul.mubr.f32.gmra.mrb[0].mxu0 %v136
  %v334 = vpop.f32.mrb[0].mxu0
  %v335 = vadd.f32 0.0, %v334
  %v336 = vpop.f32.mrb[0].mxu0
  %337 = vmatprep.mubr.f32.mxu0 0.0
  %338 = vmatmul.mubr.f32.gmra.mrb[0].mxu0 %v137
  %v339 = vpop.f32.mrb[0].mxu0
  %v340 = vadd.f32 0.0, %v339
  %v341 = vpop.f32.mrb[0].mxu0
  %342 = vmatprep.mubr.f32.mxu0 0.0
  %343 = vmatmul.mubr.f32.gmra.mrb[0].mxu0 %v138
  %v344 = vpop.f32.mrb[0].mxu0
  %v345 = vadd.f32 0.0, %v344
  %v346 = vpop.f32.mrb[0].mxu0
  %347 = vmatprep.mubr.f32.mxu0 0.0
  %348 = vmatmul.mubr.f32.gmra.mrb[0].mxu0 %v139
  %v349 = vpop.f32.mrb[0].mxu0
  %v350 = vadd.f32 0.0, %v349
  %v351 = vpop.f32.mrb[0].mxu0
  %352 = vmatprep.mubr.f32.mxu0 0.0
  %353 = vmatmul.mubr.f32.gmra.mrb[0].mxu0 %v140
  %v354 = vpop.f32.mrb[0].mxu0
  %v355 = vadd.f32 0.0, %v354
  %v356 = vpop.f32.mrb[0].mxu0
  %357 = vmatprep.mubr.f32.mxu0 0.0
  %358 = vmatmul.mubr.f32.gmra.mrb[0].mxu0 %v141
  %v359 = vpop.f32.mrb[0].mxu0
  %v360 = vadd.f32 0.0, %v359
  %v361 = vpop.f32.mrb[0].mxu0
  %362 = vmatprep.mubr.f32.mxu0 0.0
  %363 = vmatmul.mubr.f32.gmra.mrb[0].mxu0 %v142
  %v364 = vpop.f32.mrb[0].mxu0
  %v365 = vadd.f32 0.0, %v364
  %v366 = vpop.f32.mrb[0].mxu0
  %367 = vmatprep.mubr.f32.mxu0 0.0
  %368 = vmatmul.mubr.f32.gmra.mrb[0].mxu0 %v143
  %v369 = vpop.f32.mrb[0].mxu0
  %v370 = vadd.f32 0.0, %v369
  %v371 = vpop.f32.mrb[0].mxu0
  %372 = vmatprep.mubr.f32.mxu0 0.0
  %373 = vmatmul.mubr.f32.gmra.mrb[0].mxu0 %v144
  %v374 = vpop.f32.mrb[0].mxu0
  %v375 = vadd.f32 0.0, %v374
  %v376 = vpop.f32.mrb[0].mxu0
  %377 = vmatprep.mubr.f32.mxu0 0.0
  %378 = vmatmul.mubr.f32.gmra.mrb[0].mxu0 %v145
  %v379 = vpop.f32.mrb[0].mxu0
  %v380 = vadd.f32 0.0, %v379
  %v381 = vpop.f32.mrb[0].mxu0
  %382 = vmatprep.mubr.f32.mxu0 0.0
  %383 = vmatmul.mubr.f32.gmra.mrb[0].mxu0 %v146
  %v384 = vpop.f32.mrb[0].mxu0
  %v385 = vadd.f32 0.0, %v384
  %v386 = vpop.f32.mrb[0].mxu0
  %387 = vmatprep.mubr.f32.mxu0 0.0
  %388 = vmatmul.mubr.f32.gmra.mrb[0].mxu0 %v147
  %v389 = vpop.f32.mrb[0].mxu0
  %v390 = vadd.f32 0.0, %v389
  %v391 = vpop.f32.mrb[0].mxu0
  %392 = vmatprep.mubr.f32.mxu0 0.0
  %393 = vmatmul.mubr.f32.gmra.mrb[0].mxu0 %v148
  %v394 = vpop.f32.mrb[0].mxu0
  %v395 = vadd.f32 0.0, %v394
  %v396 = vpop.f32.mrb[0].mxu0
  %397 = vmatprep.mubr.f32.mxu0 0.0
  %398 = vmatmul.mubr.f32.gmra.mrb[0].mxu0 %v149
  %v399 = vpop.f32.mrb[0].mxu0
  %v400 = vadd.f32 0.0, %v399
  %v401 = vpop.f32.mrb[0].mxu0
  %402 = vmatprep.mubr.f32.mxu0 0.0
  %403 = vmatmul.mubr.f32.gmra.mrb[0].mxu0 %v150
  %v404 = vpop.f32.mrb[0].mxu0
  %v405 = vadd.f32 0.0, %v404
  %v406 = vpop.f32.mrb[0].mxu0
  %407 = vdwg.mxu0
  %v408 = vld [vmem:[%s3] sm:$0xff]
  %v409 = vld [vmem:[%s3 + $0x8] sm:$0xff]
  %v410 = vld [vmem:[%s3 + $0x10] sm:$0xff]
  %v411 = vld [vmem:[%s3 + $0x18] sm:$0xff]
  %v412 = vld [vmem:[%s3 + $0x20] sm:$0xff]
  %v413 = vld [vmem:[%s3 + $0x28] sm:$0xff]
  %v414 = vld [vmem:[%s3 + $0x30] sm:$0xff]
  %v415 = vld [vmem:[%s3 + $0x38] sm:$0xff]
  %v416 = vld [vmem:[%s3 + $0x40] sm:$0xff]
  %v417 = vld [vmem:[%s3 + $0x48] sm:$0xff]
  %v418 = vld [vmem:[%s3 + $0x50] sm:$0xff]
  %v419 = vld [vmem:[%s3 + $0x58] sm:$0xff]
  %v420 = vld [vmem:[%s3 + $0x60] sm:$0xff]
  %v421 = vld [vmem:[%s3 + $0x68] sm:$0xff]
  %v422 = vld [vmem:[%s3 + $0x70] sm:$0xff]
  %v423 = vld [vmem:[%s3 + $0x78] sm:$0xff]
  %425 = vset.pattern.permute.xlu0 0
  %426 = vperm.xlu0 %425, %v408
  %v427 = vpop.permute.xlu0 %426
  %430 = vset.pattern.permute.xlu0 0
  %431 = vperm.xlu0 %430, %v409
  %v432 = vpop.permute.xlu0 %431
  %435 = vset.pattern.permute.xlu0 0
  %436 = vperm.xlu0 %435, %v410
  %v437 = vpop.permute.xlu0 %436
  %440 = vset.pattern.permute.xlu0 0
  %441 = vperm.xlu0 %440, %v411
  %v442 = vpop.permute.xlu0 %441
  %445 = vset.pattern.permute.xlu0 0
  %446 = vperm.xlu0 %445, %v412
  %v447 = vpop.permute.xlu0 %446
  %450 = vset.pattern.permute.xlu0 0
  %451 = vperm.xlu0 %450, %v413
  %v452 = vpop.permute.xlu0 %451
  %455 = vset.pattern.permute.xlu0 0
  %456 = vperm.xlu0 %455, %v414
  %v457 = vpop.permute.xlu0 %456
  %460 = vset.pattern.permute.xlu0 0
  %461 = vperm.xlu0 %460, %v415
  %v462 = vpop.permute.xlu0 %461
  %465 = vset.pattern.permute.xlu0 0
  %466 = vperm.xlu0 %465, %v416
  %v467 = vpop.permute.xlu0 %466
  %470 = vset.pattern.permute.xlu0 0
  %471 = vperm.xlu0 %470, %v417
  %v472 = vpop.permute.xlu0 %471
  %475 = vset.pattern.permute.xlu0 0
  %476 = vperm.xlu0 %475, %v418
  %v477 = vpop.permute.xlu0 %476
  %480 = vset.pattern.permute.xlu0 0
  %481 = vperm.xlu0 %480, %v419
  %v482 = vpop.permute.xlu0 %481
  %485 = vset.pattern.permute.xlu0 0
  %486 = vperm.xlu0 %485, %v420
  %v487 = vpop.permute.xlu0 %486
  %490 = vset.pattern.permute.xlu0 0
  %491 = vperm.xlu0 %490, %v421
  %v492 = vpop.permute.xlu0 %491
  %495 = vset.pattern.permute.xlu0 0
  %496 = vperm.xlu0 %495, %v422
  %v497 = vpop.permute.xlu0 %496
  %500 = vset.pattern.permute.xlu0 0
  %501 = vperm.xlu0 %500, %v423
  %v502 = vpop.permute.xlu0 %501
  %v504 = vmul.f32 %v427, %v330
  %v505 = vmul.f32 %v432, %v335
  %v506 = vmul.f32 %v437, %v340
  %v507 = vmul.f32 %v442, %v345
  %v508 = vmul.f32 %v447, %v350
  %v509 = vmul.f32 %v452, %v355
  %v510 = vmul.f32 %v457, %v360
  %v511 = vmul.f32 %v462, %v365
  %v512 = vmul.f32 %v467, %v370
  %v513 = vmul.f32 %v472, %v375
  %v514 = vmul.f32 %v477, %v380
  %v515 = vmul.f32 %v482, %v385
  %v516 = vmul.f32 %v487, %v390
  %v517 = vmul.f32 %v492, %v395
  %v518 = vmul.f32 %v497, %v400
  %v519 = vmul.f32 %v502, %v405
  %v520 = vld [vmem:[%s4] sm:$0xff]
  %v521 = vld [vmem:[%s4 + $0x8] sm:$0xff]
  %v522 = vld [vmem:[%s4 + $0x10] sm:$0xff]
  %v523 = vld [vmem:[%s4 + $0x18] sm:$0xff]
  %v524 = vld [vmem:[%s4 + $0x20] sm:$0xff]
  %v525 = vld [vmem:[%s4 + $0x28] sm:$0xff]
  %v526 = vld [vmem:[%s4 + $0x30] sm:$0xff]
  %v527 = vld [vmem:[%s4 + $0x38] sm:$0xff]
  %v528 = vld [vmem:[%s4 + $0x40] sm:$0xff]
  %v529 = vld [vmem:[%s4 + $0x48] sm:$0xff]
  %v530 = vld [vmem:[%s4 + $0x50] sm:$0xff]
  %v531 = vld [vmem:[%s4 + $0x58] sm:$0xff]
  %v532 = vld [vmem:[%s4 + $0x60] sm:$0xff]
  %v533 = vld [vmem:[%s4 + $0x68] sm:$0xff]
  %v534 = vld [vmem:[%s4 + $0x70] sm:$0xff]
  %v535 = vld [vmem:[%s4 + $0x78] sm:$0xff]
  %536 = vxpose.xlu0.b32.start [1/16] %v231, 128
  %537 = vxpose.xlu0.b32.cont [2/16] %v232, 128
  %538 = vxpose.xlu0.b32.cont [3/16] %v233, 128
  %539 = vxpose.xlu0.b32.cont [4/16] %v234, 128
  %540 = vxpose.xlu0.b32.cont [5/16] %v235, 128
  %541 = vxpose.xlu0.b32.cont [6/16] %v236, 128
  %542 = vxpose.xlu0.b32.cont [7/16] %v237, 128
  %543 = vxpose.xlu0.b32.cont [8/16] %v238, 128
  %544 = vxpose.xlu0.b32.cont [9/16] %v239, 128
  %545 = vxpose.xlu0.b32.cont [10/16] %v240, 128
  %546 = vxpose.xlu0.b32.cont [11/16] %v241, 128
  %547 = vxpose.xlu0.b32.cont [12/16] %v242, 128
  %548 = vxpose.xlu0.b32.cont [13/16] %v243, 128
  %549 = vxpose.xlu0.b32.cont [14/16] %v244, 128
  %550 = vxpose.xlu0.b32.cont [15/16] %v245, 128
  %551 = vxpose.xlu0.b32.end [16/16] %v246, 128
  %v552 = vpop.trf.xlu0
  %v553 = vpop.trf.xlu0
  %v554 = vpop.trf.xlu0
  %v555 = vpop.trf.xlu0
  %v556 = vpop.trf.xlu0
  %v557 = vpop.trf.xlu0
  %v558 = vpop.trf.xlu0
  %v559 = vpop.trf.xlu0
  %v560 = vpop.trf.xlu0
  %v561 = vpop.trf.xlu0
  %v562 = vpop.trf.xlu0
  %v563 = vpop.trf.xlu0
  %v564 = vpop.trf.xlu0
  %v565 = vpop.trf.xlu0
  %v566 = vpop.trf.xlu0
  %v567 = vpop.trf.xlu0
  %568 = vmatprep.subr.mxu0 0.0
  %569 = vmatpush1.msra.mxu0 %v504
  %570 = vmatprep.subr.mxu0 0.0
  %571 = vmatpush1.msra.mxu0 %v505
  %572 = vmatprep.subr.mxu0 0.0
  %573 = vmatpush1.msra.mxu0 %v506
  %574 = vmatprep.subr.mxu0 0.0
  %575 = vmatpush1.msra.mxu0 %v507
  %576 = vmatprep.subr.mxu0 0.0
  %577 = vmatpush1.msra.mxu0 %v508
  %578 = vmatprep.subr.mxu0 0.0
  %579 = vmatpush1.msra.mxu0 %v509
  %580 = vmatprep.subr.mxu0 0.0
  %581 = vmatpush1.msra.mxu0 %v510
  %582 = vmatprep.subr.mxu0 0.0
  %583 = vmatpush1.msra.mxu0 %v511
  %584 = vmatprep.subr.mxu0 0.0
  %585 = vmatpush1.msra.mxu0 %v512
  %586 = vmatprep.subr.mxu0 0.0
  %587 = vmatpush1.msra.mxu0 %v513
  %588 = vmatprep.subr.mxu0 0.0
  %589 = vmatpush1.msra.mxu0 %v514
  %590 = vmatprep.subr.mxu0 0.0
  %591 = vmatpush1.msra.mxu0 %v515
  %592 = vmatprep.subr.mxu0 0.0
  %593 = vmatpush1.msra.mxu0 %v516
  %594 = vmatprep.subr.mxu0 0.0
  %595 = vmatpush1.msra.mxu0 %v517
  %596 = vmatprep.subr.mxu0 0.0
  %597 = vmatpush1.msra.mxu0 %v518
  %598 = vmatprep.subr.mxu0 0.0
  %599 = vmatpush1.msra.mxu0 %v519
  %600 = vmatprep.subr.mxu0 0.0
  %601 = vmatpush1.msra.mxu0 0.0
  %602 = vmatprep.subr.mxu0 0.0
  %603 = vmatpush1.msra.mxu0 0.0
  %604 = vmatprep.subr.mxu0 0.0
  %605 = vmatpush1.msra.mxu0 0.0
  %606 = vmatprep.subr.mxu0 0.0
  %607 = vmatpush1.msra.mxu0 0.0
  %608 = vmatprep.subr.mxu0 0.0
  %609 = vmatpush1.msra.mxu0 0.0
  %610 = vmatprep.subr.mxu0 0.0
  %611 = vmatpush1.msra.mxu0 0.0
  %612 = vmatprep.subr.mxu0 0.0
  %613 = vmatpush1.msra.mxu0 0.0
  %614 = vmatprep.subr.mxu0 0.0
  %615 = vmatpush1.msra.mxu0 0.0
  %616 = vmatprep.subr.mxu0 0.0
  %617 = vmatpush1.msra.mxu0 0.0
  %618 = vmatprep.subr.mxu0 0.0
  %619 = vmatpush1.msra.mxu0 0.0
  %620 = vmatprep.subr.mxu0 0.0
  %621 = vmatpush1.msra.mxu0 0.0
  %622 = vmatprep.subr.mxu0 0.0
  %623 = vmatpush1.msra.mxu0 0.0
  %624 = vmatprep.subr.mxu0 0.0
  %625 = vmatpush1.msra.mxu0 0.0
  %626 = vmatprep.subr.mxu0 0.0
  %627 = vmatpush1.msra.mxu0 0.0
  %628 = vmatprep.subr.mxu0 0.0
  %629 = vmatpush1.msra.mxu0 0.0
  %630 = vmatprep.subr.mxu0 0.0
  %631 = vmatpush1.msra.mxu0 0.0
  %632 = vmatprep.mubr.f32.mxu0 0.0
  %633 = vmatmul.mubr.f32.gmra.mrb[0].mxu0 %v552
  %v634 = vpop.f32.mrb[0].mxu0
  %v635 = vadd.f32 0.0, %v634
  %v636 = vpop.f32.mrb[0].mxu0
  %637 = vmatprep.mubr.f32.mxu0 0.0
  %638 = vmatmul.mubr.f32.gmra.mrb[0].mxu0 %v553
  %v639 = vpop.f32.mrb[0].mxu0
  %v640 = vadd.f32 0.0, %v639
  %v641 = vpop.f32.mrb[0].mxu0
  %642 = vmatprep.mubr.f32.mxu0 0.0
  %643 = vmatmul.mubr.f32.gmra.mrb[0].mxu0 %v554
  %v644 = vpop.f32.mrb[0].mxu0
  %v645 = vadd.f32 0.0, %v644
  %v646 = vpop.f32.mrb[0].mxu0
  %647 = vmatprep.mubr.f32.mxu0 0.0
  %648 = vmatmul.mubr.f32.gmra.mrb[0].mxu0 %v555
  %v649 = vpop.f32.mrb[0].mxu0
  %v650 = vadd.f32 0.0, %v649
  %v651 = vpop.f32.mrb[0].mxu0
  %652 = vmatprep.mubr.f32.mxu0 0.0
  %653 = vmatmul.mubr.f32.gmra.mrb[0].mxu0 %v556
  %v654 = vpop.f32.mrb[0].mxu0
  %v655 = vadd.f32 0.0, %v654
  %v656 = vpop.f32.mrb[0].mxu0
  %657 = vmatprep.mubr.f32.mxu0 0.0
  %658 = vmatmul.mubr.f32.gmra.mrb[0].mxu0 %v557
  %v659 = vpop.f32.mrb[0].mxu0
  %v660 = vadd.f32 0.0, %v659
  %v661 = vpop.f32.mrb[0].mxu0
  %662 = vmatprep.mubr.f32.mxu0 0.0
  %663 = vmatmul.mubr.f32.gmra.mrb[0].mxu0 %v558
  %v664 = vpop.f32.mrb[0].mxu0
  %v665 = vadd.f32 0.0, %v664
  %v666 = vpop.f32.mrb[0].mxu0
  %667 = vmatprep.mubr.f32.mxu0 0.0
  %668 = vmatmul.mubr.f32.gmra.mrb[0].mxu0 %v559
  %v669 = vpop.f32.mrb[0].mxu0
  %v670 = vadd.f32 0.0, %v669
  %v671 = vpop.f32.mrb[0].mxu0
  %672 = vmatprep.mubr.f32.mxu0 0.0
  %673 = vmatmul.mubr.f32.gmra.mrb[0].mxu0 %v560
  %v674 = vpop.f32.mrb[0].mxu0
  %v675 = vadd.f32 0.0, %v674
  %v676 = vpop.f32.mrb[0].mxu0
  %677 = vmatprep.mubr.f32.mxu0 0.0
  %678 = vmatmul.mubr.f32.gmra.mrb[0].mxu0 %v561
  %v679 = vpop.f32.mrb[0].mxu0
  %v680 = vadd.f32 0.0, %v679
  %v681 = vpop.f32.mrb[0].mxu0
  %682 = vmatprep.mubr.f32.mxu0 0.0
  %683 = vmatmul.mubr.f32.gmra.mrb[0].mxu0 %v562
  %v684 = vpop.f32.mrb[0].mxu0
  %v685 = vadd.f32 0.0, %v684
  %v686 = vpop.f32.mrb[0].mxu0
  %687 = vmatprep.mubr.f32.mxu0 0.0
  %688 = vmatmul.mubr.f32.gmra.mrb[0].mxu0 %v563
  %v689 = vpop.f32.mrb[0].mxu0
  %v690 = vadd.f32 0.0, %v689
  %v691 = vpop.f32.mrb[0].mxu0
  %692 = vmatprep.mubr.f32.mxu0 0.0
  %693 = vmatmul.mubr.f32.gmra.mrb[0].mxu0 %v564
  %v694 = vpop.f32.mrb[0].mxu0
  %v695 = vadd.f32 0.0, %v694
  %v696 = vpop.f32.mrb[0].mxu0
  %697 = vmatprep.mubr.f32.mxu0 0.0
  %698 = vmatmul.mubr.f32.gmra.mrb[0].mxu0 %v565
  %v699 = vpop.f32.mrb[0].mxu0
  %v700 = vadd.f32 0.0, %v699
  %v701 = vpop.f32.mrb[0].mxu0
  %702 = vmatprep.mubr.f32.mxu0 0.0
  %703 = vmatmul.mubr.f32.gmra.mrb[0].mxu0 %v566
  %v704 = vpop.f32.mrb[0].mxu0
  %v705 = vadd.f32 0.0, %v704
  %v706 = vpop.f32.mrb[0].mxu0
  %707 = vmatprep.mubr.f32.mxu0 0.0
  %708 = vmatmul.mubr.f32.gmra.mrb[0].mxu0 %v567
  %v709 = vpop.f32.mrb[0].mxu0
  %v710 = vadd.f32 0.0, %v709
  %v711 = vpop.f32.mrb[0].mxu0
  %712 = vdwg.mxu0
  %v713 = vadd.f32 %v520, %v635
  %v714 = vadd.f32 %v521, %v640
  %v715 = vadd.f32 %v522, %v645
  %v716 = vadd.f32 %v523, %v650
  %v717 = vadd.f32 %v524, %v655
  %v718 = vadd.f32 %v525, %v660
  %v719 = vadd.f32 %v526, %v665
  %v720 = vadd.f32 %v527, %v670
  %v721 = vadd.f32 %v528, %v675
  %v722 = vadd.f32 %v529, %v680
  %v723 = vadd.f32 %v530, %v685
  %v724 = vadd.f32 %v531, %v690
  %v725 = vadd.f32 %v532, %v695
  %v726 = vadd.f32 %v533, %v700
  %v727 = vadd.f32 %v534, %v705
  %v728 = vadd.f32 %v535, %v710
  %729 = vst [vmem:[%s4] sm:$0xff] %v713
  %730 = vst [vmem:[%s4 + $0x8] sm:$0xff] %v714
  %731 = vst [vmem:[%s4 + $0x10] sm:$0xff] %v715
  %732 = vst [vmem:[%s4 + $0x18] sm:$0xff] %v716
  %733 = vst [vmem:[%s4 + $0x20] sm:$0xff] %v717
  %734 = vst [vmem:[%s4 + $0x28] sm:$0xff] %v718
  %735 = vst [vmem:[%s4 + $0x30] sm:$0xff] %v719
  %736 = vst [vmem:[%s4 + $0x38] sm:$0xff] %v720
  %737 = vst [vmem:[%s4 + $0x40] sm:$0xff] %v721
  %738 = vst [vmem:[%s4 + $0x48] sm:$0xff] %v722
  %739 = vst [vmem:[%s4 + $0x50] sm:$0xff] %v723
  %740 = vst [vmem:[%s4 + $0x58] sm:$0xff] %v724
  %741 = vst [vmem:[%s4 + $0x60] sm:$0xff] %v725
  %742 = vst [vmem:[%s4 + $0x68] sm:$0xff] %v726
  %743 = vst [vmem:[%s4 + $0x70] sm:$0xff] %v727
  %744 = vst [vmem:[%s4 + $0x78] sm:$0xff] %v728
  // Predicated region
  $region22: #{edge_weight_forward.5} parent=0 // pred_check
    _
  $region23: #{edge_weight_forward.5} parent=0 // pred_check_branch
    %746 = sbr.rel (0) target = $region25
  $region24: #{edge_weight_forward.5} parent=0 // pred_region
    _
  $region25: #{edge_weight_forward.5} parent=0 // pred_fallthru
    _
  // Predicated region
  $region26: #{edge_weight_forward.5} parent=0 // pred_check
    _
  $region27: #{edge_weight_forward.5} parent=0 // pred_check_branch
    %748 = sbr.rel (0) target = $region29
  $region28: #{edge_weight_forward.5} parent=0 // pred_region
    _
  $region29: #{edge_weight_forward.5} parent=0 // pred_fallthru
    _

// kernel: edge_weight_forward.7
$region0: #{edge_weight_forward.7}
  #allocation0 [shape = 'u32[]', space=smem, size = 0x4, offset = 0x4, fixed_abs, tag = 'smem constant byte address 0x4 - core index']
  #allocation1 [shape = 'u32[144,128]{1,0:T(1,128)}', space=vmem, size = 0x12000, scoped, tag = 'internal scratch']
  %s0 = inlined_call_operand.vmem [shape: f32[128,128], index: 0, kind: input, shape index: {}]
  %s1 = inlined_call_operand.vmem [shape: s32[128,1], index: 1, kind: input, shape index: {}]
  %s2 = inlined_call_operand.vmem [shape: s32[128,1], index: 2, kind: input, shape index: {}]
  %s3 = inlined_call_operand.vmem [shape: f32[128,128], index: 3, kind: input, shape index: {}]
  %s4 = inlined_call_operand.vmem [shape: f32[128,128], index: 4, kind: output, shape index: {}]
  %s5 = sld [smem:[#allocation0]]
  $region30: #{edge_weight_forward.7} parent=0
    _
  %s7 = ssub.s32 1, %s5
  %s8 = scalar_select 0, %s7, %s5
  // Predicated region
  $region2: #{edge_weight_forward.7} parent=0 // pred_check
    _
  $region3: #{edge_weight_forward.7} parent=0 // pred_check_branch
    %10 = sbr.rel (0) target = $region5
  $region4: #{edge_weight_forward.7} parent=0 // pred_region
    _
  $region5: #{edge_weight_forward.7} parent=0 // pred_fallthru
    _
  // Predicated region
  $region6: #{edge_weight_forward.7} parent=0 // pred_check
    _
  $region7: #{edge_weight_forward.7} parent=0 // pred_check_branch
    %12 = sbr.rel (0) target = $region9
  $region8: #{edge_weight_forward.7} parent=0 // pred_region
    _
  $region9: #{edge_weight_forward.7} parent=0 // pred_fallthru
    _
  // Predicated region
  $region10: #{edge_weight_forward.7} parent=0 // pred_check
    _
  $region11: #{edge_weight_forward.7} parent=0 // pred_check_branch
    %14 = sbr.rel (0) target = $region13
  $region12: #{edge_weight_forward.7} parent=0 // pred_region
    _
  $region13: #{edge_weight_forward.7} parent=0 // pred_fallthru
    _
  // Predicated region
  $region14: #{edge_weight_forward.7} parent=0 // pred_check
    _
  $region15: #{edge_weight_forward.7} parent=0 // pred_check_branch
    %16 = sbr.rel (0) target = $region17
  $region16: #{edge_weight_forward.7} parent=0 // pred_region
    _
  $region17: #{edge_weight_forward.7} parent=0 // pred_fallthru
    _
  %p17 = scmp.eq.s32.totalorder 0, 0
  // Predicated region
  $region18: #{edge_weight_forward.7} parent=0 // pred_check
    %p18 = pneg %p17
  $region19: #{edge_weight_forward.7} parent=0 // pred_check_branch
    %20 = sbr.rel (%p18) target = $region21
  $region20: #{edge_weight_forward.7} parent=0 // pred_region
    %v21 = vld [vmem:[%s0] sm:$0xff]
    %v22 = vld [vmem:[%s0 + $0x8] sm:$0xff]
    %v23 = vld [vmem:[%s0 + $0x10] sm:$0xff]
    %v24 = vld [vmem:[%s0 + $0x18] sm:$0xff]
    %v25 = vld [vmem:[%s0 + $0x20] sm:$0xff]
    %v26 = vld [vmem:[%s0 + $0x28] sm:$0xff]
    %v27 = vld [vmem:[%s0 + $0x30] sm:$0xff]
    %v28 = vld [vmem:[%s0 + $0x38] sm:$0xff]
    %v29 = vld [vmem:[%s0 + $0x40] sm:$0xff]
    %v30 = vld [vmem:[%s0 + $0x48] sm:$0xff]
    %v31 = vld [vmem:[%s0 + $0x50] sm:$0xff]
    %v32 = vld [vmem:[%s0 + $0x58] sm:$0xff]
    %v33 = vld [vmem:[%s0 + $0x60] sm:$0xff]
    %v34 = vld [vmem:[%s0 + $0x68] sm:$0xff]
    %v35 = vld [vmem:[%s0 + $0x70] sm:$0xff]
    %v36 = vld [vmem:[%s0 + $0x78] sm:$0xff]
    %37 = vst [vmem:[%s4] sm:$0xff] %v21
    %38 = vst [vmem:[%s4 + $0x8] sm:$0xff] %v22
    %39 = vst [vmem:[%s4 + $0x10] sm:$0xff] %v23
    %40 = vst [vmem:[%s4 + $0x18] sm:$0xff] %v24
    %41 = vst [vmem:[%s4 + $0x20] sm:$0xff] %v25
    %42 = vst [vmem:[%s4 + $0x28] sm:$0xff] %v26
    %43 = vst [vmem:[%s4 + $0x30] sm:$0xff] %v27
    %44 = vst [vmem:[%s4 + $0x38] sm:$0xff] %v28
    %45 = vst [vmem:[%s4 + $0x40] sm:$0xff] %v29
    %46 = vst [vmem:[%s4 + $0x48] sm:$0xff] %v30
    %47 = vst [vmem:[%s4 + $0x50] sm:$0xff] %v31
    %48 = vst [vmem:[%s4 + $0x58] sm:$0xff] %v32
    %49 = vst [vmem:[%s4 + $0x60] sm:$0xff] %v33
    %50 = vst [vmem:[%s4 + $0x68] sm:$0xff] %v34
    %51 = vst [vmem:[%s4 + $0x70] sm:$0xff] %v35
    %52 = vst [vmem:[%s4 + $0x78] sm:$0xff] %v36
  $region21: #{edge_weight_forward.7} parent=0 // pred_fallthru
    _
  %v53 = vlaneseq
  %v54 = vand.u32 %v53, 127
  %v55 = vld [vmem:[%s1] sm:$0xff]
  %v56 = vld [vmem:[%s1 + $0x8] sm:$0xff]
  %v57 = vld [vmem:[%s1 + $0x10] sm:$0xff]
  %v58 = vld [vmem:[%s1 + $0x18] sm:$0xff]
  %v59 = vld [vmem:[%s1 + $0x20] sm:$0xff]
  %v60 = vld [vmem:[%s1 + $0x28] sm:$0xff]
  %v61 = vld [vmem:[%s1 + $0x30] sm:$0xff]
  %v62 = vld [vmem:[%s1 + $0x38] sm:$0xff]
  %v63 = vld [vmem:[%s1 + $0x40] sm:$0xff]
  %v64 = vld [vmem:[%s1 + $0x48] sm:$0xff]
  %v65 = vld [vmem:[%s1 + $0x50] sm:$0xff]
  %v66 = vld [vmem:[%s1 + $0x58] sm:$0xff]
  %v67 = vld [vmem:[%s1 + $0x60] sm:$0xff]
  %v68 = vld [vmem:[%s1 + $0x68] sm:$0xff]
  %v69 = vld [vmem:[%s1 + $0x70] sm:$0xff]
  %v70 = vld [vmem:[%s1 + $0x78] sm:$0xff]
  %71 = vset.pattern.permute.xlu0 0
  %72 = vperm.xlu0 %71, %v55
  %v73 = vpop.permute.xlu0 %72
  %74 = vset.pattern.permute.xlu0 0
  %75 = vperm.xlu0 %74, %v56
  %v76 = vpop.permute.xlu0 %75
  %77 = vset.pattern.permute.xlu0 0
  %78 = vperm.xlu0 %77, %v57
  %v79 = vpop.permute.xlu0 %78
  %80 = vset.pattern.permute.xlu0 0
  %81 = vperm.xlu0 %80, %v58
  %v82 = vpop.permute.xlu0 %81
  %83 = vset.pattern.permute.xlu0 0
  %84 = vperm.xlu0 %83, %v59
  %v85 = vpop.permute.xlu0 %84
  %86 = vset.pattern.permute.xlu0 0
  %87 = vperm.xlu0 %86, %v60
  %v88 = vpop.permute.xlu0 %87
  %89 = vset.pattern.permute.xlu0 0
  %90 = vperm.xlu0 %89, %v61
  %v91 = vpop.permute.xlu0 %90
  %92 = vset.pattern.permute.xlu0 0
  %93 = vperm.xlu0 %92, %v62
  %v94 = vpop.permute.xlu0 %93
  %95 = vset.pattern.permute.xlu0 0
  %96 = vperm.xlu0 %95, %v63
  %v97 = vpop.permute.xlu0 %96
  %98 = vset.pattern.permute.xlu0 0
  %99 = vperm.xlu0 %98, %v64
  %v100 = vpop.permute.xlu0 %99
  %101 = vset.pattern.permute.xlu0 0
  %102 = vperm.xlu0 %101, %v65
  %v103 = vpop.permute.xlu0 %102
  %104 = vset.pattern.permute.xlu0 0
  %105 = vperm.xlu0 %104, %v66
  %v106 = vpop.permute.xlu0 %105
  %107 = vset.pattern.permute.xlu0 0
  %108 = vperm.xlu0 %107, %v67
  %v109 = vpop.permute.xlu0 %108
  %110 = vset.pattern.permute.xlu0 0
  %111 = vperm.xlu0 %110, %v68
  %v112 = vpop.permute.xlu0 %111
  %113 = vset.pattern.permute.xlu0 0
  %114 = vperm.xlu0 %113, %v69
  %v115 = vpop.permute.xlu0 %114
  %116 = vset.pattern.permute.xlu0 0
  %117 = vperm.xlu0 %116, %v70
  %v118 = vpop.permute.xlu0 %117
  %vm119 = vcmp.eq.s32.totalorder %v73, %v54
  %vm120 = vcmp.eq.s32.totalorder %v76, %v54
  %vm121 = vcmp.eq.s32.totalorder %v79, %v54
  %vm122 = vcmp.eq.s32.totalorder %v82, %v54
  %vm123 = vcmp.eq.s32.totalorder %v85, %v54
  %vm124 = vcmp.eq.s32.totalorder %v88, %v54
  %vm125 = vcmp.eq.s32.totalorder %v91, %v54
  %vm126 = vcmp.eq.s32.totalorder %v94, %v54
  %vm127 = vcmp.eq.s32.totalorder %v97, %v54
  %vm128 = vcmp.eq.s32.totalorder %v100, %v54
  %vm129 = vcmp.eq.s32.totalorder %v103, %v54
  %vm130 = vcmp.eq.s32.totalorder %v106, %v54
  %vm131 = vcmp.eq.s32.totalorder %v109, %v54
  %vm132 = vcmp.eq.s32.totalorder %v112, %v54
  %vm133 = vcmp.eq.s32.totalorder %v115, %v54
  %vm134 = vcmp.eq.s32.totalorder %v118, %v54
  %v135 = vsel %vm119, 1.0, 0.0
  %v136 = vsel %vm120, 1.0, 0.0
  %v137 = vsel %vm121, 1.0, 0.0
  %v138 = vsel %vm122, 1.0, 0.0
  %v139 = vsel %vm123, 1.0, 0.0
  %v140 = vsel %vm124, 1.0, 0.0
  %v141 = vsel %vm125, 1.0, 0.0
  %v142 = vsel %vm126, 1.0, 0.0
  %v143 = vsel %vm127, 1.0, 0.0
  %v144 = vsel %vm128, 1.0, 0.0
  %v145 = vsel %vm129, 1.0, 0.0
  %v146 = vsel %vm130, 1.0, 0.0
  %v147 = vsel %vm131, 1.0, 0.0
  %v148 = vsel %vm132, 1.0, 0.0
  %v149 = vsel %vm133, 1.0, 0.0
  %v150 = vsel %vm134, 1.0, 0.0
  %v151 = vld [vmem:[%s2] sm:$0xff]
  %v152 = vld [vmem:[%s2 + $0x8] sm:$0xff]
  %v153 = vld [vmem:[%s2 + $0x10] sm:$0xff]
  %v154 = vld [vmem:[%s2 + $0x18] sm:$0xff]
  %v155 = vld [vmem:[%s2 + $0x20] sm:$0xff]
  %v156 = vld [vmem:[%s2 + $0x28] sm:$0xff]
  %v157 = vld [vmem:[%s2 + $0x30] sm:$0xff]
  %v158 = vld [vmem:[%s2 + $0x38] sm:$0xff]
  %v159 = vld [vmem:[%s2 + $0x40] sm:$0xff]
  %v160 = vld [vmem:[%s2 + $0x48] sm:$0xff]
  %v161 = vld [vmem:[%s2 + $0x50] sm:$0xff]
  %v162 = vld [vmem:[%s2 + $0x58] sm:$0xff]
  %v163 = vld [vmem:[%s2 + $0x60] sm:$0xff]
  %v164 = vld [vmem:[%s2 + $0x68] sm:$0xff]
  %v165 = vld [vmem:[%s2 + $0x70] sm:$0xff]
  %v166 = vld [vmem:[%s2 + $0x78] sm:$0xff]
  %167 = vset.pattern.permute.xlu0 0
  %168 = vperm.xlu0 %167, %v151
  %v169 = vpop.permute.xlu0 %168
  %170 = vset.pattern.permute.xlu0 0
  %171 = vperm.xlu0 %170, %v152
  %v172 = vpop.permute.xlu0 %171
  %173 = vset.pattern.permute.xlu0 0
  %174 = vperm.xlu0 %173, %v153
  %v175 = vpop.permute.xlu0 %174
  %176 = vset.pattern.permute.xlu0 0
  %177 = vperm.xlu0 %176, %v154
  %v178 = vpop.permute.xlu0 %177
  %179 = vset.pattern.permute.xlu0 0
  %180 = vperm.xlu0 %179, %v155
  %v181 = vpop.permute.xlu0 %180
  %182 = vset.pattern.permute.xlu0 0
  %183 = vperm.xlu0 %182, %v156
  %v184 = vpop.permute.xlu0 %183
  %185 = vset.pattern.permute.xlu0 0
  %186 = vperm.xlu0 %185, %v157
  %v187 = vpop.permute.xlu0 %186
  %188 = vset.pattern.permute.xlu0 0
  %189 = vperm.xlu0 %188, %v158
  %v190 = vpop.permute.xlu0 %189
  %191 = vset.pattern.permute.xlu0 0
  %192 = vperm.xlu0 %191, %v159
  %v193 = vpop.permute.xlu0 %192
  %194 = vset.pattern.permute.xlu0 0
  %195 = vperm.xlu0 %194, %v160
  %v196 = vpop.permute.xlu0 %195
  %197 = vset.pattern.permute.xlu0 0
  %198 = vperm.xlu0 %197, %v161
  %v199 = vpop.permute.xlu0 %198
  %200 = vset.pattern.permute.xlu0 0
  %201 = vperm.xlu0 %200, %v162
  %v202 = vpop.permute.xlu0 %201
  %203 = vset.pattern.permute.xlu0 0
  %204 = vperm.xlu0 %203, %v163
  %v205 = vpop.permute.xlu0 %204
  %206 = vset.pattern.permute.xlu0 0
  %207 = vperm.xlu0 %206, %v164
  %v208 = vpop.permute.xlu0 %207
  %209 = vset.pattern.permute.xlu0 0
  %210 = vperm.xlu0 %209, %v165
  %v211 = vpop.permute.xlu0 %210
  %212 = vset.pattern.permute.xlu0 0
  %213 = vperm.xlu0 %212, %v166
  %v214 = vpop.permute.xlu0 %213
  %vm215 = vcmp.eq.s32.totalorder %v169, %v54
  %vm216 = vcmp.eq.s32.totalorder %v172, %v54
  %vm217 = vcmp.eq.s32.totalorder %v175, %v54
  %vm218 = vcmp.eq.s32.totalorder %v178, %v54
  %vm219 = vcmp.eq.s32.totalorder %v181, %v54
  %vm220 = vcmp.eq.s32.totalorder %v184, %v54
  %vm221 = vcmp.eq.s32.totalorder %v187, %v54
  %vm222 = vcmp.eq.s32.totalorder %v190, %v54
  %vm223 = vcmp.eq.s32.totalorder %v193, %v54
  %vm224 = vcmp.eq.s32.totalorder %v196, %v54
  %vm225 = vcmp.eq.s32.totalorder %v199, %v54
  %vm226 = vcmp.eq.s32.totalorder %v202, %v54
  %vm227 = vcmp.eq.s32.totalorder %v205, %v54
  %vm228 = vcmp.eq.s32.totalorder %v208, %v54
  %vm229 = vcmp.eq.s32.totalorder %v211, %v54
  %vm230 = vcmp.eq.s32.totalorder %v214, %v54
  %v231 = vsel %vm215, 1.0, 0.0
  %v232 = vsel %vm216, 1.0, 0.0
  %v233 = vsel %vm217, 1.0, 0.0
  %v234 = vsel %vm218, 1.0, 0.0
  %v235 = vsel %vm219, 1.0, 0.0
  %v236 = vsel %vm220, 1.0, 0.0
  %v237 = vsel %vm221, 1.0, 0.0
  %v238 = vsel %vm222, 1.0, 0.0
  %v239 = vsel %vm223, 1.0, 0.0
  %v240 = vsel %vm224, 1.0, 0.0
  %v241 = vsel %vm225, 1.0, 0.0
  %v242 = vsel %vm226, 1.0, 0.0
  %v243 = vsel %vm227, 1.0, 0.0
  %v244 = vsel %vm228, 1.0, 0.0
  %v245 = vsel %vm229, 1.0, 0.0
  %v246 = vsel %vm230, 1.0, 0.0
  %v247 = vld [vmem:[%s0] sm:$0xff]
  %v248 = vld [vmem:[%s0 + $0x8] sm:$0xff]
  %v249 = vld [vmem:[%s0 + $0x10] sm:$0xff]
  %v250 = vld [vmem:[%s0 + $0x18] sm:$0xff]
  %v251 = vld [vmem:[%s0 + $0x20] sm:$0xff]
  %v252 = vld [vmem:[%s0 + $0x28] sm:$0xff]
  %v253 = vld [vmem:[%s0 + $0x30] sm:$0xff]
  %v254 = vld [vmem:[%s0 + $0x38] sm:$0xff]
  %v255 = vld [vmem:[%s0 + $0x40] sm:$0xff]
  %v256 = vld [vmem:[%s0 + $0x48] sm:$0xff]
  %v257 = vld [vmem:[%s0 + $0x50] sm:$0xff]
  %v258 = vld [vmem:[%s0 + $0x58] sm:$0xff]
  %v259 = vld [vmem:[%s0 + $0x60] sm:$0xff]
  %v260 = vld [vmem:[%s0 + $0x68] sm:$0xff]
  %v261 = vld [vmem:[%s0 + $0x70] sm:$0xff]
  %v262 = vld [vmem:[%s0 + $0x78] sm:$0xff]
  %263 = vmatprep.subr.mxu0 0.0
  %264 = vmatpush1.msra.mxu0 %v247
  %265 = vmatprep.subr.mxu0 0.0
  %266 = vmatpush1.msra.mxu0 %v248
  %267 = vmatprep.subr.mxu0 0.0
  %268 = vmatpush1.msra.mxu0 %v249
  %269 = vmatprep.subr.mxu0 0.0
  %270 = vmatpush1.msra.mxu0 %v250
  %271 = vmatprep.subr.mxu0 0.0
  %272 = vmatpush1.msra.mxu0 %v251
  %273 = vmatprep.subr.mxu0 0.0
  %274 = vmatpush1.msra.mxu0 %v252
  %275 = vmatprep.subr.mxu0 0.0
  %276 = vmatpush1.msra.mxu0 %v253
  %277 = vmatprep.subr.mxu0 0.0
  %278 = vmatpush1.msra.mxu0 %v254
  %279 = vmatprep.subr.mxu0 0.0
  %280 = vmatpush1.msra.mxu0 %v255
  %281 = vmatprep.subr.mxu0 0.0
  %282 = vmatpush1.msra.mxu0 %v256
  %283 = vmatprep.subr.mxu0 0.0
  %284 = vmatpush1.msra.mxu0 %v257
  %285 = vmatprep.subr.mxu0 0.0
  %286 = vmatpush1.msra.mxu0 %v258
  %287 = vmatprep.subr.mxu0 0.0
  %288 = vmatpush1.msra.mxu0 %v259
  %289 = vmatprep.subr.mxu0 0.0
  %290 = vmatpush1.msra.mxu0 %v260
  %291 = vmatprep.subr.mxu0 0.0
  %292 = vmatpush1.msra.mxu0 %v261
  %293 = vmatprep.subr.mxu0 0.0
  %294 = vmatpush1.msra.mxu0 %v262
  %295 = vmatprep.subr.mxu0 0.0
  %296 = vmatpush1.msra.mxu0 0.0
  %297 = vmatprep.subr.mxu0 0.0
  %298 = vmatpush1.msra.mxu0 0.0
  %299 = vmatprep.subr.mxu0 0.0
  %300 = vmatpush1.msra.mxu0 0.0
  %301 = vmatprep.subr.mxu0 0.0
  %302 = vmatpush1.msra.mxu0 0.0
  %303 = vmatprep.subr.mxu0 0.0
  %304 = vmatpush1.msra.mxu0 0.0
  %305 = vmatprep.subr.mxu0 0.0
  %306 = vmatpush1.msra.mxu0 0.0
  %307 = vmatprep.subr.mxu0 0.0
  %308 = vmatpush1.msra.mxu0 0.0
  %309 = vmatprep.subr.mxu0 0.0
  %310 = vmatpush1.msra.mxu0 0.0
  %311 = vmatprep.subr.mxu0 0.0
  %312 = vmatpush1.msra.mxu0 0.0
  %313 = vmatprep.subr.mxu0 0.0
  %314 = vmatpush1.msra.mxu0 0.0
  %315 = vmatprep.subr.mxu0 0.0
  %316 = vmatpush1.msra.mxu0 0.0
  %317 = vmatprep.subr.mxu0 0.0
  %318 = vmatpush1.msra.mxu0 0.0
  %319 = vmatprep.subr.mxu0 0.0
  %320 = vmatpush1.msra.mxu0 0.0
  %321 = vmatprep.subr.mxu0 0.0
  %322 = vmatpush1.msra.mxu0 0.0
  %323 = vmatprep.subr.mxu0 0.0
  %324 = vmatpush1.msra.mxu0 0.0
  %325 = vmatprep.subr.mxu0 0.0
  %326 = vmatpush1.msra.mxu0 0.0
  %327 = vmatprep.mubr.f32.mxu0 0.0
  %328 = vmatmul.mubr.f32.gmra.mrb[0].mxu0 %v135
  %v329 = vpop.f32.mrb[0].mxu0
  %v330 = vadd.f32 0.0, %v329
  %v331 = vpop.f32.mrb[0].mxu0
  %332 = vmatprep.mubr.f32.mxu0 0.0
  %333 = vmatmul.mubr.f32.gmra.mrb[0].mxu0 %v136
  %v334 = vpop.f32.mrb[0].mxu0
  %v335 = vadd.f32 0.0, %v334
  %v336 = vpop.f32.mrb[0].mxu0
  %337 = vmatprep.mubr.f32.mxu0 0.0
  %338 = vmatmul.mubr.f32.gmra.mrb[0].mxu0 %v137
  %v339 = vpop.f32.mrb[0].mxu0
  %v340 = vadd.f32 0.0, %v339
  %v341 = vpop.f32.mrb[0].mxu0
  %342 = vmatprep.mubr.f32.mxu0 0.0
  %343 = vmatmul.mubr.f32.gmra.mrb[0].mxu0 %v138
  %v344 = vpop.f32.mrb[0].mxu0
  %v345 = vadd.f32 0.0, %v344
  %v346 = vpop.f32.mrb[0].mxu0
  %347 = vmatprep.mubr.f32.mxu0 0.0
  %348 = vmatmul.mubr.f32.gmra.mrb[0].mxu0 %v139
  %v349 = vpop.f32.mrb[0].mxu0
  %v350 = vadd.f32 0.0, %v349
  %v351 = vpop.f32.mrb[0].mxu0
  %352 = vmatprep.mubr.f32.mxu0 0.0
  %353 = vmatmul.mubr.f32.gmra.mrb[0].mxu0 %v140
  %v354 = vpop.f32.mrb[0].mxu0
  %v355 = vadd.f32 0.0, %v354
  %v356 = vpop.f32.mrb[0].mxu0
  %357 = vmatprep.mubr.f32.mxu0 0.0
  %358 = vmatmul.mubr.f32.gmra.mrb[0].mxu0 %v141
  %v359 = vpop.f32.mrb[0].mxu0
  %v360 = vadd.f32 0.0, %v359
  %v361 = vpop.f32.mrb[0].mxu0
  %362 = vmatprep.mubr.f32.mxu0 0.0
  %363 = vmatmul.mubr.f32.gmra.mrb[0].mxu0 %v142
  %v364 = vpop.f32.mrb[0].mxu0
  %v365 = vadd.f32 0.0, %v364
  %v366 = vpop.f32.mrb[0].mxu0
  %367 = vmatprep.mubr.f32.mxu0 0.0
  %368 = vmatmul.mubr.f32.gmra.mrb[0].mxu0 %v143
  %v369 = vpop.f32.mrb[0].mxu0
  %v370 = vadd.f32 0.0, %v369
  %v371 = vpop.f32.mrb[0].mxu0
  %372 = vmatprep.mubr.f32.mxu0 0.0
  %373 = vmatmul.mubr.f32.gmra.mrb[0].mxu0 %v144
  %v374 = vpop.f32.mrb[0].mxu0
  %v375 = vadd.f32 0.0, %v374
  %v376 = vpop.f32.mrb[0].mxu0
  %377 = vmatprep.mubr.f32.mxu0 0.0
  %378 = vmatmul.mubr.f32.gmra.mrb[0].mxu0 %v145
  %v379 = vpop.f32.mrb[0].mxu0
  %v380 = vadd.f32 0.0, %v379
  %v381 = vpop.f32.mrb[0].mxu0
  %382 = vmatprep.mubr.f32.mxu0 0.0
  %383 = vmatmul.mubr.f32.gmra.mrb[0].mxu0 %v146
  %v384 = vpop.f32.mrb[0].mxu0
  %v385 = vadd.f32 0.0, %v384
  %v386 = vpop.f32.mrb[0].mxu0
  %387 = vmatprep.mubr.f32.mxu0 0.0
  %388 = vmatmul.mubr.f32.gmra.mrb[0].mxu0 %v147
  %v389 = vpop.f32.mrb[0].mxu0
  %v390 = vadd.f32 0.0, %v389
  %v391 = vpop.f32.mrb[0].mxu0
  %392 = vmatprep.mubr.f32.mxu0 0.0
  %393 = vmatmul.mubr.f32.gmra.mrb[0].mxu0 %v148
  %v394 = vpop.f32.mrb[0].mxu0
  %v395 = vadd.f32 0.0, %v394
  %v396 = vpop.f32.mrb[0].mxu0
  %397 = vmatprep.mubr.f32.mxu0 0.0
  %398 = vmatmul.mubr.f32.gmra.mrb[0].mxu0 %v149
  %v399 = vpop.f32.mrb[0].mxu0
  %v400 = vadd.f32 0.0, %v399
  %v401 = vpop.f32.mrb[0].mxu0
  %402 = vmatprep.mubr.f32.mxu0 0.0
  %403 = vmatmul.mubr.f32.gmra.mrb[0].mxu0 %v150
  %v404 = vpop.f32.mrb[0].mxu0
  %v405 = vadd.f32 0.0, %v404
  %v406 = vpop.f32.mrb[0].mxu0
  %407 = vdwg.mxu0
  %v408 = vld [vmem:[%s3] sm:$0xff]
  %v409 = vld [vmem:[%s3 + $0x8] sm:$0xff]
  %v410 = vld [vmem:[%s3 + $0x10] sm:$0xff]
  %v411 = vld [vmem:[%s3 + $0x18] sm:$0xff]
  %v412 = vld [vmem:[%s3 + $0x20] sm:$0xff]
  %v413 = vld [vmem:[%s3 + $0x28] sm:$0xff]
  %v414 = vld [vmem:[%s3 + $0x30] sm:$0xff]
  %v415 = vld [vmem:[%s3 + $0x38] sm:$0xff]
  %v416 = vld [vmem:[%s3 + $0x40] sm:$0xff]
  %v417 = vld [vmem:[%s3 + $0x48] sm:$0xff]
  %v418 = vld [vmem:[%s3 + $0x50] sm:$0xff]
  %v419 = vld [vmem:[%s3 + $0x58] sm:$0xff]
  %v420 = vld [vmem:[%s3 + $0x60] sm:$0xff]
  %v421 = vld [vmem:[%s3 + $0x68] sm:$0xff]
  %v422 = vld [vmem:[%s3 + $0x70] sm:$0xff]
  %v423 = vld [vmem:[%s3 + $0x78] sm:$0xff]
  %425 = vset.pattern.permute.xlu0 0
  %426 = vperm.xlu0 %425, %v408
  %v427 = vpop.permute.xlu0 %426
  %430 = vset.pattern.permute.xlu0 0
  %431 = vperm.xlu0 %430, %v409
  %v432 = vpop.permute.xlu0 %431
  %435 = vset.pattern.permute.xlu0 0
  %436 = vperm.xlu0 %435, %v410
  %v437 = vpop.permute.xlu0 %436
  %440 = vset.pattern.permute.xlu0 0
  %441 = vperm.xlu0 %440, %v411
  %v442 = vpop.permute.xlu0 %441
  %445 = vset.pattern.permute.xlu0 0
  %446 = vperm.xlu0 %445, %v412
  %v447 = vpop.permute.xlu0 %446
  %450 = vset.pattern.permute.xlu0 0
  %451 = vperm.xlu0 %450, %v413
  %v452 = vpop.permute.xlu0 %451
  %455 = vset.pattern.permute.xlu0 0
  %456 = vperm.xlu0 %455, %v414
  %v457 = vpop.permute.xlu0 %456
  %460 = vset.pattern.permute.xlu0 0
  %461 = vperm.xlu0 %460, %v415
  %v462 = vpop.permute.xlu0 %461
  %465 = vset.pattern.permute.xlu0 0
  %466 = vperm.xlu0 %465, %v416
  %v467 = vpop.permute.xlu0 %466
  %470 = vset.pattern.permute.xlu0 0
  %471 = vperm.xlu0 %470, %v417
  %v472 = vpop.permute.xlu0 %471
  %475 = vset.pattern.permute.xlu0 0
  %476 = vperm.xlu0 %475, %v418
  %v477 = vpop.permute.xlu0 %476
  %480 = vset.pattern.permute.xlu0 0
  %481 = vperm.xlu0 %480, %v419
  %v482 = vpop.permute.xlu0 %481
  %485 = vset.pattern.permute.xlu0 0
  %486 = vperm.xlu0 %485, %v420
  %v487 = vpop.permute.xlu0 %486
  %490 = vset.pattern.permute.xlu0 0
  %491 = vperm.xlu0 %490, %v421
  %v492 = vpop.permute.xlu0 %491
  %495 = vset.pattern.permute.xlu0 0
  %496 = vperm.xlu0 %495, %v422
  %v497 = vpop.permute.xlu0 %496
  %500 = vset.pattern.permute.xlu0 0
  %501 = vperm.xlu0 %500, %v423
  %v502 = vpop.permute.xlu0 %501
  %v504 = vmul.f32 %v427, %v330
  %v505 = vmul.f32 %v432, %v335
  %v506 = vmul.f32 %v437, %v340
  %v507 = vmul.f32 %v442, %v345
  %v508 = vmul.f32 %v447, %v350
  %v509 = vmul.f32 %v452, %v355
  %v510 = vmul.f32 %v457, %v360
  %v511 = vmul.f32 %v462, %v365
  %v512 = vmul.f32 %v467, %v370
  %v513 = vmul.f32 %v472, %v375
  %v514 = vmul.f32 %v477, %v380
  %v515 = vmul.f32 %v482, %v385
  %v516 = vmul.f32 %v487, %v390
  %v517 = vmul.f32 %v492, %v395
  %v518 = vmul.f32 %v497, %v400
  %v519 = vmul.f32 %v502, %v405
  %v520 = vld [vmem:[%s4] sm:$0xff]
  %v521 = vld [vmem:[%s4 + $0x8] sm:$0xff]
  %v522 = vld [vmem:[%s4 + $0x10] sm:$0xff]
  %v523 = vld [vmem:[%s4 + $0x18] sm:$0xff]
  %v524 = vld [vmem:[%s4 + $0x20] sm:$0xff]
  %v525 = vld [vmem:[%s4 + $0x28] sm:$0xff]
  %v526 = vld [vmem:[%s4 + $0x30] sm:$0xff]
  %v527 = vld [vmem:[%s4 + $0x38] sm:$0xff]
  %v528 = vld [vmem:[%s4 + $0x40] sm:$0xff]
  %v529 = vld [vmem:[%s4 + $0x48] sm:$0xff]
  %v530 = vld [vmem:[%s4 + $0x50] sm:$0xff]
  %v531 = vld [vmem:[%s4 + $0x58] sm:$0xff]
  %v532 = vld [vmem:[%s4 + $0x60] sm:$0xff]
  %v533 = vld [vmem:[%s4 + $0x68] sm:$0xff]
  %v534 = vld [vmem:[%s4 + $0x70] sm:$0xff]
  %v535 = vld [vmem:[%s4 + $0x78] sm:$0xff]
  %536 = vxpose.xlu0.b32.start [1/16] %v231, 128
  %537 = vxpose.xlu0.b32.cont [2/16] %v232, 128
  %538 = vxpose.xlu0.b32.cont [3/16] %v233, 128
  %539 = vxpose.xlu0.b32.cont [4/16] %v234, 128
  %540 = vxpose.xlu0.b32.cont [5/16] %v235, 128
  %541 = vxpose.xlu0.b32.cont [6/16] %v236, 128
  %542 = vxpose.xlu0.b32.cont [7/16] %v237, 128
  %543 = vxpose.xlu0.b32.cont [8/16] %v238, 128
  %544 = vxpose.xlu0.b32.cont [9/16] %v239, 128
  %545 = vxpose.xlu0.b32.cont [10/16] %v240, 128
  %546 = vxpose.xlu0.b32.cont [11/16] %v241, 128
  %547 = vxpose.xlu0.b32.cont [12/16] %v242, 128
  %548 = vxpose.xlu0.b32.cont [13/16] %v243, 128
  %549 = vxpose.xlu0.b32.cont [14/16] %v244, 128
  %550 = vxpose.xlu0.b32.cont [15/16] %v245, 128
  %551 = vxpose.xlu0.b32.end [16/16] %v246, 128
  %v552 = vpop.trf.xlu0
  %v553 = vpop.trf.xlu0
  %v554 = vpop.trf.xlu0
  %v555 = vpop.trf.xlu0
  %v556 = vpop.trf.xlu0
  %v557 = vpop.trf.xlu0
  %v558 = vpop.trf.xlu0
  %v559 = vpop.trf.xlu0
  %v560 = vpop.trf.xlu0
  %v561 = vpop.trf.xlu0
  %v562 = vpop.trf.xlu0
  %v563 = vpop.trf.xlu0
  %v564 = vpop.trf.xlu0
  %v565 = vpop.trf.xlu0
  %v566 = vpop.trf.xlu0
  %v567 = vpop.trf.xlu0
  %568 = vmatprep.subr.mxu0 0.0
  %569 = vmatpush1.msra.mxu0 %v504
  %570 = vmatprep.subr.mxu0 0.0
  %571 = vmatpush1.msra.mxu0 %v505
  %572 = vmatprep.subr.mxu0 0.0
  %573 = vmatpush1.msra.mxu0 %v506
  %574 = vmatprep.subr.mxu0 0.0
  %575 = vmatpush1.msra.mxu0 %v507
  %576 = vmatprep.subr.mxu0 0.0
  %577 = vmatpush1.msra.mxu0 %v508
  %578 = vmatprep.subr.mxu0 0.0
  %579 = vmatpush1.msra.mxu0 %v509
  %580 = vmatprep.subr.mxu0 0.0
  %581 = vmatpush1.msra.mxu0 %v510
  %582 = vmatprep.subr.mxu0 0.0
  %583 = vmatpush1.msra.mxu0 %v511
  %584 = vmatprep.subr.mxu0 0.0
  %585 = vmatpush1.msra.mxu0 %v512
  %586 = vmatprep.subr.mxu0 0.0
  %587 = vmatpush1.msra.mxu0 %v513
  %588 = vmatprep.subr.mxu0 0.0
  %589 = vmatpush1.msra.mxu0 %v514
  %590 = vmatprep.subr.mxu0 0.0
  %591 = vmatpush1.msra.mxu0 %v515
  %592 = vmatprep.subr.mxu0 0.0
  %593 = vmatpush1.msra.mxu0 %v516
  %594 = vmatprep.subr.mxu0 0.0
  %595 = vmatpush1.msra.mxu0 %v517
  %596 = vmatprep.subr.mxu0 0.0
  %597 = vmatpush1.msra.mxu0 %v518
  %598 = vmatprep.subr.mxu0 0.0
  %599 = vmatpush1.msra.mxu0 %v519
  %600 = vmatprep.subr.mxu0 0.0
  %601 = vmatpush1.msra.mxu0 0.0
  %602 = vmatprep.subr.mxu0 0.0
  %603 = vmatpush1.msra.mxu0 0.0
  %604 = vmatprep.subr.mxu0 0.0
  %605 = vmatpush1.msra.mxu0 0.0
  %606 = vmatprep.subr.mxu0 0.0
  %607 = vmatpush1.msra.mxu0 0.0
  %608 = vmatprep.subr.mxu0 0.0
  %609 = vmatpush1.msra.mxu0 0.0
  %610 = vmatprep.subr.mxu0 0.0
  %611 = vmatpush1.msra.mxu0 0.0
  %612 = vmatprep.subr.mxu0 0.0
  %613 = vmatpush1.msra.mxu0 0.0
  %614 = vmatprep.subr.mxu0 0.0
  %615 = vmatpush1.msra.mxu0 0.0
  %616 = vmatprep.subr.mxu0 0.0
  %617 = vmatpush1.msra.mxu0 0.0
  %618 = vmatprep.subr.mxu0 0.0
  %619 = vmatpush1.msra.mxu0 0.0
  %620 = vmatprep.subr.mxu0 0.0
  %621 = vmatpush1.msra.mxu0 0.0
  %622 = vmatprep.subr.mxu0 0.0
  %623 = vmatpush1.msra.mxu0 0.0
  %624 = vmatprep.subr.mxu0 0.0
  %625 = vmatpush1.msra.mxu0 0.0
  %626 = vmatprep.subr.mxu0 0.0
  %627 = vmatpush1.msra.mxu0 0.0
  %628 = vmatprep.subr.mxu0 0.0
  %629 = vmatpush1.msra.mxu0 0.0
  %630 = vmatprep.subr.mxu0 0.0
  %631 = vmatpush1.msra.mxu0 0.0
  %632 = vmatprep.mubr.f32.mxu0 0.0
  %633 = vmatmul.mubr.f32.gmra.mrb[0].mxu0 %v552
  %v634 = vpop.f32.mrb[0].mxu0
  %v635 = vadd.f32 0.0, %v634
  %v636 = vpop.f32.mrb[0].mxu0
  %637 = vmatprep.mubr.f32.mxu0 0.0
  %638 = vmatmul.mubr.f32.gmra.mrb[0].mxu0 %v553
  %v639 = vpop.f32.mrb[0].mxu0
  %v640 = vadd.f32 0.0, %v639
  %v641 = vpop.f32.mrb[0].mxu0
  %642 = vmatprep.mubr.f32.mxu0 0.0
  %643 = vmatmul.mubr.f32.gmra.mrb[0].mxu0 %v554
  %v644 = vpop.f32.mrb[0].mxu0
  %v645 = vadd.f32 0.0, %v644
  %v646 = vpop.f32.mrb[0].mxu0
  %647 = vmatprep.mubr.f32.mxu0 0.0
  %648 = vmatmul.mubr.f32.gmra.mrb[0].mxu0 %v555
  %v649 = vpop.f32.mrb[0].mxu0
  %v650 = vadd.f32 0.0, %v649
  %v651 = vpop.f32.mrb[0].mxu0
  %652 = vmatprep.mubr.f32.mxu0 0.0
  %653 = vmatmul.mubr.f32.gmra.mrb[0].mxu0 %v556
  %v654 = vpop.f32.mrb[0].mxu0
  %v655 = vadd.f32 0.0, %v654
  %v656 = vpop.f32.mrb[0].mxu0
  %657 = vmatprep.mubr.f32.mxu0 0.0
  %658 = vmatmul.mubr.f32.gmra.mrb[0].mxu0 %v557
  %v659 = vpop.f32.mrb[0].mxu0
  %v660 = vadd.f32 0.0, %v659
  %v661 = vpop.f32.mrb[0].mxu0
  %662 = vmatprep.mubr.f32.mxu0 0.0
  %663 = vmatmul.mubr.f32.gmra.mrb[0].mxu0 %v558
  %v664 = vpop.f32.mrb[0].mxu0
  %v665 = vadd.f32 0.0, %v664
  %v666 = vpop.f32.mrb[0].mxu0
  %667 = vmatprep.mubr.f32.mxu0 0.0
  %668 = vmatmul.mubr.f32.gmra.mrb[0].mxu0 %v559
  %v669 = vpop.f32.mrb[0].mxu0
  %v670 = vadd.f32 0.0, %v669
  %v671 = vpop.f32.mrb[0].mxu0
  %672 = vmatprep.mubr.f32.mxu0 0.0
  %673 = vmatmul.mubr.f32.gmra.mrb[0].mxu0 %v560
  %v674 = vpop.f32.mrb[0].mxu0
  %v675 = vadd.f32 0.0, %v674
  %v676 = vpop.f32.mrb[0].mxu0
  %677 = vmatprep.mubr.f32.mxu0 0.0
  %678 = vmatmul.mubr.f32.gmra.mrb[0].mxu0 %v561
  %v679 = vpop.f32.mrb[0].mxu0
  %v680 = vadd.f32 0.0, %v679
  %v681 = vpop.f32.mrb[0].mxu0
  %682 = vmatprep.mubr.f32.mxu0 0.0
  %683 = vmatmul.mubr.f32.gmra.mrb[0].mxu0 %v562
  %v684 = vpop.f32.mrb[0].mxu0
  %v685 = vadd.f32 0.0, %v684
  %v686 = vpop.f32.mrb[0].mxu0
  %687 = vmatprep.mubr.f32.mxu0 0.0
  %688 = vmatmul.mubr.f32.gmra.mrb[0].mxu0 %v563
  %v689 = vpop.f32.mrb[0].mxu0
  %v690 = vadd.f32 0.0, %v689
  %v691 = vpop.f32.mrb[0].mxu0
  %692 = vmatprep.mubr.f32.mxu0 0.0
  %693 = vmatmul.mubr.f32.gmra.mrb[0].mxu0 %v564
  %v694 = vpop.f32.mrb[0].mxu0
  %v695 = vadd.f32 0.0, %v694
  %v696 = vpop.f32.mrb[0].mxu0
  %697 = vmatprep.mubr.f32.mxu0 0.0
  %698 = vmatmul.mubr.f32.gmra.mrb[0].mxu0 %v565
  %v699 = vpop.f32.mrb[0].mxu0
  %v700 = vadd.f32 0.0, %v699
  %v701 = vpop.f32.mrb[0].mxu0
  %702 = vmatprep.mubr.f32.mxu0 0.0
  %703 = vmatmul.mubr.f32.gmra.mrb[0].mxu0 %v566
  %v704 = vpop.f32.mrb[0].mxu0
  %v705 = vadd.f32 0.0, %v704
  %v706 = vpop.f32.mrb[0].mxu0
  %707 = vmatprep.mubr.f32.mxu0 0.0
  %708 = vmatmul.mubr.f32.gmra.mrb[0].mxu0 %v567
  %v709 = vpop.f32.mrb[0].mxu0
  %v710 = vadd.f32 0.0, %v709
  %v711 = vpop.f32.mrb[0].mxu0
  %712 = vdwg.mxu0
  %v713 = vadd.f32 %v520, %v635
  %v714 = vadd.f32 %v521, %v640
  %v715 = vadd.f32 %v522, %v645
  %v716 = vadd.f32 %v523, %v650
  %v717 = vadd.f32 %v524, %v655
  %v718 = vadd.f32 %v525, %v660
  %v719 = vadd.f32 %v526, %v665
  %v720 = vadd.f32 %v527, %v670
  %v721 = vadd.f32 %v528, %v675
  %v722 = vadd.f32 %v529, %v680
  %v723 = vadd.f32 %v530, %v685
  %v724 = vadd.f32 %v531, %v690
  %v725 = vadd.f32 %v532, %v695
  %v726 = vadd.f32 %v533, %v700
  %v727 = vadd.f32 %v534, %v705
  %v728 = vadd.f32 %v535, %v710
  %729 = vst [vmem:[%s4] sm:$0xff] %v713
  %730 = vst [vmem:[%s4 + $0x8] sm:$0xff] %v714
  %731 = vst [vmem:[%s4 + $0x10] sm:$0xff] %v715
  %732 = vst [vmem:[%s4 + $0x18] sm:$0xff] %v716
  %733 = vst [vmem:[%s4 + $0x20] sm:$0xff] %v717
  %734 = vst [vmem:[%s4 + $0x28] sm:$0xff] %v718
  %735 = vst [vmem:[%s4 + $0x30] sm:$0xff] %v719
  %736 = vst [vmem:[%s4 + $0x38] sm:$0xff] %v720
  %737 = vst [vmem:[%s4 + $0x40] sm:$0xff] %v721
  %738 = vst [vmem:[%s4 + $0x48] sm:$0xff] %v722
  %739 = vst [vmem:[%s4 + $0x50] sm:$0xff] %v723
  %740 = vst [vmem:[%s4 + $0x58] sm:$0xff] %v724
  %741 = vst [vmem:[%s4 + $0x60] sm:$0xff] %v725
  %742 = vst [vmem:[%s4 + $0x68] sm:$0xff] %v726
  %743 = vst [vmem:[%s4 + $0x70] sm:$0xff] %v727
  %744 = vst [vmem:[%s4 + $0x78] sm:$0xff] %v728
  // Predicated region
  $region22: #{edge_weight_forward.7} parent=0 // pred_check
    _
  $region23: #{edge_weight_forward.7} parent=0 // pred_check_branch
    %746 = sbr.rel (0) target = $region25
  $region24: #{edge_weight_forward.7} parent=0 // pred_region
    _
  $region25: #{edge_weight_forward.7} parent=0 // pred_fallthru
    _
  // Predicated region
  $region26: #{edge_weight_forward.7} parent=0 // pred_check
    _
  $region27: #{edge_weight_forward.7} parent=0 // pred_check_branch
    %748 = sbr.rel (0) target = $region29
  $region28: #{edge_weight_forward.7} parent=0 // pred_region
    _
  $region29: #{edge_weight_forward.7} parent=0 // pred_fallthru
    _

// kernel: edge_weight_forward.4
$region0: #{edge_weight_forward.4}
  #allocation0 [shape = 'u32[]', space=smem, size = 0x4, offset = 0x4, fixed_abs, tag = 'smem constant byte address 0x4 - core index']
  #allocation1 [shape = 'u32[144,128]{1,0:T(1,128)}', space=vmem, size = 0x12000, scoped, tag = 'internal scratch']
  %s0 = inlined_call_operand.vmem [shape: f32[128,128], index: 0, kind: input, shape index: {}]
  %s1 = inlined_call_operand.vmem [shape: f32[128,128], index: 1, kind: input, shape index: {}]
  %s2 = inlined_call_operand.vmem [shape: f32[1,128], index: 2, kind: input, shape index: {}]
  %s3 = inlined_call_operand.vmem [shape: f32[128,128], index: 3, kind: output, shape index: {}]
  %s4 = sld [smem:[#allocation0]]
  $region22: #{edge_weight_forward.4} parent=0
    _
  %s6 = ssub.s32 1, %s4
  %s7 = scalar_select 0, %s6, %s4
  // Predicated region
  $region2: #{edge_weight_forward.4} parent=0 // pred_check
    _
  $region3: #{edge_weight_forward.4} parent=0 // pred_check_branch
    %9 = sbr.rel (0) target = $region5
  $region4: #{edge_weight_forward.4} parent=0 // pred_region
    _
  $region5: #{edge_weight_forward.4} parent=0 // pred_fallthru
    _
  // Predicated region
  $region6: #{edge_weight_forward.4} parent=0 // pred_check
    _
  $region7: #{edge_weight_forward.4} parent=0 // pred_check_branch
    %11 = sbr.rel (0) target = $region9
  $region8: #{edge_weight_forward.4} parent=0 // pred_region
    _
  $region9: #{edge_weight_forward.4} parent=0 // pred_fallthru
    _
  // Predicated region
  $region10: #{edge_weight_forward.4} parent=0 // pred_check
    _
  $region11: #{edge_weight_forward.4} parent=0 // pred_check_branch
    %13 = sbr.rel (0) target = $region13
  $region12: #{edge_weight_forward.4} parent=0 // pred_region
    _
  $region13: #{edge_weight_forward.4} parent=0 // pred_fallthru
    _
  %v14 = vld [vmem:[%s0] sm:$0xff]
  %v15 = vld [vmem:[%s0 + $0x8] sm:$0xff]
  %v16 = vld [vmem:[%s0 + $0x10] sm:$0xff]
  %v17 = vld [vmem:[%s0 + $0x18] sm:$0xff]
  %v18 = vld [vmem:[%s0 + $0x20] sm:$0xff]
  %v19 = vld [vmem:[%s0 + $0x28] sm:$0xff]
  %v20 = vld [vmem:[%s0 + $0x30] sm:$0xff]
  %v21 = vld [vmem:[%s0 + $0x38] sm:$0xff]
  %v22 = vld [vmem:[%s0 + $0x40] sm:$0xff]
  %v23 = vld [vmem:[%s0 + $0x48] sm:$0xff]
  %v24 = vld [vmem:[%s0 + $0x50] sm:$0xff]
  %v25 = vld [vmem:[%s0 + $0x58] sm:$0xff]
  %v26 = vld [vmem:[%s0 + $0x60] sm:$0xff]
  %v27 = vld [vmem:[%s0 + $0x68] sm:$0xff]
  %v28 = vld [vmem:[%s0 + $0x70] sm:$0xff]
  %v29 = vld [vmem:[%s0 + $0x78] sm:$0xff]
  %v30 = vld [vmem:[%s1] sm:$0xff]
  %v31 = vld [vmem:[%s1 + $0x8] sm:$0xff]
  %v32 = vld [vmem:[%s1 + $0x10] sm:$0xff]
  %v33 = vld [vmem:[%s1 + $0x18] sm:$0xff]
  %v34 = vld [vmem:[%s1 + $0x20] sm:$0xff]
  %v35 = vld [vmem:[%s1 + $0x28] sm:$0xff]
  %v36 = vld [vmem:[%s1 + $0x30] sm:$0xff]
  %v37 = vld [vmem:[%s1 + $0x38] sm:$0xff]
  %v38 = vld [vmem:[%s1 + $0x40] sm:$0xff]
  %v39 = vld [vmem:[%s1 + $0x48] sm:$0xff]
  %v40 = vld [vmem:[%s1 + $0x50] sm:$0xff]
  %v41 = vld [vmem:[%s1 + $0x58] sm:$0xff]
  %v42 = vld [vmem:[%s1 + $0x60] sm:$0xff]
  %v43 = vld [vmem:[%s1 + $0x68] sm:$0xff]
  %v44 = vld [vmem:[%s1 + $0x70] sm:$0xff]
  %v45 = vld [vmem:[%s1 + $0x78] sm:$0xff]
  %v46 = vld [vmem:[%s2] sm:$0x1]
  %v48 = vlaneseq
  %v49 = vshrl.u32 %v48, 7
  %v50 = vsub.s32 0, %v49
  %v51 = vrot.slane %v46, %v50
  %53 = vmatprep.subr.mxu0 0.0
  %54 = vmatpush1.msra.mxu0 %v30
  %55 = vmatprep.subr.mxu0 0.0
  %56 = vmatpush1.msra.mxu0 %v31
  %57 = vmatprep.subr.mxu0 0.0
  %58 = vmatpush1.msra.mxu0 %v32
  %59 = vmatprep.subr.mxu0 0.0
  %60 = vmatpush1.msra.mxu0 %v33
  %61 = vmatprep.subr.mxu0 0.0
  %62 = vmatpush1.msra.mxu0 %v34
  %63 = vmatprep.subr.mxu0 0.0
  %64 = vmatpush1.msra.mxu0 %v35
  %65 = vmatprep.subr.mxu0 0.0
  %66 = vmatpush1.msra.mxu0 %v36
  %67 = vmatprep.subr.mxu0 0.0
  %68 = vmatpush1.msra.mxu0 %v37
  %69 = vmatprep.subr.mxu0 0.0
  %70 = vmatpush1.msra.mxu0 %v38
  %71 = vmatprep.subr.mxu0 0.0
  %72 = vmatpush1.msra.mxu0 %v39
  %73 = vmatprep.subr.mxu0 0.0
  %74 = vmatpush1.msra.mxu0 %v40
  %75 = vmatprep.subr.mxu0 0.0
  %76 = vmatpush1.msra.mxu0 %v41
  %77 = vmatprep.subr.mxu0 0.0
  %78 = vmatpush1.msra.mxu0 %v42
  %79 = vmatprep.subr.mxu0 0.0
  %80 = vmatpush1.msra.mxu0 %v43
  %81 = vmatprep.subr.mxu0 0.0
  %82 = vmatpush1.msra.mxu0 %v44
  %83 = vmatprep.subr.mxu0 0.0
  %84 = vmatpush1.msra.mxu0 %v45
  %85 = vmatprep.subr.mxu0 0.0
  %86 = vmatpush1.msra.mxu0 0.0
  %87 = vmatprep.subr.mxu0 0.0
  %88 = vmatpush1.msra.mxu0 0.0
  %89 = vmatprep.subr.mxu0 0.0
  %90 = vmatpush1.msra.mxu0 0.0
  %91 = vmatprep.subr.mxu0 0.0
  %92 = vmatpush1.msra.mxu0 0.0
  %93 = vmatprep.subr.mxu0 0.0
  %94 = vmatpush1.msra.mxu0 0.0
  %95 = vmatprep.subr.mxu0 0.0
  %96 = vmatpush1.msra.mxu0 0.0
  %97 = vmatprep.subr.mxu0 0.0
  %98 = vmatpush1.msra.mxu0 0.0
  %99 = vmatprep.subr.mxu0 0.0
  %100 = vmatpush1.msra.mxu0 0.0
  %101 = vmatprep.subr.mxu0 0.0
  %102 = vmatpush1.msra.mxu0 0.0
  %103 = vmatprep.subr.mxu0 0.0
  %104 = vmatpush1.msra.mxu0 0.0
  %105 = vmatprep.subr.mxu0 0.0
  %106 = vmatpush1.msra.mxu0 0.0
  %107 = vmatprep.subr.mxu0 0.0
  %108 = vmatpush1.msra.mxu0 0.0
  %109 = vmatprep.subr.mxu0 0.0
  %110 = vmatpush1.msra.mxu0 0.0
  %111 = vmatprep.subr.mxu0 0.0
  %112 = vmatpush1.msra.mxu0 0.0
  %113 = vmatprep.subr.mxu0 0.0
  %114 = vmatpush1.msra.mxu0 0.0
  %115 = vmatprep.subr.mxu0 0.0
  %116 = vmatpush1.msra.mxu0 0.0
  %117 = vmatprep.mubr.f32.mxu0 0.0
  %118 = vmatmul.mubr.f32.gmra.mrb[0].mxu0 %v14
  %v119 = vpop.f32.mrb[0].mxu0
  %v120 = vadd.f32 %v51, %v119
  %v121 = vpop.f32.mrb[0].mxu0
  %122 = vmatprep.mubr.f32.mxu0 0.0
  %123 = vmatmul.mubr.f32.gmra.mrb[0].mxu0 %v15
  %v124 = vpop.f32.mrb[0].mxu0
  %v125 = vadd.f32 %v51, %v124
  %v126 = vpop.f32.mrb[0].mxu0
  %127 = vmatprep.mubr.f32.mxu0 0.0
  %128 = vmatmul.mubr.f32.gmra.mrb[0].mxu0 %v16
  %v129 = vpop.f32.mrb[0].mxu0
  %v130 = vadd.f32 %v51, %v129
  %v131 = vpop.f32.mrb[0].mxu0
  %132 = vmatprep.mubr.f32.mxu0 0.0
  %133 = vmatmul.mubr.f32.gmra.mrb[0].mxu0 %v17
  %v134 = vpop.f32.mrb[0].mxu0
  %v135 = vadd.f32 %v51, %v134
  %v136 = vpop.f32.mrb[0].mxu0
  %137 = vmatprep.mubr.f32.mxu0 0.0
  %138 = vmatmul.mubr.f32.gmra.mrb[0].mxu0 %v18
  %v139 = vpop.f32.mrb[0].mxu0
  %v140 = vadd.f32 %v51, %v139
  %v141 = vpop.f32.mrb[0].mxu0
  %142 = vmatprep.mubr.f32.mxu0 0.0
  %143 = vmatmul.mubr.f32.gmra.mrb[0].mxu0 %v19
  %v144 = vpop.f32.mrb[0].mxu0
  %v145 = vadd.f32 %v51, %v144
  %v146 = vpop.f32.mrb[0].mxu0
  %147 = vmatprep.mubr.f32.mxu0 0.0
  %148 = vmatmul.mubr.f32.gmra.mrb[0].mxu0 %v20
  %v149 = vpop.f32.mrb[0].mxu0
  %v150 = vadd.f32 %v51, %v149
  %v151 = vpop.f32.mrb[0].mxu0
  %152 = vmatprep.mubr.f32.mxu0 0.0
  %153 = vmatmul.mubr.f32.gmra.mrb[0].mxu0 %v21
  %v154 = vpop.f32.mrb[0].mxu0
  %v155 = vadd.f32 %v51, %v154
  %v156 = vpop.f32.mrb[0].mxu0
  %157 = vmatprep.mubr.f32.mxu0 0.0
  %158 = vmatmul.mubr.f32.gmra.mrb[0].mxu0 %v22
  %v159 = vpop.f32.mrb[0].mxu0
  %v160 = vadd.f32 %v51, %v159
  %v161 = vpop.f32.mrb[0].mxu0
  %162 = vmatprep.mubr.f32.mxu0 0.0
  %163 = vmatmul.mubr.f32.gmra.mrb[0].mxu0 %v23
  %v164 = vpop.f32.mrb[0].mxu0
  %v165 = vadd.f32 %v51, %v164
  %v166 = vpop.f32.mrb[0].mxu0
  %167 = vmatprep.mubr.f32.mxu0 0.0
  %168 = vmatmul.mubr.f32.gmra.mrb[0].mxu0 %v24
  %v169 = vpop.f32.mrb[0].mxu0
  %v170 = vadd.f32 %v51, %v169
  %v171 = vpop.f32.mrb[0].mxu0
  %172 = vmatprep.mubr.f32.mxu0 0.0
  %173 = vmatmul.mubr.f32.gmra.mrb[0].mxu0 %v25
  %v174 = vpop.f32.mrb[0].mxu0
  %v175 = vadd.f32 %v51, %v174
  %v176 = vpop.f32.mrb[0].mxu0
  %177 = vmatprep.mubr.f32.mxu0 0.0
  %178 = vmatmul.mubr.f32.gmra.mrb[0].mxu0 %v26
  %v179 = vpop.f32.mrb[0].mxu0
  %v180 = vadd.f32 %v51, %v179
  %v181 = vpop.f32.mrb[0].mxu0
  %182 = vmatprep.mubr.f32.mxu0 0.0
  %183 = vmatmul.mubr.f32.gmra.mrb[0].mxu0 %v27
  %v184 = vpop.f32.mrb[0].mxu0
  %v185 = vadd.f32 %v51, %v184
  %v186 = vpop.f32.mrb[0].mxu0
  %187 = vmatprep.mubr.f32.mxu0 0.0
  %188 = vmatmul.mubr.f32.gmra.mrb[0].mxu0 %v28
  %v189 = vpop.f32.mrb[0].mxu0
  %v190 = vadd.f32 %v51, %v189
  %v191 = vpop.f32.mrb[0].mxu0
  %192 = vmatprep.mubr.f32.mxu0 0.0
  %193 = vmatmul.mubr.f32.gmra.mrb[0].mxu0 %v29
  %v194 = vpop.f32.mrb[0].mxu0
  %v195 = vadd.f32 %v51, %v194
  %v196 = vpop.f32.mrb[0].mxu0
  %197 = vdwg.mxu0
  %198 = vst [vmem:[%s3] sm:$0xff] %v120
  %199 = vst [vmem:[%s3 + $0x8] sm:$0xff] %v125
  %200 = vst [vmem:[%s3 + $0x10] sm:$0xff] %v130
  %201 = vst [vmem:[%s3 + $0x18] sm:$0xff] %v135
  %202 = vst [vmem:[%s3 + $0x20] sm:$0xff] %v140
  %203 = vst [vmem:[%s3 + $0x28] sm:$0xff] %v145
  %204 = vst [vmem:[%s3 + $0x30] sm:$0xff] %v150
  %205 = vst [vmem:[%s3 + $0x38] sm:$0xff] %v155
  %206 = vst [vmem:[%s3 + $0x40] sm:$0xff] %v160
  %207 = vst [vmem:[%s3 + $0x48] sm:$0xff] %v165
  %208 = vst [vmem:[%s3 + $0x50] sm:$0xff] %v170
  %209 = vst [vmem:[%s3 + $0x58] sm:$0xff] %v175
  %210 = vst [vmem:[%s3 + $0x60] sm:$0xff] %v180
  %211 = vst [vmem:[%s3 + $0x68] sm:$0xff] %v185
  %212 = vst [vmem:[%s3 + $0x70] sm:$0xff] %v190
  %213 = vst [vmem:[%s3 + $0x78] sm:$0xff] %v195
  // Predicated region
  $region14: #{edge_weight_forward.4} parent=0 // pred_check
    _
  $region15: #{edge_weight_forward.4} parent=0 // pred_check_branch
    %215 = sbr.rel (0) target = $region17
  $region16: #{edge_weight_forward.4} parent=0 // pred_region
    _
  $region17: #{edge_weight_forward.4} parent=0 // pred_fallthru
    _
  // Predicated region
  $region18: #{edge_weight_forward.4} parent=0 // pred_check
    _
  $region19: #{edge_weight_forward.4} parent=0 // pred_check_branch
    %217 = sbr.rel (0) target = $region21
  $region20: #{edge_weight_forward.4} parent=0 // pred_region
    _
  $region21: #{edge_weight_forward.4} parent=0 // pred_fallthru
    _

// kernel: edge_weight_forward.6
$region0: #{edge_weight_forward.6}
  #allocation0 [shape = 'u32[]', space=smem, size = 0x4, offset = 0x4, fixed_abs, tag = 'smem constant byte address 0x4 - core index']
  #allocation1 [shape = 'u32[144,128]{1,0:T(1,128)}', space=vmem, size = 0x12000, scoped, tag = 'internal scratch']
  %s0 = inlined_call_operand.vmem [shape: f32[128,128], index: 0, kind: input, shape index: {}]
  %s1 = inlined_call_operand.vmem [shape: s32[128,1], index: 1, kind: input, shape index: {}]
  %s2 = inlined_call_operand.vmem [shape: s32[128,1], index: 2, kind: input, shape index: {}]
  %s3 = inlined_call_operand.vmem [shape: f32[128,1], index: 3, kind: input, shape index: {}]
  %s4 = inlined_call_operand.vmem [shape: f32[128,128], index: 4, kind: input, shape index: {}]
  %s5 = inlined_call_operand.vmem [shape: f32[128,128], index: 5, kind: input, shape index: {}]
  %s6 = inlined_call_operand.vmem [shape: f32[1,128], index: 6, kind: input, shape index: {}]
  %s7 = inlined_call_operand.vmem [shape: f32[128,128], index: 7, kind: input, shape index: {}]
  %s8 = inlined_call_operand.vmem [shape: f32[1,128], index: 8, kind: input, shape index: {}]
  %s9 = inlined_call_operand.vmem [shape: f32[128,128], index: 9, kind: output, shape index: {}]
  %s10 = sld [smem:[#allocation0]]
  $region46: #{edge_weight_forward.6} parent=0
    _
  %s12 = ssub.s32 1, %s10
  %s13 = scalar_select 0, %s12, %s10
  // Predicated region
  $region2: #{edge_weight_forward.6} parent=0 // pred_check
    _
  $region3: #{edge_weight_forward.6} parent=0 // pred_check_branch
    %15 = sbr.rel (0) target = $region5
  $region4: #{edge_weight_forward.6} parent=0 // pred_region
    _
  $region5: #{edge_weight_forward.6} parent=0 // pred_fallthru
    _
  // Predicated region
  $region6: #{edge_weight_forward.6} parent=0 // pred_check
    _
  $region7: #{edge_weight_forward.6} parent=0 // pred_check_branch
    %17 = sbr.rel (0) target = $region9
  $region8: #{edge_weight_forward.6} parent=0 // pred_region
    _
  $region9: #{edge_weight_forward.6} parent=0 // pred_fallthru
    _
  // Predicated region
  $region10: #{edge_weight_forward.6} parent=0 // pred_check
    _
  $region11: #{edge_weight_forward.6} parent=0 // pred_check_branch
    %19 = sbr.rel (0) target = $region13
  $region12: #{edge_weight_forward.6} parent=0 // pred_region
    _
  $region13: #{edge_weight_forward.6} parent=0 // pred_fallthru
    _
  // Predicated region
  $region14: #{edge_weight_forward.6} parent=0 // pred_check
    _
  $region15: #{edge_weight_forward.6} parent=0 // pred_check_branch
    %21 = sbr.rel (0) target = $region17
  $region16: #{edge_weight_forward.6} parent=0 // pred_region
    _
  $region17: #{edge_weight_forward.6} parent=0 // pred_fallthru
    _
  // Predicated region
  $region18: #{edge_weight_forward.6} parent=0 // pred_check
    _
  $region19: #{edge_weight_forward.6} parent=0 // pred_check_branch
    %23 = sbr.rel (0) target = $region21
  $region20: #{edge_weight_forward.6} parent=0 // pred_region
    _
  $region21: #{edge_weight_forward.6} parent=0 // pred_fallthru
    _
  // Predicated region
  $region22: #{edge_weight_forward.6} parent=0 // pred_check
    _
  $region23: #{edge_weight_forward.6} parent=0 // pred_check_branch
    %25 = sbr.rel (0) target = $region25
  $region24: #{edge_weight_forward.6} parent=0 // pred_region
    _
  $region25: #{edge_weight_forward.6} parent=0 // pred_fallthru
    _
  // Predicated region
  $region26: #{edge_weight_forward.6} parent=0 // pred_check
    _
  $region27: #{edge_weight_forward.6} parent=0 // pred_check_branch
    %27 = sbr.rel (0) target = $region29
  $region28: #{edge_weight_forward.6} parent=0 // pred_region
    _
  $region29: #{edge_weight_forward.6} parent=0 // pred_fallthru
    _
  // Predicated region
  $region30: #{edge_weight_forward.6} parent=0 // pred_check
    _
  $region31: #{edge_weight_forward.6} parent=0 // pred_check_branch
    %29 = sbr.rel (0) target = $region33
  $region32: #{edge_weight_forward.6} parent=0 // pred_region
    _
  $region33: #{edge_weight_forward.6} parent=0 // pred_fallthru
    _
  // Predicated region
  $region34: #{edge_weight_forward.6} parent=0 // pred_check
    _
  $region35: #{edge_weight_forward.6} parent=0 // pred_check_branch
    %31 = sbr.rel (0) target = $region37
  $region36: #{edge_weight_forward.6} parent=0 // pred_region
    _
  $region37: #{edge_weight_forward.6} parent=0 // pred_fallthru
    _
  %v32 = vlaneseq
  %v33 = vand.u32 %v32, 127
  %v34 = vld [vmem:[%s1] sm:$0xff]
  %v35 = vld [vmem:[%s1 + $0x8] sm:$0xff]
  %v36 = vld [vmem:[%s1 + $0x10] sm:$0xff]
  %v37 = vld [vmem:[%s1 + $0x18] sm:$0xff]
  %v38 = vld [vmem:[%s1 + $0x20] sm:$0xff]
  %v39 = vld [vmem:[%s1 + $0x28] sm:$0xff]
  %v40 = vld [vmem:[%s1 + $0x30] sm:$0xff]
  %v41 = vld [vmem:[%s1 + $0x38] sm:$0xff]
  %v42 = vld [vmem:[%s1 + $0x40] sm:$0xff]
  %v43 = vld [vmem:[%s1 + $0x48] sm:$0xff]
  %v44 = vld [vmem:[%s1 + $0x50] sm:$0xff]
  %v45 = vld [vmem:[%s1 + $0x58] sm:$0xff]
  %v46 = vld [vmem:[%s1 + $0x60] sm:$0xff]
  %v47 = vld [vmem:[%s1 + $0x68] sm:$0xff]
  %v48 = vld [vmem:[%s1 + $0x70] sm:$0xff]
  %v49 = vld [vmem:[%s1 + $0x78] sm:$0xff]
  %50 = vset.pattern.permute.xlu0 0
  %51 = vperm.xlu0 %50, %v34
  %v52 = vpop.permute.xlu0 %51
  %53 = vset.pattern.permute.xlu0 0
  %54 = vperm.xlu0 %53, %v35
  %v55 = vpop.permute.xlu0 %54
  %56 = vset.pattern.permute.xlu0 0
  %57 = vperm.xlu0 %56, %v36
  %v58 = vpop.permute.xlu0 %57
  %59 = vset.pattern.permute.xlu0 0
  %60 = vperm.xlu0 %59, %v37
  %v61 = vpop.permute.xlu0 %60
  %62 = vset.pattern.permute.xlu0 0
  %63 = vperm.xlu0 %62, %v38
  %v64 = vpop.permute.xlu0 %63
  %65 = vset.pattern.permute.xlu0 0
  %66 = vperm.xlu0 %65, %v39
  %v67 = vpop.permute.xlu0 %66
  %68 = vset.pattern.permute.xlu0 0
  %69 = vperm.xlu0 %68, %v40
  %v70 = vpop.permute.xlu0 %69
  %71 = vset.pattern.permute.xlu0 0
  %72 = vperm.xlu0 %71, %v41
  %v73 = vpop.permute.xlu0 %72
  %74 = vset.pattern.permute.xlu0 0
  %75 = vperm.xlu0 %74, %v42
  %v76 = vpop.permute.xlu0 %75
  %77 = vset.pattern.permute.xlu0 0
  %78 = vperm.xlu0 %77, %v43
  %v79 = vpop.permute.xlu0 %78
  %80 = vset.pattern.permute.xlu0 0
  %81 = vperm.xlu0 %80, %v44
  %v82 = vpop.permute.xlu0 %81
  %83 = vset.pattern.permute.xlu0 0
  %84 = vperm.xlu0 %83, %v45
  %v85 = vpop.permute.xlu0 %84
  %86 = vset.pattern.permute.xlu0 0
  %87 = vperm.xlu0 %86, %v46
  %v88 = vpop.permute.xlu0 %87
  %89 = vset.pattern.permute.xlu0 0
  %90 = vperm.xlu0 %89, %v47
  %v91 = vpop.permute.xlu0 %90
  %92 = vset.pattern.permute.xlu0 0
  %93 = vperm.xlu0 %92, %v48
  %v94 = vpop.permute.xlu0 %93
  %95 = vset.pattern.permute.xlu0 0
  %96 = vperm.xlu0 %95, %v49
  %v97 = vpop.permute.xlu0 %96
  %vm98 = vcmp.eq.s32.totalorder %v52, %v33
  %vm99 = vcmp.eq.s32.totalorder %v55, %v33
  %vm100 = vcmp.eq.s32.totalorder %v58, %v33
  %vm101 = vcmp.eq.s32.totalorder %v61, %v33
  %vm102 = vcmp.eq.s32.totalorder %v64, %v33
  %vm103 = vcmp.eq.s32.totalorder %v67, %v33
  %vm104 = vcmp.eq.s32.totalorder %v70, %v33
  %vm105 = vcmp.eq.s32.totalorder %v73, %v33
  %vm106 = vcmp.eq.s32.totalorder %v76, %v33
  %vm107 = vcmp.eq.s32.totalorder %v79, %v33
  %vm108 = vcmp.eq.s32.totalorder %v82, %v33
  %vm109 = vcmp.eq.s32.totalorder %v85, %v33
  %vm110 = vcmp.eq.s32.totalorder %v88, %v33
  %vm111 = vcmp.eq.s32.totalorder %v91, %v33
  %vm112 = vcmp.eq.s32.totalorder %v94, %v33
  %vm113 = vcmp.eq.s32.totalorder %v97, %v33
  %v114 = vsel %vm98, 1.0, 0.0
  %v115 = vsel %vm99, 1.0, 0.0
  %v116 = vsel %vm100, 1.0, 0.0
  %v117 = vsel %vm101, 1.0, 0.0
  %v118 = vsel %vm102, 1.0, 0.0
  %v119 = vsel %vm103, 1.0, 0.0
  %v120 = vsel %vm104, 1.0, 0.0
  %v121 = vsel %vm105, 1.0, 0.0
  %v122 = vsel %vm106, 1.0, 0.0
  %v123 = vsel %vm107, 1.0, 0.0
  %v124 = vsel %vm108, 1.0, 0.0
  %v125 = vsel %vm109, 1.0, 0.0
  %v126 = vsel %vm110, 1.0, 0.0
  %v127 = vsel %vm111, 1.0, 0.0
  %v128 = vsel %vm112, 1.0, 0.0
  %v129 = vsel %vm113, 1.0, 0.0
  %v130 = vld [vmem:[%s2] sm:$0xff]
  %v131 = vld [vmem:[%s2 + $0x8] sm:$0xff]
  %v132 = vld [vmem:[%s2 + $0x10] sm:$0xff]
  %v133 = vld [vmem:[%s2 + $0x18] sm:$0xff]
  %v134 = vld [vmem:[%s2 + $0x20] sm:$0xff]
  %v135 = vld [vmem:[%s2 + $0x28] sm:$0xff]
  %v136 = vld [vmem:[%s2 + $0x30] sm:$0xff]
  %v137 = vld [vmem:[%s2 + $0x38] sm:$0xff]
  %v138 = vld [vmem:[%s2 + $0x40] sm:$0xff]
  %v139 = vld [vmem:[%s2 + $0x48] sm:$0xff]
  %v140 = vld [vmem:[%s2 + $0x50] sm:$0xff]
  %v141 = vld [vmem:[%s2 + $0x58] sm:$0xff]
  %v142 = vld [vmem:[%s2 + $0x60] sm:$0xff]
  %v143 = vld [vmem:[%s2 + $0x68] sm:$0xff]
  %v144 = vld [vmem:[%s2 + $0x70] sm:$0xff]
  %v145 = vld [vmem:[%s2 + $0x78] sm:$0xff]
  %146 = vset.pattern.permute.xlu0 0
  %147 = vperm.xlu0 %146, %v130
  %v148 = vpop.permute.xlu0 %147
  %149 = vset.pattern.permute.xlu0 0
  %150 = vperm.xlu0 %149, %v131
  %v151 = vpop.permute.xlu0 %150
  %152 = vset.pattern.permute.xlu0 0
  %153 = vperm.xlu0 %152, %v132
  %v154 = vpop.permute.xlu0 %153
  %155 = vset.pattern.permute.xlu0 0
  %156 = vperm.xlu0 %155, %v133
  %v157 = vpop.permute.xlu0 %156
  %158 = vset.pattern.permute.xlu0 0
  %159 = vperm.xlu0 %158, %v134
  %v160 = vpop.permute.xlu0 %159
  %161 = vset.pattern.permute.xlu0 0
  %162 = vperm.xlu0 %161, %v135
  %v163 = vpop.permute.xlu0 %162
  %164 = vset.pattern.permute.xlu0 0
  %165 = vperm.xlu0 %164, %v136
  %v166 = vpop.permute.xlu0 %165
  %167 = vset.pattern.permute.xlu0 0
  %168 = vperm.xlu0 %167, %v137
  %v169 = vpop.permute.xlu0 %168
  %170 = vset.pattern.permute.xlu0 0
  %171 = vperm.xlu0 %170, %v138
  %v172 = vpop.permute.xlu0 %171
  %173 = vset.pattern.permute.xlu0 0
  %174 = vperm.xlu0 %173, %v139
  %v175 = vpop.permute.xlu0 %174
  %176 = vset.pattern.permute.xlu0 0
  %177 = vperm.xlu0 %176, %v140
  %v178 = vpop.permute.xlu0 %177
  %179 = vset.pattern.permute.xlu0 0
  %180 = vperm.xlu0 %179, %v141
  %v181 = vpop.permute.xlu0 %180
  %182 = vset.pattern.permute.xlu0 0
  %183 = vperm.xlu0 %182, %v142
  %v184 = vpop.permute.xlu0 %183
  %185 = vset.pattern.permute.xlu0 0
  %186 = vperm.xlu0 %185, %v143
  %v187 = vpop.permute.xlu0 %186
  %188 = vset.pattern.permute.xlu0 0
  %189 = vperm.xlu0 %188, %v144
  %v190 = vpop.permute.xlu0 %189
  %191 = vset.pattern.permute.xlu0 0
  %192 = vperm.xlu0 %191, %v145
  %v193 = vpop.permute.xlu0 %192
  %vm194 = vcmp.eq.s32.totalorder %v148, %v33
  %vm195 = vcmp.eq.s32.totalorder %v151, %v33
  %vm196 = vcmp.eq.s32.totalorder %v154, %v33
  %vm197 = vcmp.eq.s32.totalorder %v157, %v33
  %vm198 = vcmp.eq.s32.totalorder %v160, %v33
  %vm199 = vcmp.eq.s32.totalorder %v163, %v33
  %vm200 = vcmp.eq.s32.totalorder %v166, %v33
  %vm201 = vcmp.eq.s32.totalorder %v169, %v33
  %vm202 = vcmp.eq.s32.totalorder %v172, %v33
  %vm203 = vcmp.eq.s32.totalorder %v175, %v33
  %vm204 = vcmp.eq.s32.totalorder %v178, %v33
  %vm205 = vcmp.eq.s32.totalorder %v181, %v33
  %vm206 = vcmp.eq.s32.totalorder %v184, %v33
  %vm207 = vcmp.eq.s32.totalorder %v187, %v33
  %vm208 = vcmp.eq.s32.totalorder %v190, %v33
  %vm209 = vcmp.eq.s32.totalorder %v193, %v33
  %v210 = vsel %vm194, 1.0, 0.0
  %v211 = vsel %vm195, 1.0, 0.0
  %v212 = vsel %vm196, 1.0, 0.0
  %v213 = vsel %vm197, 1.0, 0.0
  %v214 = vsel %vm198, 1.0, 0.0
  %v215 = vsel %vm199, 1.0, 0.0
  %v216 = vsel %vm200, 1.0, 0.0
  %v217 = vsel %vm201, 1.0, 0.0
  %v218 = vsel %vm202, 1.0, 0.0
  %v219 = vsel %vm203, 1.0, 0.0
  %v220 = vsel %vm204, 1.0, 0.0
  %v221 = vsel %vm205, 1.0, 0.0
  %v222 = vsel %vm206, 1.0, 0.0
  %v223 = vsel %vm207, 1.0, 0.0
  %v224 = vsel %vm208, 1.0, 0.0
  %v225 = vsel %vm209, 1.0, 0.0
  %v226 = vld [vmem:[%s0] sm:$0xff]
  %v227 = vld [vmem:[%s0 + $0x8] sm:$0xff]
  %v228 = vld [vmem:[%s0 + $0x10] sm:$0xff]
  %v229 = vld [vmem:[%s0 + $0x18] sm:$0xff]
  %v230 = vld [vmem:[%s0 + $0x20] sm:$0xff]
  %v231 = vld [vmem:[%s0 + $0x28] sm:$0xff]
  %v232 = vld [vmem:[%s0 + $0x30] sm:$0xff]
  %v233 = vld [vmem:[%s0 + $0x38] sm:$0xff]
  %v234 = vld [vmem:[%s0 + $0x40] sm:$0xff]
  %v235 = vld [vmem:[%s0 + $0x48] sm:$0xff]
  %v236 = vld [vmem:[%s0 + $0x50] sm:$0xff]
  %v237 = vld [vmem:[%s0 + $0x58] sm:$0xff]
  %v238 = vld [vmem:[%s0 + $0x60] sm:$0xff]
  %v239 = vld [vmem:[%s0 + $0x68] sm:$0xff]
  %v240 = vld [vmem:[%s0 + $0x70] sm:$0xff]
  %v241 = vld [vmem:[%s0 + $0x78] sm:$0xff]
  %242 = vmatprep.subr.mxu0 0.0
  %243 = vmatpush1.msra.mxu0 %v226
  %244 = vmatprep.subr.mxu0 0.0
  %245 = vmatpush1.msra.mxu0 %v227
  %246 = vmatprep.subr.mxu0 0.0
  %247 = vmatpush1.msra.mxu0 %v228
  %248 = vmatprep.subr.mxu0 0.0
  %249 = vmatpush1.msra.mxu0 %v229
  %250 = vmatprep.subr.mxu0 0.0
  %251 = vmatpush1.msra.mxu0 %v230
  %252 = vmatprep.subr.mxu0 0.0
  %253 = vmatpush1.msra.mxu0 %v231
  %254 = vmatprep.subr.mxu0 0.0
  %255 = vmatpush1.msra.mxu0 %v232
  %256 = vmatprep.subr.mxu0 0.0
  %257 = vmatpush1.msra.mxu0 %v233
  %258 = vmatprep.subr.mxu0 0.0
  %259 = vmatpush1.msra.mxu0 %v234
  %260 = vmatprep.subr.mxu0 0.0
  %261 = vmatpush1.msra.mxu0 %v235
  %262 = vmatprep.subr.mxu0 0.0
  %263 = vmatpush1.msra.mxu0 %v236
  %264 = vmatprep.subr.mxu0 0.0
  %265 = vmatpush1.msra.mxu0 %v237
  %266 = vmatprep.subr.mxu0 0.0
  %267 = vmatpush1.msra.mxu0 %v238
  %268 = vmatprep.subr.mxu0 0.0
  %269 = vmatpush1.msra.mxu0 %v239
  %270 = vmatprep.subr.mxu0 0.0
  %271 = vmatpush1.msra.mxu0 %v240
  %272 = vmatprep.subr.mxu0 0.0
  %273 = vmatpush1.msra.mxu0 %v241
  %274 = vmatprep.subr.mxu0 0.0
  %275 = vmatpush1.msra.mxu0 0.0
  %276 = vmatprep.subr.mxu0 0.0
  %277 = vmatpush1.msra.mxu0 0.0
  %278 = vmatprep.subr.mxu0 0.0
  %279 = vmatpush1.msra.mxu0 0.0
  %280 = vmatprep.subr.mxu0 0.0
  %281 = vmatpush1.msra.mxu0 0.0
  %282 = vmatprep.subr.mxu0 0.0
  %283 = vmatpush1.msra.mxu0 0.0
  %284 = vmatprep.subr.mxu0 0.0
  %285 = vmatpush1.msra.mxu0 0.0
  %286 = vmatprep.subr.mxu0 0.0
  %287 = vmatpush1.msra.mxu0 0.0
  %288 = vmatprep.subr.mxu0 0.0
  %289 = vmatpush1.msra.mxu0 0.0
  %290 = vmatprep.subr.mxu0 0.0
  %291 = vmatpush1.msra.mxu0 0.0
  %292 = vmatprep.subr.mxu0 0.0
  %293 = vmatpush1.msra.mxu0 0.0
  %294 = vmatprep.subr.mxu0 0.0
  %295 = vmatpush1.msra.mxu0 0.0
  %296 = vmatprep.subr.mxu0 0.0
  %297 = vmatpush1.msra.mxu0 0.0
  %298 = vmatprep.subr.mxu0 0.0
  %299 = vmatpush1.msra.mxu0 0.0
  %300 = vmatprep.subr.mxu0 0.0
  %301 = vmatpush1.msra.mxu0 0.0
  %302 = vmatprep.subr.mxu0 0.0
  %303 = vmatpush1.msra.mxu0 0.0
  %304 = vmatprep.subr.mxu0 0.0
  %305 = vmatpush1.msra.mxu0 0.0
  %306 = vmatprep.mubr.f32.mxu0 0.0
  %307 = vmatmul.mubr.f32.gmra.mrb[0].mxu0 %v114
  %v308 = vpop.f32.mrb[0].mxu0
  %v309 = vadd.f32 0.0, %v308
  %v310 = vpop.f32.mrb[0].mxu0
  %311 = vmatprep.mubr.f32.mxu0 0.0
  %312 = vmatmul.mubr.f32.gmra.mrb[0].mxu0 %v115
  %v313 = vpop.f32.mrb[0].mxu0
  %v314 = vadd.f32 0.0, %v313
  %v315 = vpop.f32.mrb[0].mxu0
  %316 = vmatprep.mubr.f32.mxu0 0.0
  %317 = vmatmul.mubr.f32.gmra.mrb[0].mxu0 %v116
  %v318 = vpop.f32.mrb[0].mxu0
  %v319 = vadd.f32 0.0, %v318
  %v320 = vpop.f32.mrb[0].mxu0
  %321 = vmatprep.mubr.f32.mxu0 0.0
  %322 = vmatmul.mubr.f32.gmra.mrb[0].mxu0 %v117
  %v323 = vpop.f32.mrb[0].mxu0
  %v324 = vadd.f32 0.0, %v323
  %v325 = vpop.f32.mrb[0].mxu0
  %326 = vmatprep.mubr.f32.mxu0 0.0
  %327 = vmatmul.mubr.f32.gmra.mrb[0].mxu0 %v118
  %v328 = vpop.f32.mrb[0].mxu0
  %v329 = vadd.f32 0.0, %v328
  %v330 = vpop.f32.mrb[0].mxu0
  %331 = vmatprep.mubr.f32.mxu0 0.0
  %332 = vmatmul.mubr.f32.gmra.mrb[0].mxu0 %v119
  %v333 = vpop.f32.mrb[0].mxu0
  %v334 = vadd.f32 0.0, %v333
  %v335 = vpop.f32.mrb[0].mxu0
  %336 = vmatprep.mubr.f32.mxu0 0.0
  %337 = vmatmul.mubr.f32.gmra.mrb[0].mxu0 %v120
  %v338 = vpop.f32.mrb[0].mxu0
  %v339 = vadd.f32 0.0, %v338
  %v340 = vpop.f32.mrb[0].mxu0
  %341 = vmatprep.mubr.f32.mxu0 0.0
  %342 = vmatmul.mubr.f32.gmra.mrb[0].mxu0 %v121
  %v343 = vpop.f32.mrb[0].mxu0
  %v344 = vadd.f32 0.0, %v343
  %v345 = vpop.f32.mrb[0].mxu0
  %346 = vmatprep.mubr.f32.mxu0 0.0
  %347 = vmatmul.mubr.f32.gmra.mrb[0].mxu0 %v122
  %v348 = vpop.f32.mrb[0].mxu0
  %v349 = vadd.f32 0.0, %v348
  %v350 = vpop.f32.mrb[0].mxu0
  %351 = vmatprep.mubr.f32.mxu0 0.0
  %352 = vmatmul.mubr.f32.gmra.mrb[0].mxu0 %v123
  %v353 = vpop.f32.mrb[0].mxu0
  %v354 = vadd.f32 0.0, %v353
  %v355 = vpop.f32.mrb[0].mxu0
  %356 = vmatprep.mubr.f32.mxu0 0.0
  %357 = vmatmul.mubr.f32.gmra.mrb[0].mxu0 %v124
  %v358 = vpop.f32.mrb[0].mxu0
  %v359 = vadd.f32 0.0, %v358
  %v360 = vpop.f32.mrb[0].mxu0
  %361 = vmatprep.mubr.f32.mxu0 0.0
  %362 = vmatmul.mubr.f32.gmra.mrb[0].mxu0 %v125
  %v363 = vpop.f32.mrb[0].mxu0
  %v364 = vadd.f32 0.0, %v363
  %v365 = vpop.f32.mrb[0].mxu0
  %366 = vmatprep.mubr.f32.mxu0 0.0
  %367 = vmatmul.mubr.f32.gmra.mrb[0].mxu0 %v126
  %v368 = vpop.f32.mrb[0].mxu0
  %v369 = vadd.f32 0.0, %v368
  %v370 = vpop.f32.mrb[0].mxu0
  %371 = vmatprep.mubr.f32.mxu0 0.0
  %372 = vmatmul.mubr.f32.gmra.mrb[0].mxu0 %v127
  %v373 = vpop.f32.mrb[0].mxu0
  %v374 = vadd.f32 0.0, %v373
  %v375 = vpop.f32.mrb[0].mxu0
  %376 = vmatprep.mubr.f32.mxu0 0.0
  %377 = vmatmul.mubr.f32.gmra.mrb[0].mxu0 %v128
  %v378 = vpop.f32.mrb[0].mxu0
  %v379 = vadd.f32 0.0, %v378
  %v380 = vpop.f32.mrb[0].mxu0
  %381 = vmatprep.mubr.f32.mxu0 0.0
  %382 = vmatmul.mubr.f32.gmra.mrb[0].mxu0 %v129
  %v383 = vpop.f32.mrb[0].mxu0
  %v384 = vadd.f32 0.0, %v383
  %v385 = vpop.f32.mrb[0].mxu0
  %386 = vdwg.mxu0
  %387 = vmatprep.subr.mxu0 0.0
  %388 = vmatpush1.msra.mxu0 %v226
  %389 = vmatprep.subr.mxu0 0.0
  %390 = vmatpush1.msra.mxu0 %v227
  %391 = vmatprep.subr.mxu0 0.0
  %392 = vmatpush1.msra.mxu0 %v228
  %393 = vmatprep.subr.mxu0 0.0
  %394 = vmatpush1.msra.mxu0 %v229
  %395 = vmatprep.subr.mxu0 0.0
  %396 = vmatpush1.msra.mxu0 %v230
  %397 = vmatprep.subr.mxu0 0.0
  %398 = vmatpush1.msra.mxu0 %v231
  %399 = vmatprep.subr.mxu0 0.0
  %400 = vmatpush1.msra.mxu0 %v232
  %401 = vmatprep.subr.mxu0 0.0
  %402 = vmatpush1.msra.mxu0 %v233
  %403 = vmatprep.subr.mxu0 0.0
  %404 = vmatpush1.msra.mxu0 %v234
  %405 = vmatprep.subr.mxu0 0.0
  %406 = vmatpush1.msra.mxu0 %v235
  %407 = vmatprep.subr.mxu0 0.0
  %408 = vmatpush1.msra.mxu0 %v236
  %409 = vmatprep.subr.mxu0 0.0
  %410 = vmatpush1.msra.mxu0 %v237
  %411 = vmatprep.subr.mxu0 0.0
  %412 = vmatpush1.msra.mxu0 %v238
  %413 = vmatprep.subr.mxu0 0.0
  %414 = vmatpush1.msra.mxu0 %v239
  %415 = vmatprep.subr.mxu0 0.0
  %416 = vmatpush1.msra.mxu0 %v240
  %417 = vmatprep.subr.mxu0 0.0
  %418 = vmatpush1.msra.mxu0 %v241
  %419 = vmatprep.subr.mxu0 0.0
  %420 = vmatpush1.msra.mxu0 0.0
  %421 = vmatprep.subr.mxu0 0.0
  %422 = vmatpush1.msra.mxu0 0.0
  %423 = vmatprep.subr.mxu0 0.0
  %424 = vmatpush1.msra.mxu0 0.0
  %425 = vmatprep.subr.mxu0 0.0
  %426 = vmatpush1.msra.mxu0 0.0
  %427 = vmatprep.subr.mxu0 0.0
  %428 = vmatpush1.msra.mxu0 0.0
  %429 = vmatprep.subr.mxu0 0.0
  %430 = vmatpush1.msra.mxu0 0.0
  %431 = vmatprep.subr.mxu0 0.0
  %432 = vmatpush1.msra.mxu0 0.0
  %433 = vmatprep.subr.mxu0 0.0
  %434 = vmatpush1.msra.mxu0 0.0
  %435 = vmatprep.subr.mxu0 0.0
  %436 = vmatpush1.msra.mxu0 0.0
  %437 = vmatprep.subr.mxu0 0.0
  %438 = vmatpush1.msra.mxu0 0.0
  %439 = vmatprep.subr.mxu0 0.0
  %440 = vmatpush1.msra.mxu0 0.0
  %441 = vmatprep.subr.mxu0 0.0
  %442 = vmatpush1.msra.mxu0 0.0
  %443 = vmatprep.subr.mxu0 0.0
  %444 = vmatpush1.msra.mxu0 0.0
  %445 = vmatprep.subr.mxu0 0.0
  %446 = vmatpush1.msra.mxu0 0.0
  %447 = vmatprep.subr.mxu0 0.0
  %448 = vmatpush1.msra.mxu0 0.0
  %449 = vmatprep.subr.mxu0 0.0
  %450 = vmatpush1.msra.mxu0 0.0
  %451 = vmatprep.mubr.f32.mxu0 0.0
  %452 = vmatmul.mubr.f32.gmra.mrb[0].mxu0 %v210
  %v453 = vpop.f32.mrb[0].mxu0
  %v454 = vadd.f32 0.0, %v453
  %v455 = vpop.f32.mrb[0].mxu0
  %456 = vmatprep.mubr.f32.mxu0 0.0
  %457 = vmatmul.mubr.f32.gmra.mrb[0].mxu0 %v211
  %v458 = vpop.f32.mrb[0].mxu0
  %v459 = vadd.f32 0.0, %v458
  %v460 = vpop.f32.mrb[0].mxu0
  %461 = vmatprep.mubr.f32.mxu0 0.0
  %462 = vmatmul.mubr.f32.gmra.mrb[0].mxu0 %v212
  %v463 = vpop.f32.mrb[0].mxu0
  %v464 = vadd.f32 0.0, %v463
  %v465 = vpop.f32.mrb[0].mxu0
  %466 = vmatprep.mubr.f32.mxu0 0.0
  %467 = vmatmul.mubr.f32.gmra.mrb[0].mxu0 %v213
  %v468 = vpop.f32.mrb[0].mxu0
  %v469 = vadd.f32 0.0, %v468
  %v470 = vpop.f32.mrb[0].mxu0
  %471 = vmatprep.mubr.f32.mxu0 0.0
  %472 = vmatmul.mubr.f32.gmra.mrb[0].mxu0 %v214
  %v473 = vpop.f32.mrb[0].mxu0
  %v474 = vadd.f32 0.0, %v473
  %v475 = vpop.f32.mrb[0].mxu0
  %476 = vmatprep.mubr.f32.mxu0 0.0
  %477 = vmatmul.mubr.f32.gmra.mrb[0].mxu0 %v215
  %v478 = vpop.f32.mrb[0].mxu0
  %v479 = vadd.f32 0.0, %v478
  %v480 = vpop.f32.mrb[0].mxu0
  %481 = vmatprep.mubr.f32.mxu0 0.0
  %482 = vmatmul.mubr.f32.gmra.mrb[0].mxu0 %v216
  %v483 = vpop.f32.mrb[0].mxu0
  %v484 = vadd.f32 0.0, %v483
  %v485 = vpop.f32.mrb[0].mxu0
  %486 = vmatprep.mubr.f32.mxu0 0.0
  %487 = vmatmul.mubr.f32.gmra.mrb[0].mxu0 %v217
  %v488 = vpop.f32.mrb[0].mxu0
  %v489 = vadd.f32 0.0, %v488
  %v490 = vpop.f32.mrb[0].mxu0
  %491 = vmatprep.mubr.f32.mxu0 0.0
  %492 = vmatmul.mubr.f32.gmra.mrb[0].mxu0 %v218
  %v493 = vpop.f32.mrb[0].mxu0
  %v494 = vadd.f32 0.0, %v493
  %v495 = vpop.f32.mrb[0].mxu0
  %496 = vmatprep.mubr.f32.mxu0 0.0
  %497 = vmatmul.mubr.f32.gmra.mrb[0].mxu0 %v219
  %v498 = vpop.f32.mrb[0].mxu0
  %v499 = vadd.f32 0.0, %v498
  %v500 = vpop.f32.mrb[0].mxu0
  %501 = vmatprep.mubr.f32.mxu0 0.0
  %502 = vmatmul.mubr.f32.gmra.mrb[0].mxu0 %v220
  %v503 = vpop.f32.mrb[0].mxu0
  %v504 = vadd.f32 0.0, %v503
  %v505 = vpop.f32.mrb[0].mxu0
  %506 = vmatprep.mubr.f32.mxu0 0.0
  %507 = vmatmul.mubr.f32.gmra.mrb[0].mxu0 %v221
  %v508 = vpop.f32.mrb[0].mxu0
  %v509 = vadd.f32 0.0, %v508
  %v510 = vpop.f32.mrb[0].mxu0
  %511 = vmatprep.mubr.f32.mxu0 0.0
  %512 = vmatmul.mubr.f32.gmra.mrb[0].mxu0 %v222
  %v513 = vpop.f32.mrb[0].mxu0
  %v514 = vadd.f32 0.0, %v513
  %v515 = vpop.f32.mrb[0].mxu0
  %516 = vmatprep.mubr.f32.mxu0 0.0
  %517 = vmatmul.mubr.f32.gmra.mrb[0].mxu0 %v223
  %v518 = vpop.f32.mrb[0].mxu0
  %v519 = vadd.f32 0.0, %v518
  %v520 = vpop.f32.mrb[0].mxu0
  %521 = vmatprep.mubr.f32.mxu0 0.0
  %522 = vmatmul.mubr.f32.gmra.mrb[0].mxu0 %v224
  %v523 = vpop.f32.mrb[0].mxu0
  %v524 = vadd.f32 0.0, %v523
  %v525 = vpop.f32.mrb[0].mxu0
  %526 = vmatprep.mubr.f32.mxu0 0.0
  %527 = vmatmul.mubr.f32.gmra.mrb[0].mxu0 %v225
  %v528 = vpop.f32.mrb[0].mxu0
  %v529 = vadd.f32 0.0, %v528
  %v530 = vpop.f32.mrb[0].mxu0
  %531 = vdwg.mxu0
  %v532 = vld [vmem:[%s4] sm:$0xff]
  %v533 = vld [vmem:[%s4 + $0x8] sm:$0xff]
  %v534 = vld [vmem:[%s4 + $0x10] sm:$0xff]
  %v535 = vld [vmem:[%s4 + $0x18] sm:$0xff]
  %v536 = vld [vmem:[%s4 + $0x20] sm:$0xff]
  %v537 = vld [vmem:[%s4 + $0x28] sm:$0xff]
  %v538 = vld [vmem:[%s4 + $0x30] sm:$0xff]
  %v539 = vld [vmem:[%s4 + $0x38] sm:$0xff]
  %v540 = vld [vmem:[%s4 + $0x40] sm:$0xff]
  %v541 = vld [vmem:[%s4 + $0x48] sm:$0xff]
  %v542 = vld [vmem:[%s4 + $0x50] sm:$0xff]
  %v543 = vld [vmem:[%s4 + $0x58] sm:$0xff]
  %v544 = vld [vmem:[%s4 + $0x60] sm:$0xff]
  %v545 = vld [vmem:[%s4 + $0x68] sm:$0xff]
  %v546 = vld [vmem:[%s4 + $0x70] sm:$0xff]
  %v547 = vld [vmem:[%s4 + $0x78] sm:$0xff]
  %v548 = vld [vmem:[%s5] sm:$0xff]
  %v549 = vld [vmem:[%s5 + $0x8] sm:$0xff]
  %v550 = vld [vmem:[%s5 + $0x10] sm:$0xff]
  %v551 = vld [vmem:[%s5 + $0x18] sm:$0xff]
  %v552 = vld [vmem:[%s5 + $0x20] sm:$0xff]
  %v553 = vld [vmem:[%s5 + $0x28] sm:$0xff]
  %v554 = vld [vmem:[%s5 + $0x30] sm:$0xff]
  %v555 = vld [vmem:[%s5 + $0x38] sm:$0xff]
  %v556 = vld [vmem:[%s5 + $0x40] sm:$0xff]
  %v557 = vld [vmem:[%s5 + $0x48] sm:$0xff]
  %v558 = vld [vmem:[%s5 + $0x50] sm:$0xff]
  %v559 = vld [vmem:[%s5 + $0x58] sm:$0xff]
  %v560 = vld [vmem:[%s5 + $0x60] sm:$0xff]
  %v561 = vld [vmem:[%s5 + $0x68] sm:$0xff]
  %v562 = vld [vmem:[%s5 + $0x70] sm:$0xff]
  %v563 = vld [vmem:[%s5 + $0x78] sm:$0xff]
  %564 = vmatprep.subr.mxu0 0.0
  %565 = vmatpush1.msra.mxu0 %v548
  %566 = vmatprep.subr.mxu0 0.0
  %567 = vmatpush1.msra.mxu0 %v549
  %568 = vmatprep.subr.mxu0 0.0
  %569 = vmatpush1.msra.mxu0 %v550
  %570 = vmatprep.subr.mxu0 0.0
  %571 = vmatpush1.msra.mxu0 %v551
  %572 = vmatprep.subr.mxu0 0.0
  %573 = vmatpush1.msra.mxu0 %v552
  %574 = vmatprep.subr.mxu0 0.0
  %575 = vmatpush1.msra.mxu0 %v553
  %576 = vmatprep.subr.mxu0 0.0
  %577 = vmatpush1.msra.mxu0 %v554
  %578 = vmatprep.subr.mxu0 0.0
  %579 = vmatpush1.msra.mxu0 %v555
  %580 = vmatprep.subr.mxu0 0.0
  %581 = vmatpush1.msra.mxu0 %v556
  %582 = vmatprep.subr.mxu0 0.0
  %583 = vmatpush1.msra.mxu0 %v557
  %584 = vmatprep.subr.mxu0 0.0
  %585 = vmatpush1.msra.mxu0 %v558
  %586 = vmatprep.subr.mxu0 0.0
  %587 = vmatpush1.msra.mxu0 %v559
  %588 = vmatprep.subr.mxu0 0.0
  %589 = vmatpush1.msra.mxu0 %v560
  %590 = vmatprep.subr.mxu0 0.0
  %591 = vmatpush1.msra.mxu0 %v561
  %592 = vmatprep.subr.mxu0 0.0
  %593 = vmatpush1.msra.mxu0 %v562
  %594 = vmatprep.subr.mxu0 0.0
  %595 = vmatpush1.msra.mxu0 %v563
  %596 = vmatprep.subr.mxu0 0.0
  %597 = vmatpush1.msra.mxu0 0.0
  %598 = vmatprep.subr.mxu0 0.0
  %599 = vmatpush1.msra.mxu0 0.0
  %600 = vmatprep.subr.mxu0 0.0
  %601 = vmatpush1.msra.mxu0 0.0
  %602 = vmatprep.subr.mxu0 0.0
  %603 = vmatpush1.msra.mxu0 0.0
  %604 = vmatprep.subr.mxu0 0.0
  %605 = vmatpush1.msra.mxu0 0.0
  %606 = vmatprep.subr.mxu0 0.0
  %607 = vmatpush1.msra.mxu0 0.0
  %608 = vmatprep.subr.mxu0 0.0
  %609 = vmatpush1.msra.mxu0 0.0
  %610 = vmatprep.subr.mxu0 0.0
  %611 = vmatpush1.msra.mxu0 0.0
  %612 = vmatprep.subr.mxu0 0.0
  %613 = vmatpush1.msra.mxu0 0.0
  %614 = vmatprep.subr.mxu0 0.0
  %615 = vmatpush1.msra.mxu0 0.0
  %616 = vmatprep.subr.mxu0 0.0
  %617 = vmatpush1.msra.mxu0 0.0
  %618 = vmatprep.subr.mxu0 0.0
  %619 = vmatpush1.msra.mxu0 0.0
  %620 = vmatprep.subr.mxu0 0.0
  %621 = vmatpush1.msra.mxu0 0.0
  %622 = vmatprep.subr.mxu0 0.0
  %623 = vmatpush1.msra.mxu0 0.0
  %624 = vmatprep.subr.mxu0 0.0
  %625 = vmatpush1.msra.mxu0 0.0
  %626 = vmatprep.subr.mxu0 0.0
  %627 = vmatpush1.msra.mxu0 0.0
  %628 = vmatprep.mubr.f32.mxu0 0.0
  %629 = vmatmul.mubr.f32.gmra.mrb[0].mxu0 %v454
  %v630 = vpop.f32.mrb[0].mxu0
  %v631 = vadd.f32 0.0, %v630
  %v632 = vpop.f32.mrb[0].mxu0
  %633 = vmatprep.mubr.f32.mxu0 0.0
  %634 = vmatmul.mubr.f32.gmra.mrb[0].mxu0 %v459
  %v635 = vpop.f32.mrb[0].mxu0
  %v636 = vadd.f32 0.0, %v635
  %v637 = vpop.f32.mrb[0].mxu0
  %638 = vmatprep.mubr.f32.mxu0 0.0
  %639 = vmatmul.mubr.f32.gmra.mrb[0].mxu0 %v464
  %v640 = vpop.f32.mrb[0].mxu0
  %v641 = vadd.f32 0.0, %v640
  %v642 = vpop.f32.mrb[0].mxu0
  %643 = vmatprep.mubr.f32.mxu0 0.0
  %644 = vmatmul.mubr.f32.gmra.mrb[0].mxu0 %v469
  %v645 = vpop.f32.mrb[0].mxu0
  %v646 = vadd.f32 0.0, %v645
  %v647 = vpop.f32.mrb[0].mxu0
  %648 = vmatprep.mubr.f32.mxu0 0.0
  %649 = vmatmul.mubr.f32.gmra.mrb[0].mxu0 %v474
  %v650 = vpop.f32.mrb[0].mxu0
  %v651 = vadd.f32 0.0, %v650
  %v652 = vpop.f32.mrb[0].mxu0
  %653 = vmatprep.mubr.f32.mxu0 0.0
  %654 = vmatmul.mubr.f32.gmra.mrb[0].mxu0 %v479
  %v655 = vpop.f32.mrb[0].mxu0
  %v656 = vadd.f32 0.0, %v655
  %v657 = vpop.f32.mrb[0].mxu0
  %658 = vmatprep.mubr.f32.mxu0 0.0
  %659 = vmatmul.mubr.f32.gmra.mrb[0].mxu0 %v484
  %v660 = vpop.f32.mrb[0].mxu0
  %v661 = vadd.f32 0.0, %v660
  %v662 = vpop.f32.mrb[0].mxu0
  %663 = vmatprep.mubr.f32.mxu0 0.0
  %664 = vmatmul.mubr.f32.gmra.mrb[0].mxu0 %v489
  %v665 = vpop.f32.mrb[0].mxu0
  %v666 = vadd.f32 0.0, %v665
  %v667 = vpop.f32.mrb[0].mxu0
  %668 = vmatprep.mubr.f32.mxu0 0.0
  %669 = vmatmul.mubr.f32.gmra.mrb[0].mxu0 %v494
  %v670 = vpop.f32.mrb[0].mxu0
  %v671 = vadd.f32 0.0, %v670
  %v672 = vpop.f32.mrb[0].mxu0
  %673 = vmatprep.mubr.f32.mxu0 0.0
  %674 = vmatmul.mubr.f32.gmra.mrb[0].mxu0 %v499
  %v675 = vpop.f32.mrb[0].mxu0
  %v676 = vadd.f32 0.0, %v675
  %v677 = vpop.f32.mrb[0].mxu0
  %678 = vmatprep.mubr.f32.mxu0 0.0
  %679 = vmatmul.mubr.f32.gmra.mrb[0].mxu0 %v504
  %v680 = vpop.f32.mrb[0].mxu0
  %v681 = vadd.f32 0.0, %v680
  %v682 = vpop.f32.mrb[0].mxu0
  %683 = vmatprep.mubr.f32.mxu0 0.0
  %684 = vmatmul.mubr.f32.gmra.mrb[0].mxu0 %v509
  %v685 = vpop.f32.mrb[0].mxu0
  %v686 = vadd.f32 0.0, %v685
  %v687 = vpop.f32.mrb[0].mxu0
  %688 = vmatprep.mubr.f32.mxu0 0.0
  %689 = vmatmul.mubr.f32.gmra.mrb[0].mxu0 %v514
  %v690 = vpop.f32.mrb[0].mxu0
  %v691 = vadd.f32 0.0, %v690
  %v692 = vpop.f32.mrb[0].mxu0
  %693 = vmatprep.mubr.f32.mxu0 0.0
  %694 = vmatmul.mubr.f32.gmra.mrb[0].mxu0 %v519
  %v695 = vpop.f32.mrb[0].mxu0
  %v696 = vadd.f32 0.0, %v695
  %v697 = vpop.f32.mrb[0].mxu0
  %698 = vmatprep.mubr.f32.mxu0 0.0
  %699 = vmatmul.mubr.f32.gmra.mrb[0].mxu0 %v524
  %v700 = vpop.f32.mrb[0].mxu0
  %v701 = vadd.f32 0.0, %v700
  %v702 = vpop.f32.mrb[0].mxu0
  %703 = vmatprep.mubr.f32.mxu0 0.0
  %704 = vmatmul.mubr.f32.gmra.mrb[0].mxu0 %v529
  %v705 = vpop.f32.mrb[0].mxu0
  %v706 = vadd.f32 0.0, %v705
  %v707 = vpop.f32.mrb[0].mxu0
  %708 = vdwg.mxu0
  %709 = vmatprep.subr.mxu0 0.0
  %710 = vmatpush1.msra.mxu0 %v532
  %711 = vmatprep.subr.mxu0 0.0
  %712 = vmatpush1.msra.mxu0 %v533
  %713 = vmatprep.subr.mxu0 0.0
  %714 = vmatpush1.msra.mxu0 %v534
  %715 = vmatprep.subr.mxu0 0.0
  %716 = vmatpush1.msra.mxu0 %v535
  %717 = vmatprep.subr.mxu0 0.0
  %718 = vmatpush1.msra.mxu0 %v536
  %719 = vmatprep.subr.mxu0 0.0
  %720 = vmatpush1.msra.mxu0 %v537
  %721 = vmatprep.subr.mxu0 0.0
  %722 = vmatpush1.msra.mxu0 %v538
  %723 = vmatprep.subr.mxu0 0.0
  %724 = vmatpush1.msra.mxu0 %v539
  %725 = vmatprep.subr.mxu0 0.0
  %726 = vmatpush1.msra.mxu0 %v540
  %727 = vmatprep.subr.mxu0 0.0
  %728 = vmatpush1.msra.mxu0 %v541
  %729 = vmatprep.subr.mxu0 0.0
  %730 = vmatpush1.msra.mxu0 %v542
  %731 = vmatprep.subr.mxu0 0.0
  %732 = vmatpush1.msra.mxu0 %v543
  %733 = vmatprep.subr.mxu0 0.0
  %734 = vmatpush1.msra.mxu0 %v544
  %735 = vmatprep.subr.mxu0 0.0
  %736 = vmatpush1.msra.mxu0 %v545
  %737 = vmatprep.subr.mxu0 0.0
  %738 = vmatpush1.msra.mxu0 %v546
  %739 = vmatprep.subr.mxu0 0.0
  %740 = vmatpush1.msra.mxu0 %v547
  %741 = vmatprep.subr.mxu0 0.0
  %742 = vmatpush1.msra.mxu0 0.0
  %743 = vmatprep.subr.mxu0 0.0
  %744 = vmatpush1.msra.mxu0 0.0
  %745 = vmatprep.subr.mxu0 0.0
  %746 = vmatpush1.msra.mxu0 0.0
  %747 = vmatprep.subr.mxu0 0.0
  %748 = vmatpush1.msra.mxu0 0.0
  %749 = vmatprep.subr.mxu0 0.0
  %750 = vmatpush1.msra.mxu0 0.0
  %751 = vmatprep.subr.mxu0 0.0
  %752 = vmatpush1.msra.mxu0 0.0
  %753 = vmatprep.subr.mxu0 0.0
  %754 = vmatpush1.msra.mxu0 0.0
  %755 = vmatprep.subr.mxu0 0.0
  %756 = vmatpush1.msra.mxu0 0.0
  %757 = vmatprep.subr.mxu0 0.0
  %758 = vmatpush1.msra.mxu0 0.0
  %759 = vmatprep.subr.mxu0 0.0
  %760 = vmatpush1.msra.mxu0 0.0
  %761 = vmatprep.subr.mxu0 0.0
  %762 = vmatpush1.msra.mxu0 0.0
  %763 = vmatprep.subr.mxu0 0.0
  %764 = vmatpush1.msra.mxu0 0.0
  %765 = vmatprep.subr.mxu0 0.0
  %766 = vmatpush1.msra.mxu0 0.0
  %767 = vmatprep.subr.mxu0 0.0
  %768 = vmatpush1.msra.mxu0 0.0
  %769 = vmatprep.subr.mxu0 0.0
  %770 = vmatpush1.msra.mxu0 0.0
  %771 = vmatprep.subr.mxu0 0.0
  %772 = vmatpush1.msra.mxu0 0.0
  %773 = vmatprep.mubr.f32.mxu0 0.0
  %774 = vmatmul.mubr.f32.gmra.mrb[0].mxu0 %v309
  %v775 = vpop.f32.mrb[0].mxu0
  %v776 = vadd.f32 %v631, %v775
  %v777 = vpop.f32.mrb[0].mxu0
  %778 = vmatprep.mubr.f32.mxu0 0.0
  %779 = vmatmul.mubr.f32.gmra.mrb[0].mxu0 %v314
  %v780 = vpop.f32.mrb[0].mxu0
  %v781 = vadd.f32 %v636, %v780
  %v782 = vpop.f32.mrb[0].mxu0
  %783 = vmatprep.mubr.f32.mxu0 0.0
  %784 = vmatmul.mubr.f32.gmra.mrb[0].mxu0 %v319
  %v785 = vpop.f32.mrb[0].mxu0
  %v786 = vadd.f32 %v641, %v785
  %v787 = vpop.f32.mrb[0].mxu0
  %788 = vmatprep.mubr.f32.mxu0 0.0
  %789 = vmatmul.mubr.f32.gmra.mrb[0].mxu0 %v324
  %v790 = vpop.f32.mrb[0].mxu0
  %v791 = vadd.f32 %v646, %v790
  %v792 = vpop.f32.mrb[0].mxu0
  %793 = vmatprep.mubr.f32.mxu0 0.0
  %794 = vmatmul.mubr.f32.gmra.mrb[0].mxu0 %v329
  %v795 = vpop.f32.mrb[0].mxu0
  %v796 = vadd.f32 %v651, %v795
  %v797 = vpop.f32.mrb[0].mxu0
  %798 = vmatprep.mubr.f32.mxu0 0.0
  %799 = vmatmul.mubr.f32.gmra.mrb[0].mxu0 %v334
  %v800 = vpop.f32.mrb[0].mxu0
  %v801 = vadd.f32 %v656, %v800
  %v802 = vpop.f32.mrb[0].mxu0
  %803 = vmatprep.mubr.f32.mxu0 0.0
  %804 = vmatmul.mubr.f32.gmra.mrb[0].mxu0 %v339
  %v805 = vpop.f32.mrb[0].mxu0
  %v806 = vadd.f32 %v661, %v805
  %v807 = vpop.f32.mrb[0].mxu0
  %808 = vmatprep.mubr.f32.mxu0 0.0
  %809 = vmatmul.mubr.f32.gmra.mrb[0].mxu0 %v344
  %v810 = vpop.f32.mrb[0].mxu0
  %v811 = vadd.f32 %v666, %v810
  %v812 = vpop.f32.mrb[0].mxu0
  %813 = vmatprep.mubr.f32.mxu0 0.0
  %814 = vmatmul.mubr.f32.gmra.mrb[0].mxu0 %v349
  %v815 = vpop.f32.mrb[0].mxu0
  %v816 = vadd.f32 %v671, %v815
  %v817 = vpop.f32.mrb[0].mxu0
  %818 = vmatprep.mubr.f32.mxu0 0.0
  %819 = vmatmul.mubr.f32.gmra.mrb[0].mxu0 %v354
  %v820 = vpop.f32.mrb[0].mxu0
  %v821 = vadd.f32 %v676, %v820
  %v822 = vpop.f32.mrb[0].mxu0
  %823 = vmatprep.mubr.f32.mxu0 0.0
  %824 = vmatmul.mubr.f32.gmra.mrb[0].mxu0 %v359
  %v825 = vpop.f32.mrb[0].mxu0
  %v826 = vadd.f32 %v681, %v825
  %v827 = vpop.f32.mrb[0].mxu0
  %828 = vmatprep.mubr.f32.mxu0 0.0
  %829 = vmatmul.mubr.f32.gmra.mrb[0].mxu0 %v364
  %v830 = vpop.f32.mrb[0].mxu0
  %v831 = vadd.f32 %v686, %v830
  %v832 = vpop.f32.mrb[0].mxu0
  %833 = vmatprep.mubr.f32.mxu0 0.0
  %834 = vmatmul.mubr.f32.gmra.mrb[0].mxu0 %v369
  %v835 = vpop.f32.mrb[0].mxu0
  %v836 = vadd.f32 %v691, %v835
  %v837 = vpop.f32.mrb[0].mxu0
  %838 = vmatprep.mubr.f32.mxu0 0.0
  %839 = vmatmul.mubr.f32.gmra.mrb[0].mxu0 %v374
  %v840 = vpop.f32.mrb[0].mxu0
  %v841 = vadd.f32 %v696, %v840
  %v842 = vpop.f32.mrb[0].mxu0
  %843 = vmatprep.mubr.f32.mxu0 0.0
  %844 = vmatmul.mubr.f32.gmra.mrb[0].mxu0 %v379
  %v845 = vpop.f32.mrb[0].mxu0
  %v846 = vadd.f32 %v701, %v845
  %v847 = vpop.f32.mrb[0].mxu0
  %848 = vmatprep.mubr.f32.mxu0 0.0
  %849 = vmatmul.mubr.f32.gmra.mrb[0].mxu0 %v384
  %v850 = vpop.f32.mrb[0].mxu0
  %v851 = vadd.f32 %v706, %v850
  %v852 = vpop.f32.mrb[0].mxu0
  %853 = vdwg.mxu0
  %v854 = vld [vmem:[%s6] sm:$0x1]
  %v856 = vlaneseq
  %v857 = vshrl.u32 %v856, 7
  %v858 = vsub.s32 0, %v857
  %v859 = vrot.slane %v854, %v858
  %v861 = vadd.f32 %v776, %v859
  %v862 = vadd.f32 %v781, %v859
  %v863 = vadd.f32 %v786, %v859
  %v864 = vadd.f32 %v791, %v859
  %v865 = vadd.f32 %v796, %v859
  %v866 = vadd.f32 %v801, %v859
  %v867 = vadd.f32 %v806, %v859
  %v868 = vadd.f32 %v811, %v859
  %v869 = vadd.f32 %v816, %v859
  %v870 = vadd.f32 %v821, %v859
  %v871 = vadd.f32 %v826, %v859
  %v872 = vadd.f32 %v831, %v859
  %v873 = vadd.f32 %v836, %v859
  %v874 = vadd.f32 %v841, %v859
  %v875 = vadd.f32 %v846, %v859
  %v876 = vadd.f32 %v851, %v859
  %v877 = vmax.f32 %v861, 0.0
  %v878 = vmax.f32 %v862, 0.0
  %v879 = vmax.f32 %v863, 0.0
  %v880 = vmax.f32 %v864, 0.0
  %v881 = vmax.f32 %v865, 0.0
  %v882 = vmax.f32 %v866, 0.0
  %v883 = vmax.f32 %v867, 0.0
  %v884 = vmax.f32 %v868, 0.0
  %v885 = vmax.f32 %v869, 0.0
  %v886 = vmax.f32 %v870, 0.0
  %v887 = vmax.f32 %v871, 0.0
  %v888 = vmax.f32 %v872, 0.0
  %v889 = vmax.f32 %v873, 0.0
  %v890 = vmax.f32 %v874, 0.0
  %v891 = vmax.f32 %v875, 0.0
  %v892 = vmax.f32 %v876, 0.0
  %v893 = vld [vmem:[%s7] sm:$0xff]
  %v894 = vld [vmem:[%s7 + $0x8] sm:$0xff]
  %v895 = vld [vmem:[%s7 + $0x10] sm:$0xff]
  %v896 = vld [vmem:[%s7 + $0x18] sm:$0xff]
  %v897 = vld [vmem:[%s7 + $0x20] sm:$0xff]
  %v898 = vld [vmem:[%s7 + $0x28] sm:$0xff]
  %v899 = vld [vmem:[%s7 + $0x30] sm:$0xff]
  %v900 = vld [vmem:[%s7 + $0x38] sm:$0xff]
  %v901 = vld [vmem:[%s7 + $0x40] sm:$0xff]
  %v902 = vld [vmem:[%s7 + $0x48] sm:$0xff]
  %v903 = vld [vmem:[%s7 + $0x50] sm:$0xff]
  %v904 = vld [vmem:[%s7 + $0x58] sm:$0xff]
  %v905 = vld [vmem:[%s7 + $0x60] sm:$0xff]
  %v906 = vld [vmem:[%s7 + $0x68] sm:$0xff]
  %v907 = vld [vmem:[%s7 + $0x70] sm:$0xff]
  %v908 = vld [vmem:[%s7 + $0x78] sm:$0xff]
  %v909 = vld [vmem:[%s8] sm:$0x1]
  %v911 = vlaneseq
  %v912 = vshrl.u32 %v911, 7
  %v913 = vsub.s32 0, %v912
  %v914 = vrot.slane %v909, %v913
  %916 = vmatprep.subr.mxu0 0.0
  %917 = vmatpush1.msra.mxu0 %v893
  %918 = vmatprep.subr.mxu0 0.0
  %919 = vmatpush1.msra.mxu0 %v894
  %920 = vmatprep.subr.mxu0 0.0
  %921 = vmatpush1.msra.mxu0 %v895
  %922 = vmatprep.subr.mxu0 0.0
  %923 = vmatpush1.msra.mxu0 %v896
  %924 = vmatprep.subr.mxu0 0.0
  %925 = vmatpush1.msra.mxu0 %v897
  %926 = vmatprep.subr.mxu0 0.0
  %927 = vmatpush1.msra.mxu0 %v898
  %928 = vmatprep.subr.mxu0 0.0
  %929 = vmatpush1.msra.mxu0 %v899
  %930 = vmatprep.subr.mxu0 0.0
  %931 = vmatpush1.msra.mxu0 %v900
  %932 = vmatprep.subr.mxu0 0.0
  %933 = vmatpush1.msra.mxu0 %v901
  %934 = vmatprep.subr.mxu0 0.0
  %935 = vmatpush1.msra.mxu0 %v902
  %936 = vmatprep.subr.mxu0 0.0
  %937 = vmatpush1.msra.mxu0 %v903
  %938 = vmatprep.subr.mxu0 0.0
  %939 = vmatpush1.msra.mxu0 %v904
  %940 = vmatprep.subr.mxu0 0.0
  %941 = vmatpush1.msra.mxu0 %v905
  %942 = vmatprep.subr.mxu0 0.0
  %943 = vmatpush1.msra.mxu0 %v906
  %944 = vmatprep.subr.mxu0 0.0
  %945 = vmatpush1.msra.mxu0 %v907
  %946 = vmatprep.subr.mxu0 0.0
  %947 = vmatpush1.msra.mxu0 %v908
  %948 = vmatprep.subr.mxu0 0.0
  %949 = vmatpush1.msra.mxu0 0.0
  %950 = vmatprep.subr.mxu0 0.0
  %951 = vmatpush1.msra.mxu0 0.0
  %952 = vmatprep.subr.mxu0 0.0
  %953 = vmatpush1.msra.mxu0 0.0
  %954 = vmatprep.subr.mxu0 0.0
  %955 = vmatpush1.msra.mxu0 0.0
  %956 = vmatprep.subr.mxu0 0.0
  %957 = vmatpush1.msra.mxu0 0.0
  %958 = vmatprep.subr.mxu0 0.0
  %959 = vmatpush1.msra.mxu0 0.0
  %960 = vmatprep.subr.mxu0 0.0
  %961 = vmatpush1.msra.mxu0 0.0
  %962 = vmatprep.subr.mxu0 0.0
  %963 = vmatpush1.msra.mxu0 0.0
  %964 = vmatprep.subr.mxu0 0.0
  %965 = vmatpush1.msra.mxu0 0.0
  %966 = vmatprep.subr.mxu0 0.0
  %967 = vmatpush1.msra.mxu0 0.0
  %968 = vmatprep.subr.mxu0 0.0
  %969 = vmatpush1.msra.mxu0 0.0
  %970 = vmatprep.subr.mxu0 0.0
  %971 = vmatpush1.msra.mxu0 0.0
  %972 = vmatprep.subr.mxu0 0.0
  %973 = vmatpush1.msra.mxu0 0.0
  %974 = vmatprep.subr.mxu0 0.0
  %975 = vmatpush1.msra.mxu0 0.0
  %976 = vmatprep.subr.mxu0 0.0
  %977 = vmatpush1.msra.mxu0 0.0
  %978 = vmatprep.subr.mxu0 0.0
  %979 = vmatpush1.msra.mxu0 0.0
  %980 = vmatprep.mubr.f32.mxu0 0.0
  %981 = vmatmul.mubr.f32.gmra.mrb[0].mxu0 %v877
  %v982 = vpop.f32.mrb[0].mxu0
  %v983 = vadd.f32 %v914, %v982
  %v984 = vpop.f32.mrb[0].mxu0
  %985 = vmatprep.mubr.f32.mxu0 0.0
  %986 = vmatmul.mubr.f32.gmra.mrb[0].mxu0 %v878
  %v987 = vpop.f32.mrb[0].mxu0
  %v988 = vadd.f32 %v914, %v987
  %v989 = vpop.f32.mrb[0].mxu0
  %990 = vmatprep.mubr.f32.mxu0 0.0
  %991 = vmatmul.mubr.f32.gmra.mrb[0].mxu0 %v879
  %v992 = vpop.f32.mrb[0].mxu0
  %v993 = vadd.f32 %v914, %v992
  %v994 = vpop.f32.mrb[0].mxu0
  %995 = vmatprep.mubr.f32.mxu0 0.0
  %996 = vmatmul.mubr.f32.gmra.mrb[0].mxu0 %v880
  %v997 = vpop.f32.mrb[0].mxu0
  %v998 = vadd.f32 %v914, %v997
  %v999 = vpop.f32.mrb[0].mxu0
  %1000 = vmatprep.mubr.f32.mxu0 0.0
  %1001 = vmatmul.mubr.f32.gmra.mrb[0].mxu0 %v881
  %v1002 = vpop.f32.mrb[0].mxu0
  %v1003 = vadd.f32 %v914, %v1002
  %v1004 = vpop.f32.mrb[0].mxu0
  %1005 = vmatprep.mubr.f32.mxu0 0.0
  %1006 = vmatmul.mubr.f32.gmra.mrb[0].mxu0 %v882
  %v1007 = vpop.f32.mrb[0].mxu0
  %v1008 = vadd.f32 %v914, %v1007
  %v1009 = vpop.f32.mrb[0].mxu0
  %1010 = vmatprep.mubr.f32.mxu0 0.0
  %1011 = vmatmul.mubr.f32.gmra.mrb[0].mxu0 %v883
  %v1012 = vpop.f32.mrb[0].mxu0
  %v1013 = vadd.f32 %v914, %v1012
  %v1014 = vpop.f32.mrb[0].mxu0
  %1015 = vmatprep.mubr.f32.mxu0 0.0
  %1016 = vmatmul.mubr.f32.gmra.mrb[0].mxu0 %v884
  %v1017 = vpop.f32.mrb[0].mxu0
  %v1018 = vadd.f32 %v914, %v1017
  %v1019 = vpop.f32.mrb[0].mxu0
  %1020 = vmatprep.mubr.f32.mxu0 0.0
  %1021 = vmatmul.mubr.f32.gmra.mrb[0].mxu0 %v885
  %v1022 = vpop.f32.mrb[0].mxu0
  %v1023 = vadd.f32 %v914, %v1022
  %v1024 = vpop.f32.mrb[0].mxu0
  %1025 = vmatprep.mubr.f32.mxu0 0.0
  %1026 = vmatmul.mubr.f32.gmra.mrb[0].mxu0 %v886
  %v1027 = vpop.f32.mrb[0].mxu0
  %v1028 = vadd.f32 %v914, %v1027
  %v1029 = vpop.f32.mrb[0].mxu0
  %1030 = vmatprep.mubr.f32.mxu0 0.0
  %1031 = vmatmul.mubr.f32.gmra.mrb[0].mxu0 %v887
  %v1032 = vpop.f32.mrb[0].mxu0
  %v1033 = vadd.f32 %v914, %v1032
  %v1034 = vpop.f32.mrb[0].mxu0
  %1035 = vmatprep.mubr.f32.mxu0 0.0
  %1036 = vmatmul.mubr.f32.gmra.mrb[0].mxu0 %v888
  %v1037 = vpop.f32.mrb[0].mxu0
  %v1038 = vadd.f32 %v914, %v1037
  %v1039 = vpop.f32.mrb[0].mxu0
  %1040 = vmatprep.mubr.f32.mxu0 0.0
  %1041 = vmatmul.mubr.f32.gmra.mrb[0].mxu0 %v889
  %v1042 = vpop.f32.mrb[0].mxu0
  %v1043 = vadd.f32 %v914, %v1042
  %v1044 = vpop.f32.mrb[0].mxu0
  %1045 = vmatprep.mubr.f32.mxu0 0.0
  %1046 = vmatmul.mubr.f32.gmra.mrb[0].mxu0 %v890
  %v1047 = vpop.f32.mrb[0].mxu0
  %v1048 = vadd.f32 %v914, %v1047
  %v1049 = vpop.f32.mrb[0].mxu0
  %1050 = vmatprep.mubr.f32.mxu0 0.0
  %1051 = vmatmul.mubr.f32.gmra.mrb[0].mxu0 %v891
  %v1052 = vpop.f32.mrb[0].mxu0
  %v1053 = vadd.f32 %v914, %v1052
  %v1054 = vpop.f32.mrb[0].mxu0
  %1055 = vmatprep.mubr.f32.mxu0 0.0
  %1056 = vmatmul.mubr.f32.gmra.mrb[0].mxu0 %v892
  %v1057 = vpop.f32.mrb[0].mxu0
  %v1058 = vadd.f32 %v914, %v1057
  %v1059 = vpop.f32.mrb[0].mxu0
  %1060 = vdwg.mxu0
  %v1061 = vmax.f32 %v983, 0.0
  %v1062 = vmax.f32 %v988, 0.0
  %v1063 = vmax.f32 %v993, 0.0
  %v1064 = vmax.f32 %v998, 0.0
  %v1065 = vmax.f32 %v1003, 0.0
  %v1066 = vmax.f32 %v1008, 0.0
  %v1067 = vmax.f32 %v1013, 0.0
  %v1068 = vmax.f32 %v1018, 0.0
  %v1069 = vmax.f32 %v1023, 0.0
  %v1070 = vmax.f32 %v1028, 0.0
  %v1071 = vmax.f32 %v1033, 0.0
  %v1072 = vmax.f32 %v1038, 0.0
  %v1073 = vmax.f32 %v1043, 0.0
  %v1074 = vmax.f32 %v1048, 0.0
  %v1075 = vmax.f32 %v1053, 0.0
  %v1076 = vmax.f32 %v1058, 0.0
  %v1077 = vld [vmem:[%s3] sm:$0xff]
  %v1078 = vld [vmem:[%s3 + $0x8] sm:$0xff]
  %v1079 = vld [vmem:[%s3 + $0x10] sm:$0xff]
  %v1080 = vld [vmem:[%s3 + $0x18] sm:$0xff]
  %v1081 = vld [vmem:[%s3 + $0x20] sm:$0xff]
  %v1082 = vld [vmem:[%s3 + $0x28] sm:$0xff]
  %v1083 = vld [vmem:[%s3 + $0x30] sm:$0xff]
  %v1084 = vld [vmem:[%s3 + $0x38] sm:$0xff]
  %v1085 = vld [vmem:[%s3 + $0x40] sm:$0xff]
  %v1086 = vld [vmem:[%s3 + $0x48] sm:$0xff]
  %v1087 = vld [vmem:[%s3 + $0x50] sm:$0xff]
  %v1088 = vld [vmem:[%s3 + $0x58] sm:$0xff]
  %v1089 = vld [vmem:[%s3 + $0x60] sm:$0xff]
  %v1090 = vld [vmem:[%s3 + $0x68] sm:$0xff]
  %v1091 = vld [vmem:[%s3 + $0x70] sm:$0xff]
  %v1092 = vld [vmem:[%s3 + $0x78] sm:$0xff]
  %1094 = vset.pattern.permute.xlu0 0
  %1095 = vperm.xlu0 %1094, %v1077
  %v1096 = vpop.permute.xlu0 %1095
  %1099 = vset.pattern.permute.xlu0 0
  %1100 = vperm.xlu0 %1099, %v1078
  %v1101 = vpop.permute.xlu0 %1100
  %1104 = vset.pattern.permute.xlu0 0
  %1105 = vperm.xlu0 %1104, %v1079
  %v1106 = vpop.permute.xlu0 %1105
  %1109 = vset.pattern.permute.xlu0 0
  %1110 = vperm.xlu0 %1109, %v1080
  %v1111 = vpop.permute.xlu0 %1110
  %1114 = vset.pattern.permute.xlu0 0
  %1115 = vperm.xlu0 %1114, %v1081
  %v1116 = vpop.permute.xlu0 %1115
  %1119 = vset.pattern.permute.xlu0 0
  %1120 = vperm.xlu0 %1119, %v1082
  %v1121 = vpop.permute.xlu0 %1120
  %1124 = vset.pattern.permute.xlu0 0
  %1125 = vperm.xlu0 %1124, %v1083
  %v1126 = vpop.permute.xlu0 %1125
  %1129 = vset.pattern.permute.xlu0 0
  %1130 = vperm.xlu0 %1129, %v1084
  %v1131 = vpop.permute.xlu0 %1130
  %1134 = vset.pattern.permute.xlu0 0
  %1135 = vperm.xlu0 %1134, %v1085
  %v1136 = vpop.permute.xlu0 %1135
  %1139 = vset.pattern.permute.xlu0 0
  %1140 = vperm.xlu0 %1139, %v1086
  %v1141 = vpop.permute.xlu0 %1140
  %1144 = vset.pattern.permute.xlu0 0
  %1145 = vperm.xlu0 %1144, %v1087
  %v1146 = vpop.permute.xlu0 %1145
  %1149 = vset.pattern.permute.xlu0 0
  %1150 = vperm.xlu0 %1149, %v1088
  %v1151 = vpop.permute.xlu0 %1150
  %1154 = vset.pattern.permute.xlu0 0
  %1155 = vperm.xlu0 %1154, %v1089
  %v1156 = vpop.permute.xlu0 %1155
  %1159 = vset.pattern.permute.xlu0 0
  %1160 = vperm.xlu0 %1159, %v1090
  %v1161 = vpop.permute.xlu0 %1160
  %1164 = vset.pattern.permute.xlu0 0
  %1165 = vperm.xlu0 %1164, %v1091
  %v1166 = vpop.permute.xlu0 %1165
  %1169 = vset.pattern.permute.xlu0 0
  %1170 = vperm.xlu0 %1169, %v1092
  %v1171 = vpop.permute.xlu0 %1170
  %v1173 = vmul.f32 %v1061, %v1096
  %v1174 = vmul.f32 %v1062, %v1101
  %v1175 = vmul.f32 %v1063, %v1106
  %v1176 = vmul.f32 %v1064, %v1111
  %v1177 = vmul.f32 %v1065, %v1116
  %v1178 = vmul.f32 %v1066, %v1121
  %v1179 = vmul.f32 %v1067, %v1126
  %v1180 = vmul.f32 %v1068, %v1131
  %v1181 = vmul.f32 %v1069, %v1136
  %v1182 = vmul.f32 %v1070, %v1141
  %v1183 = vmul.f32 %v1071, %v1146
  %v1184 = vmul.f32 %v1072, %v1151
  %v1185 = vmul.f32 %v1073, %v1156
  %v1186 = vmul.f32 %v1074, %v1161
  %v1187 = vmul.f32 %v1075, %v1166
  %v1188 = vmul.f32 %v1076, %v1171
  %1189 = vst [vmem:[%s9] sm:$0xff] %v1173
  %1190 = vst [vmem:[%s9 + $0x8] sm:$0xff] %v1174
  %1191 = vst [vmem:[%s9 + $0x10] sm:$0xff] %v1175
  %1192 = vst [vmem:[%s9 + $0x18] sm:$0xff] %v1176
  %1193 = vst [vmem:[%s9 + $0x20] sm:$0xff] %v1177
  %1194 = vst [vmem:[%s9 + $0x28] sm:$0xff] %v1178
  %1195 = vst [vmem:[%s9 + $0x30] sm:$0xff] %v1179
  %1196 = vst [vmem:[%s9 + $0x38] sm:$0xff] %v1180
  %1197 = vst [vmem:[%s9 + $0x40] sm:$0xff] %v1181
  %1198 = vst [vmem:[%s9 + $0x48] sm:$0xff] %v1182
  %1199 = vst [vmem:[%s9 + $0x50] sm:$0xff] %v1183
  %1200 = vst [vmem:[%s9 + $0x58] sm:$0xff] %v1184
  %1201 = vst [vmem:[%s9 + $0x60] sm:$0xff] %v1185
  %1202 = vst [vmem:[%s9 + $0x68] sm:$0xff] %v1186
  %1203 = vst [vmem:[%s9 + $0x70] sm:$0xff] %v1187
  %1204 = vst [vmem:[%s9 + $0x78] sm:$0xff] %v1188
  // Predicated region
  $region38: #{edge_weight_forward.6} parent=0 // pred_check
    _
  $region39: #{edge_weight_forward.6} parent=0 // pred_check_branch
    %1206 = sbr.rel (0) target = $region41
  $region40: #{edge_weight_forward.6} parent=0 // pred_region
    _
  $region41: #{edge_weight_forward.6} parent=0 // pred_fallthru
    _
  // Predicated region
  $region42: #{edge_weight_forward.6} parent=0 // pred_check
    _
  $region43: #{edge_weight_forward.6} parent=0 // pred_check_branch
    %1208 = sbr.rel (0) target = $region45
  $region44: #{edge_weight_forward.6} parent=0 // pred_region
    _
  $region45: #{edge_weight_forward.6} parent=0 // pred_fallthru
    _

</llo_original>
